<compile_context>
chip_gen: v5e
topology: v5e:2x2
jax: 0.10.0
libtpu: 0.0.40
codegen_flags: <defaults>
</compile_context>

<pallas_src>
import functools

import jax
import jax.numpy as jnp
from jax import lax
from jax.experimental import pallas as pl
from jax.experimental.pallas import tpu as pltpu


def _cdiv(a, b):
    return (a + b - 1) // b


def _conv_bn_silu_kernel(x_ref, w_ref, scale_ref, bias_ref, o_ref, *,
                         TH, W, KH, KW, C1, C2p):
    """One (image, output-row-tile) per grid step.

    x_ref:     (1, Hp, Wp, C1)    bf16 zero-padded NHWC image (full image, fetched once per n)
    w_ref:     (KH, KW, C1, C2p)  bf16 conv weights, tap-major, lane-dense channels
    scale_ref: (1, C2p)           f32 BN scale  (gamma / sqrt(var + eps))
    bias_ref:  (1, C2p)           f32 BN bias   (beta - mean * scale)
    o_ref:     (1, TH, W, C2p)    bf16 NHWC output tile, lane-dense channels
    """
    r = pl.program_id(1)
    roff = pl.multiple_of(r * TH, TH)

    acc = jnp.zeros((TH * W, C2p), jnp.float32)
    # Static 3x3 (or 1x1) tap loop, unrolled at trace time; taps are slices of the
    # VMEM-resident image tile, so no extra HBM traffic per tap.
    for kh in range(KH):
        for kw in range(KW):
            tap = x_ref[0, pl.ds(roff + kh, TH), pl.ds(kw, W), :]      # (TH, W, C1) bf16
            acc = acc + jnp.dot(tap.reshape(TH * W, C1), w_ref[kh, kw],
                                preferred_element_type=jnp.float32)

    y = acc * scale_ref[...] + bias_ref[...]          # f32 BN affine epilogue (VPU)
    y = y * jax.nn.sigmoid(y)                         # SiLU (EUP sigmoid, f32)
    o_ref[0] = y.reshape(TH, W, C2p).astype(o_ref.dtype)


def conv_bn_silu(x_nchw, weight_oihw, gamma, beta, run_mean, run_var, *,
                 eps=1e-5, stride=1, dilation=1, groups=1,
                 rows_target=512, out_dtype=jnp.bfloat16):
    """Pallas forward matching Conv(c1, c2, k).forward(x) in eval mode (NCHW in/out)."""
    assert stride == 1 and dilation == 1 and groups == 1, "kernel covers the default Conv config"
    N, C1, H, W = x_nchw.shape
    C2, C1w, KH, KW = weight_oihw.shape
    assert C1 == C1w
    assert KH % 2 == 1 and KW % 2 == 1, "autopad(k)=k//2 matches 'same' conv only for odd k"
    ph, pw = KH // 2, KW // 2          # autopad(k)

    # ---- row-tile selection --------------------------------------------------
    TH = max(1, min(H, max(1, rows_target // max(W, 1))))
    n_rt = _cdiv(H, TH)
    if n_rt * N < 2 and H > 1:         # keep both v7x TensorCores busy
        TH = _cdiv(H, 2)
        n_rt = _cdiv(H, TH)
    Hpad = n_rt * TH                   # output rows incl. padding (sliced off below)
    C2p = _cdiv(C2, 128) * 128         # lane-dense output channels

    # ---- layout plumbing (interface is NCHW; the kernel itself is NHWC) ------
    x_nhwc = jnp.transpose(x_nchw, (0, 2, 3, 1))                               # NCHW -> NHWC
    x_pad = jnp.pad(x_nhwc, ((0, 0), (ph, Hpad - H + ph), (pw, pw), (0, 0)))
    x_pad = x_pad.astype(jnp.bfloat16)
    Hp, Wp = Hpad + KH - 1, W + KW - 1

    # OIHW -> (KH, KW, C1, C2p), bf16.  BN scale stays out of the weights (f32 epilogue).
    w4 = jnp.transpose(weight_oihw, (2, 3, 1, 0))
    w4 = jnp.pad(w4, ((0, 0), (0, 0), (0, 0), (0, C2p - C2))).astype(jnp.bfloat16)

    scale = (gamma / jnp.sqrt(run_var + eps)).astype(jnp.float32)
    bias = (beta - run_mean * scale).astype(jnp.float32)
    scale_p = jnp.pad(scale, ((0, C2p - C2),)).reshape(1, C2p)
    bias_p = jnp.pad(bias, ((0, C2p - C2),)).reshape(1, C2p)

    kernel = functools.partial(_conv_bn_silu_kernel,
                               TH=TH, W=W, KH=KH, KW=KW, C1=C1, C2p=C2p)

    Kc = KH * KW * C1
    cost = pl.CostEstimate(
        flops=2 * N * Hpad * W * Kc * C2p,
        transcendentals=N * Hpad * W * C2p,
        bytes_accessed=(x_pad.size * 2 + w4.size * 2
                        + (scale_p.size + bias_p.size) * 4
                        + N * Hpad * W * C2p * 2),
    )

    # VMEM budget: double-buffered image + output tiles, single weight/scale/bias copy.
    est = (2 * (Hp * Wp * C1 * 2 + TH * W * C2p * 2)
           + 2 * (w4.size * 2) + 4 * C2p * 4 + (4 << 20))
    vmem_limit = int(min(max(2 * est, 32 << 20), 100 << 20))

    out = pl.pallas_call(
        kernel,
        out_shape=jax.ShapeDtypeStruct((N, Hpad, W, C2p), out_dtype),
        grid_spec=pltpu.PrefetchScalarGridSpec(
            num_scalar_prefetch=0,
            grid=(N, n_rt),
            in_specs=[
                pl.BlockSpec((1, Hp, Wp, C1), lambda n, r: (n, 0, 0, 0)),   # image (const in r)
                pl.BlockSpec((KH, KW, C1, C2p), lambda n, r: (0, 0, 0, 0)),  # weights (const)
                pl.BlockSpec((1, C2p), lambda n, r: (0, 0)),                 # BN scale (const)
                pl.BlockSpec((1, C2p), lambda n, r: (0, 0)),                 # BN bias (const)
            ],
            out_specs=pl.BlockSpec((1, TH, W, C2p), lambda n, r: (n, r, 0, 0)),
        ),
        compiler_params=pltpu.CompilerParams(
            dimension_semantics=("parallel", "parallel"),
            vmem_limit_bytes=vmem_limit),
        cost_estimate=cost,
    )(x_pad, w4, scale_p, bias_p)

    out = out[:, :H, :, :C2]                          # drop row / channel padding (NHWC)
    return jnp.transpose(out, (0, 3, 1, 2))           # NHWC -> NCHW (module interface)


def _reference(x_nchw, weight_oihw, gamma, beta, run_mean, run_var, eps=1e-5):
    """Pure-JAX f32 reference (NCHW 'same' conv + eval-mode BN + SiLU)."""
    y = lax.conv_general_dilated(
        x_nchw.astype(jnp.float32), weight_oihw.astype(jnp.float32),
        window_strides=(1, 1), padding="SAME",
        dimension_numbers=("NCHW", "OIHW", "NCHW"))
    scale = gamma / jnp.sqrt(run_var + eps)
    bias = beta - run_mean * scale
    y = y * scale[None, :, None, None] + bias[None, :, None, None]
    return y * jax.nn.sigmoid(y)


if __name__ == "__main__":
    master = jax.random.PRNGKey(0)

    def make_case(key, N, C1, H, W, C2, K):
        ks = jax.random.split(key, 6)
        x = jax.random.normal(ks[0], (N, C1, H, W), dtype=jnp.float32)
        wgt = jax.random.normal(ks[1], (C2, C1, K, K), dtype=jnp.float32) * 0.1   # OIHW, bias=False
        gamma = 1.0 + 0.1 * jax.random.normal(ks[2], (C2,), dtype=jnp.float32)
        beta = 0.1 * jax.random.normal(ks[3], (C2,), dtype=jnp.float32)
        mean = 0.1 * jax.random.normal(ks[4], (C2,), dtype=jnp.float32)
        var = jnp.abs(jax.random.normal(ks[5], (C2,), dtype=jnp.float32)) + 0.5
        return x, wgt, gamma, beta, mean, var

    cases = [
        # Conv(4, 8, 3) — the main small-shape demo, single row tile per image.
        (dict(N=2, C1=4, H=16, W=16, C2=8, K=3), dict()),
        # Ragged dims: exercises multiple row tiles (dynamic roff), Hpad padding,
        # C2 lane padding and non-multiple-of-8 W.
        (dict(N=1, C1=3, H=11, W=12, C2=5, K=3), dict(rows_target=64)),
        # Conv with k=1 (the module's default kernel size).
        (dict(N=2, C1=4, H=16, W=16, C2=8, K=1), dict()),
    ]

    keys = jax.random.split(master, len(cases))
    for case_key, (shape, kw) in zip(keys, cases):
        args = make_case(case_key, **shape)
        out = jax.block_until_ready(conv_bn_silu(*args, **kw))
        ref = _reference(*args)
        assert out.shape == ref.shape, (out.shape, ref.shape)
        # bf16 MXU operands + bf16 output (f32 accumulate/epilogue) vs f32 reference.
        ok = jnp.allclose(out.astype(jnp.float32), ref, atol=2e-2, rtol=2e-2)
        assert bool(ok), float(jnp.max(jnp.abs(out.astype(jnp.float32) - ref)))

    print("KERNEL_OK")
</pallas_src>

<mosaic_0001>
module attributes {stable_mosaic.version = 11 : i64} {
  func.func @_conv_bn_silu_kernel(%arg0: i32, %arg1: i32, %arg2: memref<1x18x18x4xbf16, #tpu.memory_space<vmem>>, %arg3: memref<3x3x4x128xbf16, #tpu.memory_space<vmem>>, %arg4: memref<1x128xf32, #tpu.memory_space<vmem>>, %arg5: memref<1x128xf32, #tpu.memory_space<vmem>>, %arg6: memref<1x16x16x128xbf16, #tpu.memory_space<vmem>>) attributes {dimension_semantics = [#tpu.dimension_semantics<parallel>, #tpu.dimension_semantics<parallel>], iteration_bounds = array<i64: 2, 1>, scalar_prefetch = 0 : i64, scratch_operands = 0 : i64, tpu.core_type = #tpu.core_type<tc>, window_params = [{transform_indices = @transform_0, window_bounds = array<i64: 1, 18, 18, 4>}, {pipeline_mode = #tpu.pipeline_mode<synchronous>, transform_indices = @transform_1, window_bounds = array<i64: 3, 3, 4, 128>}, {pipeline_mode = #tpu.pipeline_mode<synchronous>, transform_indices = @transform_2, window_bounds = array<i64: 1, 128>}, {pipeline_mode = #tpu.pipeline_mode<synchronous>, transform_indices = @transform_3, window_bounds = array<i64: 1, 128>}, {transform_indices = @transform_4, window_bounds = array<i64: 1, 16, 16, 128>}]} {
    %c16_i32 = arith.constant 16 : i32
    %0 = arith.muli %arg1, %c16_i32 : i32
    %1 = tpu.assume_multiple %0, 16 : i32
    %cst = arith.constant 0.000000e+00 : f32
    %2 = vector.broadcast %cst : f32 to vector<256x128xf32>
    %c0_i32 = arith.constant 0 : i32
    %3 = arith.addi %1, %c0_i32 : i32
    %c0 = arith.constant 0 : index
    %4 = arith.index_cast %3 : i32 to index
    %c0_0 = arith.constant 0 : index
    %c0_1 = arith.constant 0 : index
    %5 = vector.load %arg2[%c0, %4, %c0_0, %c0_1] : memref<1x18x18x4xbf16, #tpu.memory_space<vmem>>, vector<1x16x16x4xbf16>
    %6 = vector.shape_cast %5 : vector<1x16x16x4xbf16> to vector<16x16x4xbf16>
    %7 = vector.shape_cast %6 : vector<16x16x4xbf16> to vector<256x4xbf16>
    %c0_2 = arith.constant 0 : index
    %c0_3 = arith.constant 0 : index
    %c0_4 = arith.constant 0 : index
    %c0_5 = arith.constant 0 : index
    %8 = vector.load %arg3[%c0_2, %c0_3, %c0_4, %c0_5] : memref<3x3x4x128xbf16, #tpu.memory_space<vmem>>, vector<1x1x4x128xbf16>
    %9 = vector.shape_cast %8 : vector<1x1x4x128xbf16> to vector<4x128xbf16>
    %cst_6 = arith.constant dense<0.000000e+00> : vector<256x128xf32>
    %10 = tpu.matmul %7, %9, %cst_6 {dimension_numbers = #tpu.dot_dimension_numbers<[1], [0], [0], [1], [0, 0, 1, 1], [], []>} : vector<256x4xbf16>, vector<4x128xbf16>, vector<256x128xf32> -> vector<256x128xf32>
    %11 = arith.addf %2, %10 : vector<256x128xf32>
    %c0_i32_7 = arith.constant 0 : i32
    %12 = arith.addi %1, %c0_i32_7 : i32
    %c0_8 = arith.constant 0 : index
    %13 = arith.index_cast %12 : i32 to index
    %c1 = arith.constant 1 : index
    %c0_9 = arith.constant 0 : index
    %14 = vector.load %arg2[%c0_8, %13, %c1, %c0_9] : memref<1x18x18x4xbf16, #tpu.memory_space<vmem>>, vector<1x16x16x4xbf16>
    %15 = vector.shape_cast %14 : vector<1x16x16x4xbf16> to vector<16x16x4xbf16>
    %16 = vector.shape_cast %15 : vector<16x16x4xbf16> to vector<256x4xbf16>
    %c0_10 = arith.constant 0 : index
    %c1_11 = arith.constant 1 : index
    %c0_12 = arith.constant 0 : index
    %c0_13 = arith.constant 0 : index
    %17 = vector.load %arg3[%c0_10, %c1_11, %c0_12, %c0_13] : memref<3x3x4x128xbf16, #tpu.memory_space<vmem>>, vector<1x1x4x128xbf16>
    %18 = vector.shape_cast %17 : vector<1x1x4x128xbf16> to vector<4x128xbf16>
    %cst_14 = arith.constant dense<0.000000e+00> : vector<256x128xf32>
    %19 = tpu.matmul %16, %18, %cst_14 {dimension_numbers = #tpu.dot_dimension_numbers<[1], [0], [0], [1], [0, 0, 1, 1], [], []>} : vector<256x4xbf16>, vector<4x128xbf16>, vector<256x128xf32> -> vector<256x128xf32>
    %20 = arith.addf %11, %19 : vector<256x128xf32>
    %c0_i32_15 = arith.constant 0 : i32
    %21 = arith.addi %1, %c0_i32_15 : i32
    %c0_16 = arith.constant 0 : index
    %22 = arith.index_cast %21 : i32 to index
    %c2 = arith.constant 2 : index
    %c0_17 = arith.constant 0 : index
    %23 = vector.load %arg2[%c0_16, %22, %c2, %c0_17] : memref<1x18x18x4xbf16, #tpu.memory_space<vmem>>, vector<1x16x16x4xbf16>
    %24 = vector.shape_cast %23 : vector<1x16x16x4xbf16> to vector<16x16x4xbf16>
    %25 = vector.shape_cast %24 : vector<16x16x4xbf16> to vector<256x4xbf16>
    %c0_18 = arith.constant 0 : index
    %c2_19 = arith.constant 2 : index
    %c0_20 = arith.constant 0 : index
    %c0_21 = arith.constant 0 : index
    %26 = vector.load %arg3[%c0_18, %c2_19, %c0_20, %c0_21] : memref<3x3x4x128xbf16, #tpu.memory_space<vmem>>, vector<1x1x4x128xbf16>
    %27 = vector.shape_cast %26 : vector<1x1x4x128xbf16> to vector<4x128xbf16>
    %cst_22 = arith.constant dense<0.000000e+00> : vector<256x128xf32>
    %28 = tpu.matmul %25, %27, %cst_22 {dimension_numbers = #tpu.dot_dimension_numbers<[1], [0], [0], [1], [0, 0, 1, 1], [], []>} : vector<256x4xbf16>, vector<4x128xbf16>, vector<256x128xf32> -> vector<256x128xf32>
    %29 = arith.addf %20, %28 : vector<256x128xf32>
    %c1_i32 = arith.constant 1 : i32
    %30 = arith.addi %1, %c1_i32 : i32
    %c0_23 = arith.constant 0 : index
    %31 = arith.index_cast %30 : i32 to index
    %c0_24 = arith.constant 0 : index
    %c0_25 = arith.constant 0 : index
    %32 = vector.load %arg2[%c0_23, %31, %c0_24, %c0_25] : memref<1x18x18x4xbf16, #tpu.memory_space<vmem>>, vector<1x16x16x4xbf16>
    %33 = vector.shape_cast %32 : vector<1x16x16x4xbf16> to vector<16x16x4xbf16>
    %34 = vector.shape_cast %33 : vector<16x16x4xbf16> to vector<256x4xbf16>
    %c1_26 = arith.constant 1 : index
    %c0_27 = arith.constant 0 : index
    %c0_28 = arith.constant 0 : index
    %c0_29 = arith.constant 0 : index
    %35 = vector.load %arg3[%c1_26, %c0_27, %c0_28, %c0_29] : memref<3x3x4x128xbf16, #tpu.memory_space<vmem>>, vector<1x1x4x128xbf16>
    %36 = vector.shape_cast %35 : vector<1x1x4x128xbf16> to vector<4x128xbf16>
    %cst_30 = arith.constant dense<0.000000e+00> : vector<256x128xf32>
    %37 = tpu.matmul %34, %36, %cst_30 {dimension_numbers = #tpu.dot_dimension_numbers<[1], [0], [0], [1], [0, 0, 1, 1], [], []>} : vector<256x4xbf16>, vector<4x128xbf16>, vector<256x128xf32> -> vector<256x128xf32>
    %38 = arith.addf %29, %37 : vector<256x128xf32>
    %c1_i32_31 = arith.constant 1 : i32
    %39 = arith.addi %1, %c1_i32_31 : i32
    %c0_32 = arith.constant 0 : index
    %40 = arith.index_cast %39 : i32 to index
    %c1_33 = arith.constant 1 : index
    %c0_34 = arith.constant 0 : index
    %41 = vector.load %arg2[%c0_32, %40, %c1_33, %c0_34] : memref<1x18x18x4xbf16, #tpu.memory_space<vmem>>, vector<1x16x16x4xbf16>
    %42 = vector.shape_cast %41 : vector<1x16x16x4xbf16> to vector<16x16x4xbf16>
    %43 = vector.shape_cast %42 : vector<16x16x4xbf16> to vector<256x4xbf16>
    %c1_35 = arith.constant 1 : index
    %c1_36 = arith.constant 1 : index
    %c0_37 = arith.constant 0 : index
    %c0_38 = arith.constant 0 : index
    %44 = vector.load %arg3[%c1_35, %c1_36, %c0_37, %c0_38] : memref<3x3x4x128xbf16, #tpu.memory_space<vmem>>, vector<1x1x4x128xbf16>
    %45 = vector.shape_cast %44 : vector<1x1x4x128xbf16> to vector<4x128xbf16>
    %cst_39 = arith.constant dense<0.000000e+00> : vector<256x128xf32>
    %46 = tpu.matmul %43, %45, %cst_39 {dimension_numbers = #tpu.dot_dimension_numbers<[1], [0], [0], [1], [0, 0, 1, 1], [], []>} : vector<256x4xbf16>, vector<4x128xbf16>, vector<256x128xf32> -> vector<256x128xf32>
    %47 = arith.addf %38, %46 : vector<256x128xf32>
    %c1_i32_40 = arith.constant 1 : i32
    %48 = arith.addi %1, %c1_i32_40 : i32
    %c0_41 = arith.constant 0 : index
    %49 = arith.index_cast %48 : i32 to index
    %c2_42 = arith.constant 2 : index
    %c0_43 = arith.constant 0 : index
    %50 = vector.load %arg2[%c0_41, %49, %c2_42, %c0_43] : memref<1x18x18x4xbf16, #tpu.memory_space<vmem>>, vector<1x16x16x4xbf16>
    %51 = vector.shape_cast %50 : vector<1x16x16x4xbf16> to vector<16x16x4xbf16>
    %52 = vector.shape_cast %51 : vector<16x16x4xbf16> to vector<256x4xbf16>
    %c1_44 = arith.constant 1 : index
    %c2_45 = arith.constant 2 : index
    %c0_46 = arith.constant 0 : index
    %c0_47 = arith.constant 0 : index
    %53 = vector.load %arg3[%c1_44, %c2_45, %c0_46, %c0_47] : memref<3x3x4x128xbf16, #tpu.memory_space<vmem>>, vector<1x1x4x128xbf16>
    %54 = vector.shape_cast %53 : vector<1x1x4x128xbf16> to vector<4x128xbf16>
    %cst_48 = arith.constant dense<0.000000e+00> : vector<256x128xf32>
    %55 = tpu.matmul %52, %54, %cst_48 {dimension_numbers = #tpu.dot_dimension_numbers<[1], [0], [0], [1], [0, 0, 1, 1], [], []>} : vector<256x4xbf16>, vector<4x128xbf16>, vector<256x128xf32> -> vector<256x128xf32>
    %56 = arith.addf %47, %55 : vector<256x128xf32>
    %c2_i32 = arith.constant 2 : i32
    %57 = arith.addi %1, %c2_i32 : i32
    %c0_49 = arith.constant 0 : index
    %58 = arith.index_cast %57 : i32 to index
    %c0_50 = arith.constant 0 : index
    %c0_51 = arith.constant 0 : index
    %59 = vector.load %arg2[%c0_49, %58, %c0_50, %c0_51] : memref<1x18x18x4xbf16, #tpu.memory_space<vmem>>, vector<1x16x16x4xbf16>
    %60 = vector.shape_cast %59 : vector<1x16x16x4xbf16> to vector<16x16x4xbf16>
    %61 = vector.shape_cast %60 : vector<16x16x4xbf16> to vector<256x4xbf16>
    %c2_52 = arith.constant 2 : index
    %c0_53 = arith.constant 0 : index
    %c0_54 = arith.constant 0 : index
    %c0_55 = arith.constant 0 : index
    %62 = vector.load %arg3[%c2_52, %c0_53, %c0_54, %c0_55] : memref<3x3x4x128xbf16, #tpu.memory_space<vmem>>, vector<1x1x4x128xbf16>
    %63 = vector.shape_cast %62 : vector<1x1x4x128xbf16> to vector<4x128xbf16>
    %cst_56 = arith.constant dense<0.000000e+00> : vector<256x128xf32>
    %64 = tpu.matmul %61, %63, %cst_56 {dimension_numbers = #tpu.dot_dimension_numbers<[1], [0], [0], [1], [0, 0, 1, 1], [], []>} : vector<256x4xbf16>, vector<4x128xbf16>, vector<256x128xf32> -> vector<256x128xf32>
    %65 = arith.addf %56, %64 : vector<256x128xf32>
    %c2_i32_57 = arith.constant 2 : i32
    %66 = arith.addi %1, %c2_i32_57 : i32
    %c0_58 = arith.constant 0 : index
    %67 = arith.index_cast %66 : i32 to index
    %c1_59 = arith.constant 1 : index
    %c0_60 = arith.constant 0 : index
    %68 = vector.load %arg2[%c0_58, %67, %c1_59, %c0_60] : memref<1x18x18x4xbf16, #tpu.memory_space<vmem>>, vector<1x16x16x4xbf16>
    %69 = vector.shape_cast %68 : vector<1x16x16x4xbf16> to vector<16x16x4xbf16>
    %70 = vector.shape_cast %69 : vector<16x16x4xbf16> to vector<256x4xbf16>
    %c2_61 = arith.constant 2 : index
    %c1_62 = arith.constant 1 : index
    %c0_63 = arith.constant 0 : index
    %c0_64 = arith.constant 0 : index
    %71 = vector.load %arg3[%c2_61, %c1_62, %c0_63, %c0_64] : memref<3x3x4x128xbf16, #tpu.memory_space<vmem>>, vector<1x1x4x128xbf16>
    %72 = vector.shape_cast %71 : vector<1x1x4x128xbf16> to vector<4x128xbf16>
    %cst_65 = arith.constant dense<0.000000e+00> : vector<256x128xf32>
    %73 = tpu.matmul %70, %72, %cst_65 {dimension_numbers = #tpu.dot_dimension_numbers<[1], [0], [0], [1], [0, 0, 1, 1], [], []>} : vector<256x4xbf16>, vector<4x128xbf16>, vector<256x128xf32> -> vector<256x128xf32>
    %74 = arith.addf %65, %73 : vector<256x128xf32>
    %c2_i32_66 = arith.constant 2 : i32
    %75 = arith.addi %1, %c2_i32_66 : i32
    %c0_67 = arith.constant 0 : index
    %76 = arith.index_cast %75 : i32 to index
    %c2_68 = arith.constant 2 : index
    %c0_69 = arith.constant 0 : index
    %77 = vector.load %arg2[%c0_67, %76, %c2_68, %c0_69] : memref<1x18x18x4xbf16, #tpu.memory_space<vmem>>, vector<1x16x16x4xbf16>
    %78 = vector.shape_cast %77 : vector<1x16x16x4xbf16> to vector<16x16x4xbf16>
    %79 = vector.shape_cast %78 : vector<16x16x4xbf16> to vector<256x4xbf16>
    %c2_70 = arith.constant 2 : index
    %c2_71 = arith.constant 2 : index
    %c0_72 = arith.constant 0 : index
    %c0_73 = arith.constant 0 : index
    %80 = vector.load %arg3[%c2_70, %c2_71, %c0_72, %c0_73] : memref<3x3x4x128xbf16, #tpu.memory_space<vmem>>, vector<1x1x4x128xbf16>
    %81 = vector.shape_cast %80 : vector<1x1x4x128xbf16> to vector<4x128xbf16>
    %cst_74 = arith.constant dense<0.000000e+00> : vector<256x128xf32>
    %82 = tpu.matmul %79, %81, %cst_74 {dimension_numbers = #tpu.dot_dimension_numbers<[1], [0], [0], [1], [0, 0, 1, 1], [], []>} : vector<256x4xbf16>, vector<4x128xbf16>, vector<256x128xf32> -> vector<256x128xf32>
    %83 = arith.addf %74, %82 : vector<256x128xf32>
    %c0_75 = arith.constant 0 : index
    %c0_76 = arith.constant 0 : index
    %84 = vector.load %arg4[%c0_75, %c0_76] : memref<1x128xf32, #tpu.memory_space<vmem>>, vector<1x128xf32>
    %85 = vector.broadcast %84 : vector<1x128xf32> to vector<256x128xf32>
    %86 = arith.mulf %83, %85 : vector<256x128xf32>
    %c0_77 = arith.constant 0 : index
    %c0_78 = arith.constant 0 : index
    %87 = vector.load %arg5[%c0_77, %c0_78] : memref<1x128xf32, #tpu.memory_space<vmem>>, vector<1x128xf32>
    %88 = vector.broadcast %87 : vector<1x128xf32> to vector<256x128xf32>
    %89 = arith.addf %86, %88 : vector<256x128xf32>
    %90 = arith.negf %89 : vector<256x128xf32>
    %91 = math.exp %90 : vector<256x128xf32>
    %cst_79 = arith.constant 1.000000e+00 : f32
    %92 = vector.broadcast %cst_79 : f32 to vector<256x128xf32>
    %93 = arith.addf %92, %91 : vector<256x128xf32>
    %94 = arith.divf %92, %93 : vector<256x128xf32>
    %95 = arith.mulf %89, %94 : vector<256x128xf32>
    %96 = vector.shape_cast %95 : vector<256x128xf32> to vector<16x16x128xf32>
    %97 = arith.truncf %96 : vector<16x16x128xf32> to vector<16x16x128xbf16>
    %c0_80 = arith.constant 0 : index
    %c0_81 = arith.constant 0 : index
    %c0_82 = arith.constant 0 : index
    %c0_83 = arith.constant 0 : index
    %98 = vector.load %arg6[%c0_80, %c0_81, %c0_82, %c0_83] : memref<1x16x16x128xbf16, #tpu.memory_space<vmem>>, vector<1x16x16x128xbf16>
    %99 = vector.shape_cast %98 : vector<1x16x16x128xbf16> to vector<16x16x128xbf16>
    %100 = vector.shape_cast %97 : vector<16x16x128xbf16> to vector<1x16x16x128xbf16>
    tpu.vector_store %arg6[%c0_80, %c0_81, %c0_82, %c0_83], %100 {strides = array<i32>} : memref<1x16x16x128xbf16, #tpu.memory_space<vmem>>, vector<1x16x16x128xbf16>,
    return
  }
  func.func @transform_0(%arg0: i32, %arg1: i32) -> (i32, i32, i32, i32) {
    %c0_i32 = arith.constant 0 : i32
    %c0_i32_0 = arith.constant 0 : i32
    %c0_i32_1 = arith.constant 0 : i32
    %c0_i32_2 = arith.constant 0 : i32
    return %arg0, %c0_i32, %c0_i32_0, %c0_i32_1 : i32, i32, i32, i32
  }
  func.func @transform_1(%arg0: i32, %arg1: i32) -> (i32, i32, i32, i32) {
    %c0_i32 = arith.constant 0 : i32
    %c0_i32_0 = arith.constant 0 : i32
    %c0_i32_1 = arith.constant 0 : i32
    %c0_i32_2 = arith.constant 0 : i32
    %c0_i32_3 = arith.constant 0 : i32
    return %c0_i32, %c0_i32_0, %c0_i32_1, %c0_i32_2 : i32, i32, i32, i32
  }
  func.func @transform_2(%arg0: i32, %arg1: i32) -> (i32, i32) {
    %c0_i32 = arith.constant 0 : i32
    %c0_i32_0 = arith.constant 0 : i32
    %c0_i32_1 = arith.constant 0 : i32
    return %c0_i32, %c0_i32_0 : i32, i32
  }
  func.func @transform_3(%arg0: i32, %arg1: i32) -> (i32, i32) {
    %c0_i32 = arith.constant 0 : i32
    %c0_i32_0 = arith.constant 0 : i32
    %c0_i32_1 = arith.constant 0 : i32
    return %c0_i32, %c0_i32_0 : i32, i32
  }
  func.func @transform_4(%arg0: i32, %arg1: i32) -> (i32, i32, i32, i32) {
    %c0_i32 = arith.constant 0 : i32
    %c0_i32_0 = arith.constant 0 : i32
    %c0_i32_1 = arith.constant 0 : i32
    return %arg0, %arg1, %c0_i32, %c0_i32_0 : i32, i32, i32, i32
  }
}

</mosaic_0001>

<llo_original>
// kernel: tpu_custom_call.1
$region0: #{tpu_custom_call.1}
  #allocation0 [shape = 'u32[]', space=smem, size = 0x4, offset = 0x4, fixed_abs, tag = 'smem constant byte address 0x4 - core index']
  #allocation1 [shape = 'u32[72,128]{1,0:T(1,128)}', space=vmem, size = 0x9000, scoped, tag = 'internal scratch']
  %s0 = inlined_call_operand.vmem [shape: bf16[2,18,18,4], index: 0, kind: input, shape index: {}]
  %s1 = inlined_call_operand.vmem [shape: bf16[3,3,4,128], index: 1, kind: input, shape index: {}]
  %s2 = inlined_call_operand.vmem [shape: f32[1,128], index: 2, kind: input, shape index: {}]
  %s3 = inlined_call_operand.vmem [shape: f32[1,128], index: 3, kind: input, shape index: {}]
  %s4 = inlined_call_operand.hbm [shape: bf16[2,16,16,128], index: 4, kind: output, shape index: {}]
  %s5 = sld [smem:[#allocation0]]
  $region49: #{tpu_custom_call.1} parent=0
    _
  %s7 = ssub.s32 1, %s5
  %s8 = scalar_select 0, %s7, %s5
  $region1: #{tpu_custom_call.1} parent=0
    #allocation2 [shape = 'u8[131072]{0}', space=vmem, size = 0x20000, scoped, tag = 'output window, operand 0']
    #allocation3 [shape = 's32[2]{0}', space=sflag, size = 0x8, scoped, tag = 'scoped memory for tpu_custom_call.1']
    %9 = vsyncpa [#allocation3], 0
    %s10 = scalar_lea.sflag [#allocation3], 1
    %11 = vsyncpa %s10, 0
    loop: start=0, step=1, limit=4
    $region2: #{tpu_custom_call.1} parent=1 // loop_pre_header
      _
    $region3: #{tpu_custom_call.1} parent=1 // loop_header
      %s13 = sphi 0, %s17
      %p14 = scmp.ge.s32.totalorder %s13, 4
      %s20 = sphi 0, %s32
      %s21 = sphi 0, %s28
      %s22 = sphi 0, %s20
      %s23 = sphi 0, %s21
      %s24 = sphi 0, %s22
      %s25 = sphi 0, %s23
      %s35 = sphi 0, %s37
      %s38 = sphi 0, %s35
      %s39 = sphi 0, %s38
      %s55 = sphi 0, %s39
      %s59 = sphi 0, %s59
      %s61 = sphi 0, %s59
      %s62 = sphi 0, %s61
      %s76 = sphi 0, %s62
      %s80 = sphi 0, %s80
      %s82 = sphi 0, %s80
      %s83 = sphi 0, %s82
      %s97 = sphi 0, %s83
      %s101 = sphi 0, %s101
      %s103 = sphi 0, %s101
      %s104 = sphi 0, %s103
      %s118 = sphi 0, %s104
      %s126 = sphi 0, %s128
      %s129 = sphi 0, %s126
      %s130 = sphi 0, %s129
      %s146 = sphi 0, %s130
    $region4: #{tpu_custom_call.1} parent=1 // loop_header_branch
      %16 = sbr.rel (%p14) target = $region8
    $region5: #{tpu_custom_call.1} parent=1 // loop_body
      %s18 = ssub.s32 %s13, 1
      %s19 = ssub.s32 %s13, 2
      %s26 = sadd.s32 1, %s21
      %p27 = scmp.ge.s32.totalorder %s26, 1
      %s28 = scalar_select %p27, 0, %s26
      %s29 = sadd.s32 1, %s20
      %s30 = scalar_select %p27, %s29, %s20
      %p31 = scmp.ge.s32.totalorder %s30, 2
      %s32 = scalar_select %p31, 0, %s30
      %s33 = ssub.s32 %s20, %s32
      %p34 = scmp.eq.s32.totalorder %s33, 0
      %s36 = sadd.s32 %s35, 1
      %s37 = scalar_select %p34, %s35, %s36
      %p40 = pneg %p34
      %p41 = scmp.eq.s32.totalorder %s13, 1
      %p42 = por %p40, %p41
      %p43 = scmp.ne.s32.totalorder %s35, %s38
      %p44 = scmp.eq.s32.totalorder %s13, 0
      %p45 = por %p43, %p44
      %p46 = scmp.ne.s32.totalorder %s35, %s38
      %p47 = scmp.eq.s32.totalorder %s18, 1
      %p48 = por %p46, %p47
      %p49 = scmp.ne.s32.totalorder %s38, %s39
      %p50 = scmp.eq.s32.totalorder %s18, 0
      %p51 = por %p49, %p50
      %p52 = scmp.ne.s32.totalorder %s38, %s39
      %p53 = scmp.eq.s32.totalorder %s19, 1
      %p54 = por %p52, %p53
      %p56 = scmp.ne.s32.totalorder %s39, %s55
      %p57 = scmp.eq.s32.totalorder %s19, 0
      %p58 = por %p56, %p57
      %s60 = sadd.s32 %s59, 1
      %p63 = scmp.eq.s32.totalorder %s13, 1
      %p64 = scmp.ne.s32.totalorder %s59, %s61
      %p65 = scmp.eq.s32.totalorder %s13, 0
      %p66 = por %p64, %p65
      %p67 = scmp.ne.s32.totalorder %s59, %s61
      %p68 = scmp.eq.s32.totalorder %s18, 1
      %p69 = por %p67, %p68
      %p70 = scmp.ne.s32.totalorder %s61, %s62
      %p71 = scmp.eq.s32.totalorder %s18, 0
      %p72 = por %p70, %p71
      %p73 = scmp.ne.s32.totalorder %s61, %s62
      %p74 = scmp.eq.s32.totalorder %s19, 1
      %p75 = por %p73, %p74
      %p77 = scmp.ne.s32.totalorder %s62, %s76
      %p78 = scmp.eq.s32.totalorder %s19, 0
      %p79 = por %p77, %p78
      %s81 = sadd.s32 %s80, 1
      %p84 = scmp.eq.s32.totalorder %s13, 1
      %p85 = scmp.ne.s32.totalorder %s80, %s82
      %p86 = scmp.eq.s32.totalorder %s13, 0
      %p87 = por %p85, %p86
      %p88 = scmp.ne.s32.totalorder %s80, %s82
      %p89 = scmp.eq.s32.totalorder %s18, 1
      %p90 = por %p88, %p89
      %p91 = scmp.ne.s32.totalorder %s82, %s83
      %p92 = scmp.eq.s32.totalorder %s18, 0
      %p93 = por %p91, %p92
      %p94 = scmp.ne.s32.totalorder %s82, %s83
      %p95 = scmp.eq.s32.totalorder %s19, 1
      %p96 = por %p94, %p95
      %p98 = scmp.ne.s32.totalorder %s83, %s97
      %p99 = scmp.eq.s32.totalorder %s19, 0
      %p100 = por %p98, %p99
      %s102 = sadd.s32 %s101, 1
      %p105 = scmp.eq.s32.totalorder %s13, 1
      %p106 = scmp.ne.s32.totalorder %s101, %s103
      %p107 = scmp.eq.s32.totalorder %s13, 0
      %p108 = por %p106, %p107
      %p109 = scmp.ne.s32.totalorder %s101, %s103
      %p110 = scmp.eq.s32.totalorder %s18, 1
      %p111 = por %p109, %p110
      %p112 = scmp.ne.s32.totalorder %s103, %s104
      %p113 = scmp.eq.s32.totalorder %s18, 0
      %p114 = por %p112, %p113
      %p115 = scmp.ne.s32.totalorder %s103, %s104
      %p116 = scmp.eq.s32.totalorder %s19, 1
      %p117 = por %p115, %p116
      %p119 = scmp.ne.s32.totalorder %s104, %s118
      %p120 = scmp.eq.s32.totalorder %s19, 0
      %p121 = por %p119, %p120
      %s122 = ssub.s32 %s20, %s32
      %s123 = ssub.s32 %s21, %s28
      %s124 = sor.u32 %s122, %s123
      %p125 = scmp.eq.s32.totalorder %s124, 0
      %s127 = sadd.s32 %s126, 1
      %s128 = scalar_select %p125, %s126, %s127
      %p131 = pneg %p125
      %p132 = scmp.eq.s32.totalorder %s13, 1
      %p133 = por %p131, %p132
      %p134 = scmp.ne.s32.totalorder %s126, %s129
      %p135 = scmp.eq.s32.totalorder %s13, 0
      %p136 = por %p134, %p135
      %p137 = scmp.ne.s32.totalorder %s126, %s129
      %p138 = scmp.eq.s32.totalorder %s18, 1
      %p139 = por %p137, %p138
      %p140 = scmp.ne.s32.totalorder %s129, %s130
      %p141 = scmp.eq.s32.totalorder %s18, 0
      %p142 = por %p140, %p141
      %p143 = scmp.ne.s32.totalorder %s129, %s130
      %p144 = scmp.eq.s32.totalorder %s19, 1
      %p145 = por %p143, %p144
      %p147 = scmp.ne.s32.totalorder %s130, %s146
      %p148 = scmp.eq.s32.totalorder %s19, 0
      %p149 = por %p147, %p148
      %p150 = scmp.le.s32.totalorder 1, %s13
      %p151 = scmp.lt.s32.totalorder %s13, 3
      %p152 = pnand %p150, %p151
      %p153 = pneg %p152
      // Predicated region
      $region9: #{tpu_custom_call.1} parent=5 // pred_check
        _
      $region10: #{tpu_custom_call.1} parent=5 // pred_check_branch
        %155 = sbr.rel (%p152) target = $region12
      $region11: #{tpu_custom_call.1} parent=5 // pred_region
        %s156 = ssub.s32 %s13, 1
        // Predicated region
        $region13: #{tpu_custom_call.1} parent=11 // pred_check
          %p157 = pneg %p72
        $region14: #{tpu_custom_call.1} parent=11 // pred_check_branch
          %159 = sbr.rel (%p157) target = $region16
        $region15: #{tpu_custom_call.1} parent=11 // pred_region
          _
        $region16: #{tpu_custom_call.1} parent=11 // pred_fallthru
          _
        // Predicated region
        $region17: #{tpu_custom_call.1} parent=11 // pred_check
          %p160 = pneg %p93
        $region18: #{tpu_custom_call.1} parent=11 // pred_check_branch
          %162 = sbr.rel (%p160) target = $region20
        $region19: #{tpu_custom_call.1} parent=11 // pred_region
          _
        $region20: #{tpu_custom_call.1} parent=11 // pred_fallthru
          _
        // Predicated region
        $region21: #{tpu_custom_call.1} parent=11 // pred_check
          %p163 = pneg %p114
        $region22: #{tpu_custom_call.1} parent=11 // pred_check_branch
          %165 = sbr.rel (%p163) target = $region24
        $region23: #{tpu_custom_call.1} parent=11 // pred_region
          _
        $region24: #{tpu_custom_call.1} parent=11 // pred_fallthru
          _
      $region12: #{tpu_custom_call.1} parent=5 // pred_fallthru
        _
      %p166 = scmp.lt.s32.totalorder %s13, 2
      // Predicated region
      $region25: #{tpu_custom_call.1} parent=5 // pred_check
        %p167 = pneg %p166
      $region26: #{tpu_custom_call.1} parent=5 // pred_check_branch
        %169 = sbr.rel (%p167) target = $region28
      $region27: #{tpu_custom_call.1} parent=5 // pred_region
        // Predicated region
        $region29: #{tpu_custom_call.1} parent=27 // pred_check
          %p170 = pneg %p45
        $region30: #{tpu_custom_call.1} parent=27 // pred_check_branch
          %172 = sbr.rel (%p170) target = $region32
        $region31: #{tpu_custom_call.1} parent=27 // pred_region
          %p173 = scmp.lt.s32.totalorder %s20, 1
          %s174 = scalar_select %p173, %s20, 1
          %s175 = smul.addr %s174, 54
          %s176 = smul.addr %s175, 4
          %s177 = scalar_lea.vmem %s0, %s176
        $region32: #{tpu_custom_call.1} parent=27 // pred_fallthru
          _
      $region28: #{tpu_custom_call.1} parent=5 // pred_fallthru
        _
      %p178 = scmp.le.s32.totalorder 1, %s13
      %p179 = scmp.lt.s32.totalorder %s13, 3
      %p180 = pnand %p178, %p179
      %p181 = pneg %p180
      // Predicated region
      $region33: #{tpu_custom_call.1} parent=5 // pred_check
        _
      $region34: #{tpu_custom_call.1} parent=5 // pred_check_branch
        %183 = sbr.rel (%p180) target = $region36
      $region35: #{tpu_custom_call.1} parent=5 // pred_region
        %s184 = ssub.s32 %s13, 1
        %p185 = scmp.lt.s32.totalorder %s22, 1
        %s186 = scalar_select %p185, %s22, 1
        %s187 = smul.addr %s186, 54
        %s188 = smul.addr %s187, 4
        %s189 = scalar_lea.vmem %s0, %s188
        %p190 = pneg %p51
        %p191 = pneg %p48
        %p192 = pneg %p72
        %p193 = pneg %p69
        %p194 = pneg %p93
        %p195 = pneg %p90
        %p196 = pneg %p114
        %p197 = pneg %p111
        %p198 = pneg %p142
        %p199 = pneg %p139
        %s200 = sand.u32 %s129, 1
        %s201 = scalar_lea.sflag [#allocation3], %s200
        %s202 = sand.u32 %s129, 1
        %s203 = smul.addr %s202, 128
        %s204 = scalar_lea.vmem [#allocation2], %s203
        %p205 = scmp.lt.s32.totalorder %s22, 1
        %s206 = scalar_select %p205, %s22, 1
        %s207 = smul.addr %s206, 54
        %s208 = smul.addr %s207, 4
        %s209 = scalar_lea.vmem %s0, %s208
        %s210 = smul.u32 16, %s23
        %s212 = smul.u32 %s23, 16
        %s213 = smul.u32 %s212, 3
        %s214 = smul.addr %s213, 4
        %s215 = scalar_lea.vmem %s209, %s214
        %v216 = vld [vmem:[%s215] sm:$0xf]
        %v217 = vld [vmem:[%s215 + $0x4] sm:$0xf]
        %v218 = vld [vmem:[%s215 + $0xc] sm:$0xf]
        %v219 = vld [vmem:[%s215 + $0x10] sm:$0xf]
        %v220 = vld [vmem:[%s215 + $0x18] sm:$0xf]
        %v221 = vld [vmem:[%s215 + $0x1c] sm:$0xf]
        %v222 = vld [vmem:[%s215 + $0x24] sm:$0xf]
        %v223 = vld [vmem:[%s215 + $0x28] sm:$0xf]
        %v224 = vld [vmem:[%s215 + $0x30] sm:$0xf]
        %v225 = vld [vmem:[%s215 + $0x34] sm:$0xf]
        %v226 = vld [vmem:[%s215 + $0x3c] sm:$0xf]
        %v227 = vld [vmem:[%s215 + $0x40] sm:$0xf]
        %v228 = vld [vmem:[%s215 + $0x48] sm:$0xf]
        %v229 = vld [vmem:[%s215 + $0x4c] sm:$0xf]
        %v230 = vld [vmem:[%s215 + $0x54] sm:$0xf]
        %v231 = vld [vmem:[%s215 + $0x58] sm:$0xf]
        %v232 = vld [vmem:[%s215 + $0x60] sm:$0xf]
        %v233 = vld [vmem:[%s215 + $0x64] sm:$0xf]
        %v234 = vld [vmem:[%s215 + $0x6c] sm:$0xf]
        %v235 = vld [vmem:[%s215 + $0x70] sm:$0xf]
        %v236 = vld [vmem:[%s215 + $0x78] sm:$0xf]
        %v237 = vld [vmem:[%s215 + $0x7c] sm:$0xf]
        %v238 = vld [vmem:[%s215 + $0x84] sm:$0xf]
        %v239 = vld [vmem:[%s215 + $0x88] sm:$0xf]
        %v240 = vld [vmem:[%s215 + $0x90] sm:$0xf]
        %v241 = vld [vmem:[%s215 + $0x94] sm:$0xf]
        %v242 = vld [vmem:[%s215 + $0x9c] sm:$0xf]
        %v243 = vld [vmem:[%s215 + $0xa0] sm:$0xf]
        %v244 = vld [vmem:[%s215 + $0xa8] sm:$0xf]
        %v245 = vld [vmem:[%s215 + $0xac] sm:$0xf]
        %v246 = vld [vmem:[%s215 + $0xb4] sm:$0xf]
        %v247 = vld [vmem:[%s215 + $0xb8] sm:$0xf]
        %v248 = vld [vmem:[%s1] sm:$0x3]
        %v249 = vld [vmem:[%s215 + $0x8] sm:$0x1]
        %v250 = vld [vmem:[%s215 + $0x14] sm:$0x1]
        %v251 = vld [vmem:[%s215 + $0x20] sm:$0x1]
        %v252 = vld [vmem:[%s215 + $0x2c] sm:$0x1]
        %v253 = vld [vmem:[%s215 + $0x38] sm:$0x1]
        %v254 = vld [vmem:[%s215 + $0x44] sm:$0x1]
        %v255 = vld [vmem:[%s215 + $0x50] sm:$0x1]
        %v256 = vld [vmem:[%s215 + $0x5c] sm:$0x1]
        %v257 = vld [vmem:[%s215 + $0x68] sm:$0x1]
        %v258 = vld [vmem:[%s215 + $0x74] sm:$0x1]
        %v259 = vld [vmem:[%s215 + $0x80] sm:$0x1]
        %v260 = vld [vmem:[%s215 + $0x8c] sm:$0x1]
        %v261 = vld [vmem:[%s215 + $0x98] sm:$0x1]
        %v262 = vld [vmem:[%s215 + $0xa4] sm:$0x1]
        %v263 = vld [vmem:[%s215 + $0xb0] sm:$0x1]
        %v264 = vld [vmem:[%s215 + $0xbc] sm:$0x1]
        %vm265 = vsmask.f32 3328
        %vm266 = vsmask.f32 7440
        %vm267 = vmor %vm265, %vm266
        %v269 = vshrl.u32 %v216, 16
        %v271 = vrot.slane %v269, 4
        %v272 = vshll.u32 %v216, 16
        %v274 = vrot.slane %v272, 5
        %v275 = vor.u32 %v271, %v274
        %v276 = vrot.slane %v275, 4
        %v278 = vshll.u32 %v217, 16
        %v280 = vrot.slane %v278, 5
        %v281 = vsel %vm267, %v276, %v280
        %v282 = vshrl.u32 %v217, 16
        %v284 = vrot.slane %v282, 4
        %v285 = vor.u32 %v284, %v280
        %v286 = vrot.slane %v285, 4
        %v288 = vshll.u32 %v249, 16
        %v290 = vrot.slane %v288, 5
        %v291 = vsel %vm267, %v286, %v290
        %v293 = vshrl.u32 %v218, 16
        %v295 = vrot.slane %v293, 4
        %v296 = vshll.u32 %v218, 16
        %v298 = vrot.slane %v296, 5
        %v299 = vor.u32 %v295, %v298
        %v300 = vrot.slane %v299, 4
        %v302 = vshll.u32 %v219, 16
        %v304 = vrot.slane %v302, 5
        %v305 = vsel %vm267, %v300, %v304
        %v306 = vshrl.u32 %v219, 16
        %v308 = vrot.slane %v306, 4
        %v309 = vor.u32 %v308, %v304
        %v310 = vrot.slane %v309, 4
        %v312 = vshll.u32 %v250, 16
        %v314 = vrot.slane %v312, 5
        %v315 = vsel %vm267, %v310, %v314
        %v317 = vshrl.u32 %v220, 16
        %v319 = vrot.slane %v317, 4
        %v320 = vshll.u32 %v220, 16
        %v322 = vrot.slane %v320, 5
        %v323 = vor.u32 %v319, %v322
        %v324 = vrot.slane %v323, 4
        %v326 = vshll.u32 %v221, 16
        %v328 = vrot.slane %v326, 5
        %v329 = vsel %vm267, %v324, %v328
        %v330 = vshrl.u32 %v221, 16
        %v332 = vrot.slane %v330, 4
        %v333 = vor.u32 %v332, %v328
        %v334 = vrot.slane %v333, 4
        %v336 = vshll.u32 %v251, 16
        %v338 = vrot.slane %v336, 5
        %v339 = vsel %vm267, %v334, %v338
        %v341 = vshrl.u32 %v222, 16
        %v343 = vrot.slane %v341, 4
        %v344 = vshll.u32 %v222, 16
        %v346 = vrot.slane %v344, 5
        %v347 = vor.u32 %v343, %v346
        %v348 = vrot.slane %v347, 4
        %v350 = vshll.u32 %v223, 16
        %v352 = vrot.slane %v350, 5
        %v353 = vsel %vm267, %v348, %v352
        %v354 = vshrl.u32 %v223, 16
        %v356 = vrot.slane %v354, 4
        %v357 = vor.u32 %v356, %v352
        %v358 = vrot.slane %v357, 4
        %v360 = vshll.u32 %v252, 16
        %v362 = vrot.slane %v360, 5
        %v363 = vsel %vm267, %v358, %v362
        %v365 = vshrl.u32 %v224, 16
        %v367 = vrot.slane %v365, 4
        %v368 = vshll.u32 %v224, 16
        %v370 = vrot.slane %v368, 5
        %v371 = vor.u32 %v367, %v370
        %v372 = vrot.slane %v371, 4
        %v374 = vshll.u32 %v225, 16
        %v376 = vrot.slane %v374, 5
        %v377 = vsel %vm267, %v372, %v376
        %v378 = vshrl.u32 %v225, 16
        %v380 = vrot.slane %v378, 4
        %v381 = vor.u32 %v380, %v376
        %v382 = vrot.slane %v381, 4
        %v384 = vshll.u32 %v253, 16
        %v386 = vrot.slane %v384, 5
        %v387 = vsel %vm267, %v382, %v386
        %v389 = vshrl.u32 %v226, 16
        %v391 = vrot.slane %v389, 4
        %v392 = vshll.u32 %v226, 16
        %v394 = vrot.slane %v392, 5
        %v395 = vor.u32 %v391, %v394
        %v396 = vrot.slane %v395, 4
        %v398 = vshll.u32 %v227, 16
        %v400 = vrot.slane %v398, 5
        %v401 = vsel %vm267, %v396, %v400
        %v402 = vshrl.u32 %v227, 16
        %v404 = vrot.slane %v402, 4
        %v405 = vor.u32 %v404, %v400
        %v406 = vrot.slane %v405, 4
        %v408 = vshll.u32 %v254, 16
        %v410 = vrot.slane %v408, 5
        %v411 = vsel %vm267, %v406, %v410
        %v413 = vshrl.u32 %v228, 16
        %v415 = vrot.slane %v413, 4
        %v416 = vshll.u32 %v228, 16
        %v418 = vrot.slane %v416, 5
        %v419 = vor.u32 %v415, %v418
        %v420 = vrot.slane %v419, 4
        %v422 = vshll.u32 %v229, 16
        %v424 = vrot.slane %v422, 5
        %v425 = vsel %vm267, %v420, %v424
        %v426 = vshrl.u32 %v229, 16
        %v428 = vrot.slane %v426, 4
        %v429 = vor.u32 %v428, %v424
        %v430 = vrot.slane %v429, 4
        %v432 = vshll.u32 %v255, 16
        %v434 = vrot.slane %v432, 5
        %v435 = vsel %vm267, %v430, %v434
        %v437 = vshrl.u32 %v230, 16
        %v439 = vrot.slane %v437, 4
        %v440 = vshll.u32 %v230, 16
        %v442 = vrot.slane %v440, 5
        %v443 = vor.u32 %v439, %v442
        %v444 = vrot.slane %v443, 4
        %v446 = vshll.u32 %v231, 16
        %v448 = vrot.slane %v446, 5
        %v449 = vsel %vm267, %v444, %v448
        %v450 = vshrl.u32 %v231, 16
        %v452 = vrot.slane %v450, 4
        %v453 = vor.u32 %v452, %v448
        %v454 = vrot.slane %v453, 4
        %v456 = vshll.u32 %v256, 16
        %v458 = vrot.slane %v456, 5
        %v459 = vsel %vm267, %v454, %v458
        %v461 = vshrl.u32 %v232, 16
        %v463 = vrot.slane %v461, 4
        %v464 = vshll.u32 %v232, 16
        %v466 = vrot.slane %v464, 5
        %v467 = vor.u32 %v463, %v466
        %v468 = vrot.slane %v467, 4
        %v470 = vshll.u32 %v233, 16
        %v472 = vrot.slane %v470, 5
        %v473 = vsel %vm267, %v468, %v472
        %v474 = vshrl.u32 %v233, 16
        %v476 = vrot.slane %v474, 4
        %v477 = vor.u32 %v476, %v472
        %v478 = vrot.slane %v477, 4
        %v480 = vshll.u32 %v257, 16
        %v482 = vrot.slane %v480, 5
        %v483 = vsel %vm267, %v478, %v482
        %v485 = vshrl.u32 %v234, 16
        %v487 = vrot.slane %v485, 4
        %v488 = vshll.u32 %v234, 16
        %v490 = vrot.slane %v488, 5
        %v491 = vor.u32 %v487, %v490
        %v492 = vrot.slane %v491, 4
        %v494 = vshll.u32 %v235, 16
        %v496 = vrot.slane %v494, 5
        %v497 = vsel %vm267, %v492, %v496
        %v498 = vshrl.u32 %v235, 16
        %v500 = vrot.slane %v498, 4
        %v501 = vor.u32 %v500, %v496
        %v502 = vrot.slane %v501, 4
        %v504 = vshll.u32 %v258, 16
        %v506 = vrot.slane %v504, 5
        %v507 = vsel %vm267, %v502, %v506
        %v509 = vshrl.u32 %v236, 16
        %v511 = vrot.slane %v509, 4
        %v512 = vshll.u32 %v236, 16
        %v514 = vrot.slane %v512, 5
        %v515 = vor.u32 %v511, %v514
        %v516 = vrot.slane %v515, 4
        %v518 = vshll.u32 %v237, 16
        %v520 = vrot.slane %v518, 5
        %v521 = vsel %vm267, %v516, %v520
        %v522 = vshrl.u32 %v237, 16
        %v524 = vrot.slane %v522, 4
        %v525 = vor.u32 %v524, %v520
        %v526 = vrot.slane %v525, 4
        %v528 = vshll.u32 %v259, 16
        %v530 = vrot.slane %v528, 5
        %v531 = vsel %vm267, %v526, %v530
        %v533 = vshrl.u32 %v238, 16
        %v535 = vrot.slane %v533, 4
        %v536 = vshll.u32 %v238, 16
        %v538 = vrot.slane %v536, 5
        %v539 = vor.u32 %v535, %v538
        %v540 = vrot.slane %v539, 4
        %v542 = vshll.u32 %v239, 16
        %v544 = vrot.slane %v542, 5
        %v545 = vsel %vm267, %v540, %v544
        %v546 = vshrl.u32 %v239, 16
        %v548 = vrot.slane %v546, 4
        %v549 = vor.u32 %v548, %v544
        %v550 = vrot.slane %v549, 4
        %v552 = vshll.u32 %v260, 16
        %v554 = vrot.slane %v552, 5
        %v555 = vsel %vm267, %v550, %v554
        %v557 = vshrl.u32 %v240, 16
        %v559 = vrot.slane %v557, 4
        %v560 = vshll.u32 %v240, 16
        %v562 = vrot.slane %v560, 5
        %v563 = vor.u32 %v559, %v562
        %v564 = vrot.slane %v563, 4
        %v566 = vshll.u32 %v241, 16
        %v568 = vrot.slane %v566, 5
        %v569 = vsel %vm267, %v564, %v568
        %v570 = vshrl.u32 %v241, 16
        %v572 = vrot.slane %v570, 4
        %v573 = vor.u32 %v572, %v568
        %v574 = vrot.slane %v573, 4
        %v576 = vshll.u32 %v261, 16
        %v578 = vrot.slane %v576, 5
        %v579 = vsel %vm267, %v574, %v578
        %v581 = vshrl.u32 %v242, 16
        %v583 = vrot.slane %v581, 4
        %v584 = vshll.u32 %v242, 16
        %v586 = vrot.slane %v584, 5
        %v587 = vor.u32 %v583, %v586
        %v588 = vrot.slane %v587, 4
        %v590 = vshll.u32 %v243, 16
        %v592 = vrot.slane %v590, 5
        %v593 = vsel %vm267, %v588, %v592
        %v594 = vshrl.u32 %v243, 16
        %v596 = vrot.slane %v594, 4
        %v597 = vor.u32 %v596, %v592
        %v598 = vrot.slane %v597, 4
        %v600 = vshll.u32 %v262, 16
        %v602 = vrot.slane %v600, 5
        %v603 = vsel %vm267, %v598, %v602
        %v605 = vshrl.u32 %v244, 16
        %v607 = vrot.slane %v605, 4
        %v608 = vshll.u32 %v244, 16
        %v610 = vrot.slane %v608, 5
        %v611 = vor.u32 %v607, %v610
        %v612 = vrot.slane %v611, 4
        %v614 = vshll.u32 %v245, 16
        %v616 = vrot.slane %v614, 5
        %v617 = vsel %vm267, %v612, %v616
        %v618 = vshrl.u32 %v245, 16
        %v620 = vrot.slane %v618, 4
        %v621 = vor.u32 %v620, %v616
        %v622 = vrot.slane %v621, 4
        %v624 = vshll.u32 %v263, 16
        %v626 = vrot.slane %v624, 5
        %v627 = vsel %vm267, %v622, %v626
        %v629 = vshrl.u32 %v246, 16
        %v631 = vrot.slane %v629, 4
        %v632 = vshll.u32 %v246, 16
        %v634 = vrot.slane %v632, 5
        %v635 = vor.u32 %v631, %v634
        %v636 = vrot.slane %v635, 4
        %v638 = vshll.u32 %v247, 16
        %v640 = vrot.slane %v638, 5
        %v641 = vsel %vm267, %v636, %v640
        %v642 = vshrl.u32 %v247, 16
        %v644 = vrot.slane %v642, 4
        %v645 = vor.u32 %v644, %v640
        %v646 = vrot.slane %v645, 4
        %v648 = vshll.u32 %v264, 16
        %v650 = vrot.slane %v648, 5
        %v651 = vsel %vm267, %v646, %v650
        %s652 = scalar_lea.vmem %s1, 2
        %v653 = vld [vmem:[%s652] sm:$0x3]
        %v654 = vunpack.c.l.b16 %v281
        %v655 = vunpack.c.l.b16 %v291
        %v656 = vunpack.c.l.b16 %v305
        %v657 = vunpack.c.l.b16 %v315
        %v658 = vunpack.c.l.b16 %v329
        %v659 = vunpack.c.l.b16 %v339
        %v660 = vunpack.c.l.b16 %v353
        %v661 = vunpack.c.l.b16 %v363
        %v662 = vunpack.c.l.b16 %v377
        %v663 = vunpack.c.l.b16 %v387
        %v664 = vunpack.c.l.b16 %v401
        %v665 = vunpack.c.l.b16 %v411
        %v666 = vunpack.c.l.b16 %v425
        %v667 = vunpack.c.l.b16 %v435
        %v668 = vunpack.c.l.b16 %v449
        %v669 = vunpack.c.l.b16 %v459
        %v670 = vunpack.c.l.b16 %v473
        %v671 = vunpack.c.l.b16 %v483
        %v672 = vunpack.c.l.b16 %v497
        %v673 = vunpack.c.l.b16 %v507
        %v674 = vunpack.c.l.b16 %v521
        %v675 = vunpack.c.l.b16 %v531
        %v676 = vunpack.c.l.b16 %v545
        %v677 = vunpack.c.l.b16 %v555
        %v678 = vunpack.c.l.b16 %v569
        %v679 = vunpack.c.l.b16 %v579
        %v680 = vunpack.c.l.b16 %v593
        %v681 = vunpack.c.l.b16 %v603
        %v682 = vunpack.c.l.b16 %v617
        %v683 = vunpack.c.l.b16 %v627
        %v684 = vunpack.c.l.b16 %v641
        %v685 = vunpack.c.l.b16 %v651
        %v686 = vpack.c.b16 %v655, %v654
        %v687 = vpack.c.b16 %v657, %v656
        %v688 = vpack.c.b16 %v659, %v658
        %v689 = vpack.c.b16 %v661, %v660
        %v690 = vpack.c.b16 %v663, %v662
        %v691 = vpack.c.b16 %v665, %v664
        %v692 = vpack.c.b16 %v667, %v666
        %v693 = vpack.c.b16 %v669, %v668
        %v694 = vpack.c.b16 %v671, %v670
        %v695 = vpack.c.b16 %v673, %v672
        %v696 = vpack.c.b16 %v675, %v674
        %v697 = vpack.c.b16 %v677, %v676
        %v698 = vpack.c.b16 %v679, %v678
        %v699 = vpack.c.b16 %v681, %v680
        %v700 = vpack.c.b16 %v683, %v682
        %v701 = vpack.c.b16 %v685, %v684
        %vm702 = vcmask 31744
        %v704 = vsel %vm702, %v686, 0
        %v707 = vsel %vm702, %v687, 0
        %v710 = vsel %vm702, %v688, 0
        %v713 = vsel %vm702, %v689, 0
        %v716 = vsel %vm702, %v690, 0
        %v719 = vsel %vm702, %v691, 0
        %v722 = vsel %vm702, %v692, 0
        %v725 = vsel %vm702, %v693, 0
        %v728 = vsel %vm702, %v694, 0
        %v731 = vsel %vm702, %v695, 0
        %v734 = vsel %vm702, %v696, 0
        %v737 = vsel %vm702, %v697, 0
        %v740 = vsel %vm702, %v698, 0
        %v743 = vsel %vm702, %v699, 0
        %v746 = vsel %vm702, %v700, 0
        %v749 = vsel %vm702, %v701, 0
        %vm751 = vcmask 1041408
        %v753 = vsel %vm751, %v653, 0
        %755 = vmatpush.bf16.msra.mxu0 0
        %756 = vmatpush.bf16.msra.mxu0 0
        %757 = vmatpush.bf16.msra.mxu0 0
        %758 = vmatpush.bf16.msra.mxu0 0
        %759 = vmatpush.bf16.msra.mxu0 0
        %760 = vmatpush.bf16.msra.mxu0 0
        %761 = vmatpush.bf16.msra.mxu0 0
        %762 = vmatpush.bf16.msra.mxu0 %v753
        %763 = vmatmul.bf16.gmra.mxu0 %v704
        %v764 = vpop.f32.mrf.mxu0
        %v765 = vadd.f32 0.0, %v764
        %v766 = vpop.f32.mrf.mxu0
        %v767 = vadd.f32 0.0, %v766
        %768 = vmatmul.bf16.gmra.mxu0 %v707
        %v769 = vpop.f32.mrf.mxu0
        %v770 = vadd.f32 0.0, %v769
        %v771 = vpop.f32.mrf.mxu0
        %v772 = vadd.f32 0.0, %v771
        %773 = vmatmul.bf16.gmra.mxu0 %v710
        %v774 = vpop.f32.mrf.mxu0
        %v775 = vadd.f32 0.0, %v774
        %v776 = vpop.f32.mrf.mxu0
        %v777 = vadd.f32 0.0, %v776
        %778 = vmatmul.bf16.gmra.mxu0 %v713
        %v779 = vpop.f32.mrf.mxu0
        %v780 = vadd.f32 0.0, %v779
        %v781 = vpop.f32.mrf.mxu0
        %v782 = vadd.f32 0.0, %v781
        %783 = vmatmul.bf16.gmra.mxu0 %v716
        %v784 = vpop.f32.mrf.mxu0
        %v785 = vadd.f32 0.0, %v784
        %v786 = vpop.f32.mrf.mxu0
        %v787 = vadd.f32 0.0, %v786
        %788 = vmatmul.bf16.gmra.mxu0 %v719
        %v789 = vpop.f32.mrf.mxu0
        %v790 = vadd.f32 0.0, %v789
        %v791 = vpop.f32.mrf.mxu0
        %v792 = vadd.f32 0.0, %v791
        %793 = vmatmul.bf16.gmra.mxu0 %v722
        %v794 = vpop.f32.mrf.mxu0
        %v795 = vadd.f32 0.0, %v794
        %v796 = vpop.f32.mrf.mxu0
        %v797 = vadd.f32 0.0, %v796
        %798 = vmatmul.bf16.gmra.mxu0 %v725
        %v799 = vpop.f32.mrf.mxu0
        %v800 = vadd.f32 0.0, %v799
        %v801 = vpop.f32.mrf.mxu0
        %v802 = vadd.f32 0.0, %v801
        %803 = vmatmul.bf16.gmra.mxu0 %v728
        %v804 = vpop.f32.mrf.mxu0
        %v805 = vadd.f32 0.0, %v804
        %v806 = vpop.f32.mrf.mxu0
        %v807 = vadd.f32 0.0, %v806
        %808 = vmatmul.bf16.gmra.mxu0 %v731
        %v809 = vpop.f32.mrf.mxu0
        %v810 = vadd.f32 0.0, %v809
        %v811 = vpop.f32.mrf.mxu0
        %v812 = vadd.f32 0.0, %v811
        %813 = vmatmul.bf16.gmra.mxu0 %v734
        %v814 = vpop.f32.mrf.mxu0
        %v815 = vadd.f32 0.0, %v814
        %v816 = vpop.f32.mrf.mxu0
        %v817 = vadd.f32 0.0, %v816
        %818 = vmatmul.bf16.gmra.mxu0 %v737
        %v819 = vpop.f32.mrf.mxu0
        %v820 = vadd.f32 0.0, %v819
        %v821 = vpop.f32.mrf.mxu0
        %v822 = vadd.f32 0.0, %v821
        %823 = vmatmul.bf16.gmra.mxu0 %v740
        %v824 = vpop.f32.mrf.mxu0
        %v825 = vadd.f32 0.0, %v824
        %v826 = vpop.f32.mrf.mxu0
        %v827 = vadd.f32 0.0, %v826
        %828 = vmatmul.bf16.gmra.mxu0 %v743
        %v829 = vpop.f32.mrf.mxu0
        %v830 = vadd.f32 0.0, %v829
        %v831 = vpop.f32.mrf.mxu0
        %v832 = vadd.f32 0.0, %v831
        %833 = vmatmul.bf16.gmra.mxu0 %v746
        %v834 = vpop.f32.mrf.mxu0
        %v835 = vadd.f32 0.0, %v834
        %v836 = vpop.f32.mrf.mxu0
        %v837 = vadd.f32 0.0, %v836
        %838 = vmatmul.bf16.gmra.mxu0 %v749
        %v839 = vpop.f32.mrf.mxu0
        %v840 = vadd.f32 0.0, %v839
        %v841 = vpop.f32.mrf.mxu0
        %v842 = vadd.f32 0.0, %v841
        %843 = vdwg.mxu0
        %v876 = vunpack.c.l.b16 %v216
        %v877 = vunpack.c.l.b16 %v217
        %v878 = vunpack.c.l.b16 %v218
        %v879 = vunpack.c.l.b16 %v219
        %v880 = vunpack.c.l.b16 %v220
        %v881 = vunpack.c.l.b16 %v221
        %v882 = vunpack.c.l.b16 %v222
        %v883 = vunpack.c.l.b16 %v223
        %v884 = vunpack.c.l.b16 %v224
        %v885 = vunpack.c.l.b16 %v225
        %v886 = vunpack.c.l.b16 %v226
        %v887 = vunpack.c.l.b16 %v227
        %v888 = vunpack.c.l.b16 %v228
        %v889 = vunpack.c.l.b16 %v229
        %v890 = vunpack.c.l.b16 %v230
        %v891 = vunpack.c.l.b16 %v231
        %v892 = vunpack.c.l.b16 %v232
        %v893 = vunpack.c.l.b16 %v233
        %v894 = vunpack.c.l.b16 %v234
        %v895 = vunpack.c.l.b16 %v235
        %v896 = vunpack.c.l.b16 %v236
        %v897 = vunpack.c.l.b16 %v237
        %v898 = vunpack.c.l.b16 %v238
        %v899 = vunpack.c.l.b16 %v239
        %v900 = vunpack.c.l.b16 %v240
        %v901 = vunpack.c.l.b16 %v241
        %v902 = vunpack.c.l.b16 %v242
        %v903 = vunpack.c.l.b16 %v243
        %v904 = vunpack.c.l.b16 %v244
        %v905 = vunpack.c.l.b16 %v245
        %v906 = vunpack.c.l.b16 %v246
        %v907 = vunpack.c.l.b16 %v247
        %v908 = vpack.c.b16 %v877, %v876
        %v909 = vpack.c.b16 %v879, %v878
        %v910 = vpack.c.b16 %v881, %v880
        %v911 = vpack.c.b16 %v883, %v882
        %v912 = vpack.c.b16 %v885, %v884
        %v913 = vpack.c.b16 %v887, %v886
        %v914 = vpack.c.b16 %v889, %v888
        %v915 = vpack.c.b16 %v891, %v890
        %v916 = vpack.c.b16 %v893, %v892
        %v917 = vpack.c.b16 %v895, %v894
        %v918 = vpack.c.b16 %v897, %v896
        %v919 = vpack.c.b16 %v899, %v898
        %v920 = vpack.c.b16 %v901, %v900
        %v921 = vpack.c.b16 %v903, %v902
        %v922 = vpack.c.b16 %v905, %v904
        %v923 = vpack.c.b16 %v907, %v906
        %v925 = vsel %vm702, %v908, 0
        %v928 = vsel %vm702, %v909, 0
        %v931 = vsel %vm702, %v910, 0
        %v934 = vsel %vm702, %v911, 0
        %v937 = vsel %vm702, %v912, 0
        %v940 = vsel %vm702, %v913, 0
        %v943 = vsel %vm702, %v914, 0
        %v946 = vsel %vm702, %v915, 0
        %v949 = vsel %vm702, %v916, 0
        %v952 = vsel %vm702, %v917, 0
        %v955 = vsel %vm702, %v918, 0
        %v958 = vsel %vm702, %v919, 0
        %v961 = vsel %vm702, %v920, 0
        %v964 = vsel %vm702, %v921, 0
        %v967 = vsel %vm702, %v922, 0
        %v970 = vsel %vm702, %v923, 0
        %v973 = vsel %vm751, %v248, 0
        %975 = vmatpush.bf16.msra.mxu0 0
        %976 = vmatpush.bf16.msra.mxu0 0
        %977 = vmatpush.bf16.msra.mxu0 0
        %978 = vmatpush.bf16.msra.mxu0 0
        %979 = vmatpush.bf16.msra.mxu0 0
        %980 = vmatpush.bf16.msra.mxu0 0
        %981 = vmatpush.bf16.msra.mxu0 0
        %982 = vmatpush.bf16.msra.mxu0 %v973
        %983 = vmatmul.bf16.gmra.mxu0 %v925
        %v984 = vpop.f32.mrf.mxu0
        %v985 = vadd.f32 %v765, %v984
        %v986 = vpop.f32.mrf.mxu0
        %v987 = vadd.f32 %v767, %v986
        %988 = vmatmul.bf16.gmra.mxu0 %v928
        %v989 = vpop.f32.mrf.mxu0
        %v990 = vadd.f32 %v770, %v989
        %v991 = vpop.f32.mrf.mxu0
        %v992 = vadd.f32 %v772, %v991
        %993 = vmatmul.bf16.gmra.mxu0 %v931
        %v994 = vpop.f32.mrf.mxu0
        %v995 = vadd.f32 %v775, %v994
        %v996 = vpop.f32.mrf.mxu0
        %v997 = vadd.f32 %v777, %v996
        %998 = vmatmul.bf16.gmra.mxu0 %v934
        %v999 = vpop.f32.mrf.mxu0
        %v1000 = vadd.f32 %v780, %v999
        %v1001 = vpop.f32.mrf.mxu0
        %v1002 = vadd.f32 %v782, %v1001
        %1003 = vmatmul.bf16.gmra.mxu0 %v937
        %v1004 = vpop.f32.mrf.mxu0
        %v1005 = vadd.f32 %v785, %v1004
        %v1006 = vpop.f32.mrf.mxu0
        %v1007 = vadd.f32 %v787, %v1006
        %1008 = vmatmul.bf16.gmra.mxu0 %v940
        %v1009 = vpop.f32.mrf.mxu0
        %v1010 = vadd.f32 %v790, %v1009
        %v1011 = vpop.f32.mrf.mxu0
        %v1012 = vadd.f32 %v792, %v1011
        %1013 = vmatmul.bf16.gmra.mxu0 %v943
        %v1014 = vpop.f32.mrf.mxu0
        %v1015 = vadd.f32 %v795, %v1014
        %v1016 = vpop.f32.mrf.mxu0
        %v1017 = vadd.f32 %v797, %v1016
        %1018 = vmatmul.bf16.gmra.mxu0 %v946
        %v1019 = vpop.f32.mrf.mxu0
        %v1020 = vadd.f32 %v800, %v1019
        %v1021 = vpop.f32.mrf.mxu0
        %v1022 = vadd.f32 %v802, %v1021
        %1023 = vmatmul.bf16.gmra.mxu0 %v949
        %v1024 = vpop.f32.mrf.mxu0
        %v1025 = vadd.f32 %v805, %v1024
        %v1026 = vpop.f32.mrf.mxu0
        %v1027 = vadd.f32 %v807, %v1026
        %1028 = vmatmul.bf16.gmra.mxu0 %v952
        %v1029 = vpop.f32.mrf.mxu0
        %v1030 = vadd.f32 %v810, %v1029
        %v1031 = vpop.f32.mrf.mxu0
        %v1032 = vadd.f32 %v812, %v1031
        %1033 = vmatmul.bf16.gmra.mxu0 %v955
        %v1034 = vpop.f32.mrf.mxu0
        %v1035 = vadd.f32 %v815, %v1034
        %v1036 = vpop.f32.mrf.mxu0
        %v1037 = vadd.f32 %v817, %v1036
        %1038 = vmatmul.bf16.gmra.mxu0 %v958
        %v1039 = vpop.f32.mrf.mxu0
        %v1040 = vadd.f32 %v820, %v1039
        %v1041 = vpop.f32.mrf.mxu0
        %v1042 = vadd.f32 %v822, %v1041
        %1043 = vmatmul.bf16.gmra.mxu0 %v961
        %v1044 = vpop.f32.mrf.mxu0
        %v1045 = vadd.f32 %v825, %v1044
        %v1046 = vpop.f32.mrf.mxu0
        %v1047 = vadd.f32 %v827, %v1046
        %1048 = vmatmul.bf16.gmra.mxu0 %v964
        %v1049 = vpop.f32.mrf.mxu0
        %v1050 = vadd.f32 %v830, %v1049
        %v1051 = vpop.f32.mrf.mxu0
        %v1052 = vadd.f32 %v832, %v1051
        %1053 = vmatmul.bf16.gmra.mxu0 %v967
        %v1054 = vpop.f32.mrf.mxu0
        %v1055 = vadd.f32 %v835, %v1054
        %v1056 = vpop.f32.mrf.mxu0
        %v1057 = vadd.f32 %v837, %v1056
        %1058 = vmatmul.bf16.gmra.mxu0 %v970
        %v1059 = vpop.f32.mrf.mxu0
        %v1060 = vadd.f32 %v840, %v1059
        %v1061 = vpop.f32.mrf.mxu0
        %v1062 = vadd.f32 %v842, %v1061
        %1063 = vdwg.mxu0
        %v1064 = vld [vmem:[%s215] sm:$0xe]
        %v1065 = vld [vmem:[%s215 + $0xc] sm:$0xe]
        %v1066 = vld [vmem:[%s215 + $0x18] sm:$0xe]
        %v1067 = vld [vmem:[%s215 + $0x24] sm:$0xe]
        %v1068 = vld [vmem:[%s215 + $0x30] sm:$0xe]
        %v1069 = vld [vmem:[%s215 + $0x3c] sm:$0xe]
        %v1070 = vld [vmem:[%s215 + $0x48] sm:$0xe]
        %v1071 = vld [vmem:[%s215 + $0x54] sm:$0xe]
        %v1072 = vld [vmem:[%s215 + $0x60] sm:$0xe]
        %v1073 = vld [vmem:[%s215 + $0x6c] sm:$0xe]
        %v1074 = vld [vmem:[%s215 + $0x78] sm:$0xe]
        %v1075 = vld [vmem:[%s215 + $0x84] sm:$0xe]
        %v1076 = vld [vmem:[%s215 + $0x90] sm:$0xe]
        %v1077 = vld [vmem:[%s215 + $0x9c] sm:$0xe]
        %v1078 = vld [vmem:[%s215 + $0xa8] sm:$0xe]
        %v1079 = vld [vmem:[%s215 + $0xb4] sm:$0xe]
        %vm1112 = vcmask 1042432
        %vm1113 = vcmask 1046532
        %vm1114 = vmor %vm1112, %vm1113
        %v1115 = vrot.slane %v1064, 5
        %v1116 = vrot.slane %v1115, 4
        %v1117 = vrot.slane %v217, 5
        %v1118 = vsel %vm1114, %v1116, %v1117
        %v1119 = vrot.slane %v1117, 4
        %v1120 = vrot.slane %v249, 5
        %v1121 = vsel %vm1114, %v1119, %v1120
        %v1122 = vrot.slane %v1065, 5
        %v1123 = vrot.slane %v1122, 4
        %v1124 = vrot.slane %v219, 5
        %v1125 = vsel %vm1114, %v1123, %v1124
        %v1126 = vrot.slane %v1124, 4
        %v1127 = vrot.slane %v250, 5
        %v1128 = vsel %vm1114, %v1126, %v1127
        %v1129 = vrot.slane %v1066, 5
        %v1130 = vrot.slane %v1129, 4
        %v1131 = vrot.slane %v221, 5
        %v1132 = vsel %vm1114, %v1130, %v1131
        %v1133 = vrot.slane %v1131, 4
        %v1134 = vrot.slane %v251, 5
        %v1135 = vsel %vm1114, %v1133, %v1134
        %v1136 = vrot.slane %v1067, 5
        %v1137 = vrot.slane %v1136, 4
        %v1138 = vrot.slane %v223, 5
        %v1139 = vsel %vm1114, %v1137, %v1138
        %v1140 = vrot.slane %v1138, 4
        %v1141 = vrot.slane %v252, 5
        %v1142 = vsel %vm1114, %v1140, %v1141
        %v1143 = vrot.slane %v1068, 5
        %v1144 = vrot.slane %v1143, 4
        %v1145 = vrot.slane %v225, 5
        %v1146 = vsel %vm1114, %v1144, %v1145
        %v1147 = vrot.slane %v1145, 4
        %v1148 = vrot.slane %v253, 5
        %v1149 = vsel %vm1114, %v1147, %v1148
        %v1150 = vrot.slane %v1069, 5
        %v1151 = vrot.slane %v1150, 4
        %v1152 = vrot.slane %v227, 5
        %v1153 = vsel %vm1114, %v1151, %v1152
        %v1154 = vrot.slane %v1152, 4
        %v1155 = vrot.slane %v254, 5
        %v1156 = vsel %vm1114, %v1154, %v1155
        %v1157 = vrot.slane %v1070, 5
        %v1158 = vrot.slane %v1157, 4
        %v1159 = vrot.slane %v229, 5
        %v1160 = vsel %vm1114, %v1158, %v1159
        %v1161 = vrot.slane %v1159, 4
        %v1162 = vrot.slane %v255, 5
        %v1163 = vsel %vm1114, %v1161, %v1162
        %v1164 = vrot.slane %v1071, 5
        %v1165 = vrot.slane %v1164, 4
        %v1166 = vrot.slane %v231, 5
        %v1167 = vsel %vm1114, %v1165, %v1166
        %v1168 = vrot.slane %v1166, 4
        %v1169 = vrot.slane %v256, 5
        %v1170 = vsel %vm1114, %v1168, %v1169
        %v1171 = vrot.slane %v1072, 5
        %v1172 = vrot.slane %v1171, 4
        %v1173 = vrot.slane %v233, 5
        %v1174 = vsel %vm1114, %v1172, %v1173
        %v1175 = vrot.slane %v1173, 4
        %v1176 = vrot.slane %v257, 5
        %v1177 = vsel %vm1114, %v1175, %v1176
        %v1178 = vrot.slane %v1073, 5
        %v1179 = vrot.slane %v1178, 4
        %v1180 = vrot.slane %v235, 5
        %v1181 = vsel %vm1114, %v1179, %v1180
        %v1182 = vrot.slane %v1180, 4
        %v1183 = vrot.slane %v258, 5
        %v1184 = vsel %vm1114, %v1182, %v1183
        %v1185 = vrot.slane %v1074, 5
        %v1186 = vrot.slane %v1185, 4
        %v1187 = vrot.slane %v237, 5
        %v1188 = vsel %vm1114, %v1186, %v1187
        %v1189 = vrot.slane %v1187, 4
        %v1190 = vrot.slane %v259, 5
        %v1191 = vsel %vm1114, %v1189, %v1190
        %v1192 = vrot.slane %v1075, 5
        %v1193 = vrot.slane %v1192, 4
        %v1194 = vrot.slane %v239, 5
        %v1195 = vsel %vm1114, %v1193, %v1194
        %v1196 = vrot.slane %v1194, 4
        %v1197 = vrot.slane %v260, 5
        %v1198 = vsel %vm1114, %v1196, %v1197
        %v1199 = vrot.slane %v1076, 5
        %v1200 = vrot.slane %v1199, 4
        %v1201 = vrot.slane %v241, 5
        %v1202 = vsel %vm1114, %v1200, %v1201
        %v1203 = vrot.slane %v1201, 4
        %v1204 = vrot.slane %v261, 5
        %v1205 = vsel %vm1114, %v1203, %v1204
        %v1206 = vrot.slane %v1077, 5
        %v1207 = vrot.slane %v1206, 4
        %v1208 = vrot.slane %v243, 5
        %v1209 = vsel %vm1114, %v1207, %v1208
        %v1210 = vrot.slane %v1208, 4
        %v1211 = vrot.slane %v262, 5
        %v1212 = vsel %vm1114, %v1210, %v1211
        %v1213 = vrot.slane %v1078, 5
        %v1214 = vrot.slane %v1213, 4
        %v1215 = vrot.slane %v245, 5
        %v1216 = vsel %vm1114, %v1214, %v1215
        %v1217 = vrot.slane %v1215, 4
        %v1218 = vrot.slane %v263, 5
        %v1219 = vsel %vm1114, %v1217, %v1218
        %v1220 = vrot.slane %v1079, 5
        %v1221 = vrot.slane %v1220, 4
        %v1222 = vrot.slane %v247, 5
        %v1223 = vsel %vm1114, %v1221, %v1222
        %v1224 = vrot.slane %v1222, 4
        %v1225 = vrot.slane %v264, 5
        %v1226 = vsel %vm1114, %v1224, %v1225
        %s1227 = scalar_lea.vmem %s1, 4
        %v1228 = vld [vmem:[%s1227] sm:$0x3]
        %v1229 = vunpack.c.l.b16 %v1118
        %v1230 = vunpack.c.l.b16 %v1121
        %v1231 = vunpack.c.l.b16 %v1125
        %v1232 = vunpack.c.l.b16 %v1128
        %v1233 = vunpack.c.l.b16 %v1132
        %v1234 = vunpack.c.l.b16 %v1135
        %v1235 = vunpack.c.l.b16 %v1139
        %v1236 = vunpack.c.l.b16 %v1142
        %v1237 = vunpack.c.l.b16 %v1146
        %v1238 = vunpack.c.l.b16 %v1149
        %v1239 = vunpack.c.l.b16 %v1153
        %v1240 = vunpack.c.l.b16 %v1156
        %v1241 = vunpack.c.l.b16 %v1160
        %v1242 = vunpack.c.l.b16 %v1163
        %v1243 = vunpack.c.l.b16 %v1167
        %v1244 = vunpack.c.l.b16 %v1170
        %v1245 = vunpack.c.l.b16 %v1174
        %v1246 = vunpack.c.l.b16 %v1177
        %v1247 = vunpack.c.l.b16 %v1181
        %v1248 = vunpack.c.l.b16 %v1184
        %v1249 = vunpack.c.l.b16 %v1188
        %v1250 = vunpack.c.l.b16 %v1191
        %v1251 = vunpack.c.l.b16 %v1195
        %v1252 = vunpack.c.l.b16 %v1198
        %v1253 = vunpack.c.l.b16 %v1202
        %v1254 = vunpack.c.l.b16 %v1205
        %v1255 = vunpack.c.l.b16 %v1209
        %v1256 = vunpack.c.l.b16 %v1212
        %v1257 = vunpack.c.l.b16 %v1216
        %v1258 = vunpack.c.l.b16 %v1219
        %v1259 = vunpack.c.l.b16 %v1223
        %v1260 = vunpack.c.l.b16 %v1226
        %v1261 = vpack.c.b16 %v1230, %v1229
        %v1262 = vpack.c.b16 %v1232, %v1231
        %v1263 = vpack.c.b16 %v1234, %v1233
        %v1264 = vpack.c.b16 %v1236, %v1235
        %v1265 = vpack.c.b16 %v1238, %v1237
        %v1266 = vpack.c.b16 %v1240, %v1239
        %v1267 = vpack.c.b16 %v1242, %v1241
        %v1268 = vpack.c.b16 %v1244, %v1243
        %v1269 = vpack.c.b16 %v1246, %v1245
        %v1270 = vpack.c.b16 %v1248, %v1247
        %v1271 = vpack.c.b16 %v1250, %v1249
        %v1272 = vpack.c.b16 %v1252, %v1251
        %v1273 = vpack.c.b16 %v1254, %v1253
        %v1274 = vpack.c.b16 %v1256, %v1255
        %v1275 = vpack.c.b16 %v1258, %v1257
        %v1276 = vpack.c.b16 %v1260, %v1259
        %v1278 = vsel %vm702, %v1261, 0
        %v1281 = vsel %vm702, %v1262, 0
        %v1284 = vsel %vm702, %v1263, 0
        %v1287 = vsel %vm702, %v1264, 0
        %v1290 = vsel %vm702, %v1265, 0
        %v1293 = vsel %vm702, %v1266, 0
        %v1296 = vsel %vm702, %v1267, 0
        %v1299 = vsel %vm702, %v1268, 0
        %v1302 = vsel %vm702, %v1269, 0
        %v1305 = vsel %vm702, %v1270, 0
        %v1308 = vsel %vm702, %v1271, 0
        %v1311 = vsel %vm702, %v1272, 0
        %v1314 = vsel %vm702, %v1273, 0
        %v1317 = vsel %vm702, %v1274, 0
        %v1320 = vsel %vm702, %v1275, 0
        %v1323 = vsel %vm702, %v1276, 0
        %v1326 = vsel %vm751, %v1228, 0
        %1328 = vmatpush.bf16.msra.mxu0 0
        %1329 = vmatpush.bf16.msra.mxu0 0
        %1330 = vmatpush.bf16.msra.mxu0 0
        %1331 = vmatpush.bf16.msra.mxu0 0
        %1332 = vmatpush.bf16.msra.mxu0 0
        %1333 = vmatpush.bf16.msra.mxu0 0
        %1334 = vmatpush.bf16.msra.mxu0 0
        %1335 = vmatpush.bf16.msra.mxu0 %v1326
        %1336 = vmatmul.bf16.gmra.mxu0 %v1278
        %v1337 = vpop.f32.mrf.mxu0
        %v1338 = vadd.f32 0.0, %v1337
        %v1339 = vpop.f32.mrf.mxu0
        %v1340 = vadd.f32 0.0, %v1339
        %1341 = vmatmul.bf16.gmra.mxu0 %v1281
        %v1342 = vpop.f32.mrf.mxu0
        %v1343 = vadd.f32 0.0, %v1342
        %v1344 = vpop.f32.mrf.mxu0
        %v1345 = vadd.f32 0.0, %v1344
        %1346 = vmatmul.bf16.gmra.mxu0 %v1284
        %v1347 = vpop.f32.mrf.mxu0
        %v1348 = vadd.f32 0.0, %v1347
        %v1349 = vpop.f32.mrf.mxu0
        %v1350 = vadd.f32 0.0, %v1349
        %1351 = vmatmul.bf16.gmra.mxu0 %v1287
        %v1352 = vpop.f32.mrf.mxu0
        %v1353 = vadd.f32 0.0, %v1352
        %v1354 = vpop.f32.mrf.mxu0
        %v1355 = vadd.f32 0.0, %v1354
        %1356 = vmatmul.bf16.gmra.mxu0 %v1290
        %v1357 = vpop.f32.mrf.mxu0
        %v1358 = vadd.f32 0.0, %v1357
        %v1359 = vpop.f32.mrf.mxu0
        %v1360 = vadd.f32 0.0, %v1359
        %1361 = vmatmul.bf16.gmra.mxu0 %v1293
        %v1362 = vpop.f32.mrf.mxu0
        %v1363 = vadd.f32 0.0, %v1362
        %v1364 = vpop.f32.mrf.mxu0
        %v1365 = vadd.f32 0.0, %v1364
        %1366 = vmatmul.bf16.gmra.mxu0 %v1296
        %v1367 = vpop.f32.mrf.mxu0
        %v1368 = vadd.f32 0.0, %v1367
        %v1369 = vpop.f32.mrf.mxu0
        %v1370 = vadd.f32 0.0, %v1369
        %1371 = vmatmul.bf16.gmra.mxu0 %v1299
        %v1372 = vpop.f32.mrf.mxu0
        %v1373 = vadd.f32 0.0, %v1372
        %v1374 = vpop.f32.mrf.mxu0
        %v1375 = vadd.f32 0.0, %v1374
        %1376 = vmatmul.bf16.gmra.mxu0 %v1302
        %v1377 = vpop.f32.mrf.mxu0
        %v1378 = vadd.f32 0.0, %v1377
        %v1379 = vpop.f32.mrf.mxu0
        %v1380 = vadd.f32 0.0, %v1379
        %1381 = vmatmul.bf16.gmra.mxu0 %v1305
        %v1382 = vpop.f32.mrf.mxu0
        %v1383 = vadd.f32 0.0, %v1382
        %v1384 = vpop.f32.mrf.mxu0
        %v1385 = vadd.f32 0.0, %v1384
        %1386 = vmatmul.bf16.gmra.mxu0 %v1308
        %v1387 = vpop.f32.mrf.mxu0
        %v1388 = vadd.f32 0.0, %v1387
        %v1389 = vpop.f32.mrf.mxu0
        %v1390 = vadd.f32 0.0, %v1389
        %1391 = vmatmul.bf16.gmra.mxu0 %v1311
        %v1392 = vpop.f32.mrf.mxu0
        %v1393 = vadd.f32 0.0, %v1392
        %v1394 = vpop.f32.mrf.mxu0
        %v1395 = vadd.f32 0.0, %v1394
        %1396 = vmatmul.bf16.gmra.mxu0 %v1314
        %v1397 = vpop.f32.mrf.mxu0
        %v1398 = vadd.f32 0.0, %v1397
        %v1399 = vpop.f32.mrf.mxu0
        %v1400 = vadd.f32 0.0, %v1399
        %1401 = vmatmul.bf16.gmra.mxu0 %v1317
        %v1402 = vpop.f32.mrf.mxu0
        %v1403 = vadd.f32 0.0, %v1402
        %v1404 = vpop.f32.mrf.mxu0
        %v1405 = vadd.f32 0.0, %v1404
        %1406 = vmatmul.bf16.gmra.mxu0 %v1320
        %v1407 = vpop.f32.mrf.mxu0
        %v1408 = vadd.f32 0.0, %v1407
        %v1409 = vpop.f32.mrf.mxu0
        %v1410 = vadd.f32 0.0, %v1409
        %1411 = vmatmul.bf16.gmra.mxu0 %v1323
        %v1412 = vpop.f32.mrf.mxu0
        %v1413 = vadd.f32 0.0, %v1412
        %v1414 = vpop.f32.mrf.mxu0
        %v1415 = vadd.f32 0.0, %v1414
        %1416 = vdwg.mxu0
        %v1417 = vadd.f32 %v985, %v1338
        %v1418 = vadd.f32 %v987, %v1340
        %v1419 = vadd.f32 %v990, %v1343
        %v1420 = vadd.f32 %v992, %v1345
        %v1421 = vadd.f32 %v995, %v1348
        %v1422 = vadd.f32 %v997, %v1350
        %v1423 = vadd.f32 %v1000, %v1353
        %v1424 = vadd.f32 %v1002, %v1355
        %v1425 = vadd.f32 %v1005, %v1358
        %v1426 = vadd.f32 %v1007, %v1360
        %v1427 = vadd.f32 %v1010, %v1363
        %v1428 = vadd.f32 %v1012, %v1365
        %v1429 = vadd.f32 %v1015, %v1368
        %v1430 = vadd.f32 %v1017, %v1370
        %v1431 = vadd.f32 %v1020, %v1373
        %v1432 = vadd.f32 %v1022, %v1375
        %v1433 = vadd.f32 %v1025, %v1378
        %v1434 = vadd.f32 %v1027, %v1380
        %v1435 = vadd.f32 %v1030, %v1383
        %v1436 = vadd.f32 %v1032, %v1385
        %v1437 = vadd.f32 %v1035, %v1388
        %v1438 = vadd.f32 %v1037, %v1390
        %v1439 = vadd.f32 %v1040, %v1393
        %v1440 = vadd.f32 %v1042, %v1395
        %v1441 = vadd.f32 %v1045, %v1398
        %v1442 = vadd.f32 %v1047, %v1400
        %v1443 = vadd.f32 %v1050, %v1403
        %v1444 = vadd.f32 %v1052, %v1405
        %v1445 = vadd.f32 %v1055, %v1408
        %v1446 = vadd.f32 %v1057, %v1410
        %v1447 = vadd.f32 %v1060, %v1413
        %v1448 = vadd.f32 %v1062, %v1415
        %s1449 = sadd.s32 %s212, 1
        %s1450 = smul.u32 %s1449, 3
        %s1451 = smul.addr %s1450, 4
        %s1452 = scalar_lea.vmem %s209, %s1451
        %v1453 = vld [vmem:[%s1452] sm:$0xf]
        %v1454 = vld [vmem:[%s1452 + $0x4] sm:$0xf]
        %v1455 = vld [vmem:[%s1452 + $0xc] sm:$0xf]
        %v1456 = vld [vmem:[%s1452 + $0x10] sm:$0xf]
        %v1457 = vld [vmem:[%s1452 + $0x18] sm:$0xf]
        %v1458 = vld [vmem:[%s1452 + $0x1c] sm:$0xf]
        %v1459 = vld [vmem:[%s1452 + $0x24] sm:$0xf]
        %v1460 = vld [vmem:[%s1452 + $0x28] sm:$0xf]
        %v1461 = vld [vmem:[%s1452 + $0x30] sm:$0xf]
        %v1462 = vld [vmem:[%s1452 + $0x34] sm:$0xf]
        %v1463 = vld [vmem:[%s1452 + $0x3c] sm:$0xf]
        %v1464 = vld [vmem:[%s1452 + $0x40] sm:$0xf]
        %v1465 = vld [vmem:[%s1452 + $0x48] sm:$0xf]
        %v1466 = vld [vmem:[%s1452 + $0x4c] sm:$0xf]
        %v1467 = vld [vmem:[%s1452 + $0x54] sm:$0xf]
        %v1468 = vld [vmem:[%s1452 + $0x58] sm:$0xf]
        %v1469 = vld [vmem:[%s1452 + $0x60] sm:$0xf]
        %v1470 = vld [vmem:[%s1452 + $0x64] sm:$0xf]
        %v1471 = vld [vmem:[%s1452 + $0x6c] sm:$0xf]
        %v1472 = vld [vmem:[%s1452 + $0x70] sm:$0xf]
        %v1473 = vld [vmem:[%s1452 + $0x78] sm:$0xf]
        %v1474 = vld [vmem:[%s1452 + $0x7c] sm:$0xf]
        %v1475 = vld [vmem:[%s1452 + $0x84] sm:$0xf]
        %v1476 = vld [vmem:[%s1452 + $0x88] sm:$0xf]
        %v1477 = vld [vmem:[%s1452 + $0x90] sm:$0xf]
        %v1478 = vld [vmem:[%s1452 + $0x94] sm:$0xf]
        %v1479 = vld [vmem:[%s1452 + $0x9c] sm:$0xf]
        %v1480 = vld [vmem:[%s1452 + $0xa0] sm:$0xf]
        %v1481 = vld [vmem:[%s1452 + $0xa8] sm:$0xf]
        %v1482 = vld [vmem:[%s1452 + $0xac] sm:$0xf]
        %v1483 = vld [vmem:[%s1452 + $0xb4] sm:$0xf]
        %v1484 = vld [vmem:[%s1452 + $0xb8] sm:$0xf]
        %s1485 = scalar_lea.vmem %s1, 6
        %v1486 = vld [vmem:[%s1485] sm:$0x3]
        %v1519 = vunpack.c.l.b16 %v1453
        %v1520 = vunpack.c.l.b16 %v1454
        %v1521 = vunpack.c.l.b16 %v1455
        %v1522 = vunpack.c.l.b16 %v1456
        %v1523 = vunpack.c.l.b16 %v1457
        %v1524 = vunpack.c.l.b16 %v1458
        %v1525 = vunpack.c.l.b16 %v1459
        %v1526 = vunpack.c.l.b16 %v1460
        %v1527 = vunpack.c.l.b16 %v1461
        %v1528 = vunpack.c.l.b16 %v1462
        %v1529 = vunpack.c.l.b16 %v1463
        %v1530 = vunpack.c.l.b16 %v1464
        %v1531 = vunpack.c.l.b16 %v1465
        %v1532 = vunpack.c.l.b16 %v1466
        %v1533 = vunpack.c.l.b16 %v1467
        %v1534 = vunpack.c.l.b16 %v1468
        %v1535 = vunpack.c.l.b16 %v1469
        %v1536 = vunpack.c.l.b16 %v1470
        %v1537 = vunpack.c.l.b16 %v1471
        %v1538 = vunpack.c.l.b16 %v1472
        %v1539 = vunpack.c.l.b16 %v1473
        %v1540 = vunpack.c.l.b16 %v1474
        %v1541 = vunpack.c.l.b16 %v1475
        %v1542 = vunpack.c.l.b16 %v1476
        %v1543 = vunpack.c.l.b16 %v1477
        %v1544 = vunpack.c.l.b16 %v1478
        %v1545 = vunpack.c.l.b16 %v1479
        %v1546 = vunpack.c.l.b16 %v1480
        %v1547 = vunpack.c.l.b16 %v1481
        %v1548 = vunpack.c.l.b16 %v1482
        %v1549 = vunpack.c.l.b16 %v1483
        %v1550 = vunpack.c.l.b16 %v1484
        %v1551 = vpack.c.b16 %v1520, %v1519
        %v1552 = vpack.c.b16 %v1522, %v1521
        %v1553 = vpack.c.b16 %v1524, %v1523
        %v1554 = vpack.c.b16 %v1526, %v1525
        %v1555 = vpack.c.b16 %v1528, %v1527
        %v1556 = vpack.c.b16 %v1530, %v1529
        %v1557 = vpack.c.b16 %v1532, %v1531
        %v1558 = vpack.c.b16 %v1534, %v1533
        %v1559 = vpack.c.b16 %v1536, %v1535
        %v1560 = vpack.c.b16 %v1538, %v1537
        %v1561 = vpack.c.b16 %v1540, %v1539
        %v1562 = vpack.c.b16 %v1542, %v1541
        %v1563 = vpack.c.b16 %v1544, %v1543
        %v1564 = vpack.c.b16 %v1546, %v1545
        %v1565 = vpack.c.b16 %v1548, %v1547
        %v1566 = vpack.c.b16 %v1550, %v1549
        %v1568 = vsel %vm702, %v1551, 0
        %v1571 = vsel %vm702, %v1552, 0
        %v1574 = vsel %vm702, %v1553, 0
        %v1577 = vsel %vm702, %v1554, 0
        %v1580 = vsel %vm702, %v1555, 0
        %v1583 = vsel %vm702, %v1556, 0
        %v1586 = vsel %vm702, %v1557, 0
        %v1589 = vsel %vm702, %v1558, 0
        %v1592 = vsel %vm702, %v1559, 0
        %v1595 = vsel %vm702, %v1560, 0
        %v1598 = vsel %vm702, %v1561, 0
        %v1601 = vsel %vm702, %v1562, 0
        %v1604 = vsel %vm702, %v1563, 0
        %v1607 = vsel %vm702, %v1564, 0
        %v1610 = vsel %vm702, %v1565, 0
        %v1613 = vsel %vm702, %v1566, 0
        %v1616 = vsel %vm751, %v1486, 0
        %1618 = vmatpush.bf16.msra.mxu0 0
        %1619 = vmatpush.bf16.msra.mxu0 0
        %1620 = vmatpush.bf16.msra.mxu0 0
        %1621 = vmatpush.bf16.msra.mxu0 0
        %1622 = vmatpush.bf16.msra.mxu0 0
        %1623 = vmatpush.bf16.msra.mxu0 0
        %1624 = vmatpush.bf16.msra.mxu0 0
        %1625 = vmatpush.bf16.msra.mxu0 %v1616
        %1626 = vmatmul.bf16.gmra.mxu0 %v1568
        %v1627 = vpop.f32.mrf.mxu0
        %v1628 = vadd.f32 0.0, %v1627
        %v1629 = vpop.f32.mrf.mxu0
        %v1630 = vadd.f32 0.0, %v1629
        %1631 = vmatmul.bf16.gmra.mxu0 %v1571
        %v1632 = vpop.f32.mrf.mxu0
        %v1633 = vadd.f32 0.0, %v1632
        %v1634 = vpop.f32.mrf.mxu0
        %v1635 = vadd.f32 0.0, %v1634
        %1636 = vmatmul.bf16.gmra.mxu0 %v1574
        %v1637 = vpop.f32.mrf.mxu0
        %v1638 = vadd.f32 0.0, %v1637
        %v1639 = vpop.f32.mrf.mxu0
        %v1640 = vadd.f32 0.0, %v1639
        %1641 = vmatmul.bf16.gmra.mxu0 %v1577
        %v1642 = vpop.f32.mrf.mxu0
        %v1643 = vadd.f32 0.0, %v1642
        %v1644 = vpop.f32.mrf.mxu0
        %v1645 = vadd.f32 0.0, %v1644
        %1646 = vmatmul.bf16.gmra.mxu0 %v1580
        %v1647 = vpop.f32.mrf.mxu0
        %v1648 = vadd.f32 0.0, %v1647
        %v1649 = vpop.f32.mrf.mxu0
        %v1650 = vadd.f32 0.0, %v1649
        %1651 = vmatmul.bf16.gmra.mxu0 %v1583
        %v1652 = vpop.f32.mrf.mxu0
        %v1653 = vadd.f32 0.0, %v1652
        %v1654 = vpop.f32.mrf.mxu0
        %v1655 = vadd.f32 0.0, %v1654
        %1656 = vmatmul.bf16.gmra.mxu0 %v1586
        %v1657 = vpop.f32.mrf.mxu0
        %v1658 = vadd.f32 0.0, %v1657
        %v1659 = vpop.f32.mrf.mxu0
        %v1660 = vadd.f32 0.0, %v1659
        %1661 = vmatmul.bf16.gmra.mxu0 %v1589
        %v1662 = vpop.f32.mrf.mxu0
        %v1663 = vadd.f32 0.0, %v1662
        %v1664 = vpop.f32.mrf.mxu0
        %v1665 = vadd.f32 0.0, %v1664
        %1666 = vmatmul.bf16.gmra.mxu0 %v1592
        %v1667 = vpop.f32.mrf.mxu0
        %v1668 = vadd.f32 0.0, %v1667
        %v1669 = vpop.f32.mrf.mxu0
        %v1670 = vadd.f32 0.0, %v1669
        %1671 = vmatmul.bf16.gmra.mxu0 %v1595
        %v1672 = vpop.f32.mrf.mxu0
        %v1673 = vadd.f32 0.0, %v1672
        %v1674 = vpop.f32.mrf.mxu0
        %v1675 = vadd.f32 0.0, %v1674
        %1676 = vmatmul.bf16.gmra.mxu0 %v1598
        %v1677 = vpop.f32.mrf.mxu0
        %v1678 = vadd.f32 0.0, %v1677
        %v1679 = vpop.f32.mrf.mxu0
        %v1680 = vadd.f32 0.0, %v1679
        %1681 = vmatmul.bf16.gmra.mxu0 %v1601
        %v1682 = vpop.f32.mrf.mxu0
        %v1683 = vadd.f32 0.0, %v1682
        %v1684 = vpop.f32.mrf.mxu0
        %v1685 = vadd.f32 0.0, %v1684
        %1686 = vmatmul.bf16.gmra.mxu0 %v1604
        %v1687 = vpop.f32.mrf.mxu0
        %v1688 = vadd.f32 0.0, %v1687
        %v1689 = vpop.f32.mrf.mxu0
        %v1690 = vadd.f32 0.0, %v1689
        %1691 = vmatmul.bf16.gmra.mxu0 %v1607
        %v1692 = vpop.f32.mrf.mxu0
        %v1693 = vadd.f32 0.0, %v1692
        %v1694 = vpop.f32.mrf.mxu0
        %v1695 = vadd.f32 0.0, %v1694
        %1696 = vmatmul.bf16.gmra.mxu0 %v1610
        %v1697 = vpop.f32.mrf.mxu0
        %v1698 = vadd.f32 0.0, %v1697
        %v1699 = vpop.f32.mrf.mxu0
        %v1700 = vadd.f32 0.0, %v1699
        %1701 = vmatmul.bf16.gmra.mxu0 %v1613
        %v1702 = vpop.f32.mrf.mxu0
        %v1703 = vadd.f32 0.0, %v1702
        %v1704 = vpop.f32.mrf.mxu0
        %v1705 = vadd.f32 0.0, %v1704
        %1706 = vdwg.mxu0
        %v1707 = vadd.f32 %v1417, %v1628
        %v1708 = vadd.f32 %v1418, %v1630
        %v1709 = vadd.f32 %v1419, %v1633
        %v1710 = vadd.f32 %v1420, %v1635
        %v1711 = vadd.f32 %v1421, %v1638
        %v1712 = vadd.f32 %v1422, %v1640
        %v1713 = vadd.f32 %v1423, %v1643
        %v1714 = vadd.f32 %v1424, %v1645
        %v1715 = vadd.f32 %v1425, %v1648
        %v1716 = vadd.f32 %v1426, %v1650
        %v1717 = vadd.f32 %v1427, %v1653
        %v1718 = vadd.f32 %v1428, %v1655
        %v1719 = vadd.f32 %v1429, %v1658
        %v1720 = vadd.f32 %v1430, %v1660
        %v1721 = vadd.f32 %v1431, %v1663
        %v1722 = vadd.f32 %v1432, %v1665
        %v1723 = vadd.f32 %v1433, %v1668
        %v1724 = vadd.f32 %v1434, %v1670
        %v1725 = vadd.f32 %v1435, %v1673
        %v1726 = vadd.f32 %v1436, %v1675
        %v1727 = vadd.f32 %v1437, %v1678
        %v1728 = vadd.f32 %v1438, %v1680
        %v1729 = vadd.f32 %v1439, %v1683
        %v1730 = vadd.f32 %v1440, %v1685
        %v1731 = vadd.f32 %v1441, %v1688
        %v1732 = vadd.f32 %v1442, %v1690
        %v1733 = vadd.f32 %v1443, %v1693
        %v1734 = vadd.f32 %v1444, %v1695
        %v1735 = vadd.f32 %v1445, %v1698
        %v1736 = vadd.f32 %v1446, %v1700
        %v1737 = vadd.f32 %v1447, %v1703
        %v1738 = vadd.f32 %v1448, %v1705
        %v1739 = vld [vmem:[%s1452] sm:$0xf]
        %v1740 = vld [vmem:[%s1452 + $0x4] sm:$0xf]
        %v1741 = vld [vmem:[%s1452 + $0x8] sm:$0x1]
        %v1742 = vld [vmem:[%s1452 + $0xc] sm:$0xf]
        %v1743 = vld [vmem:[%s1452 + $0x10] sm:$0xf]
        %v1744 = vld [vmem:[%s1452 + $0x14] sm:$0x1]
        %v1745 = vld [vmem:[%s1452 + $0x18] sm:$0xf]
        %v1746 = vld [vmem:[%s1452 + $0x1c] sm:$0xf]
        %v1747 = vld [vmem:[%s1452 + $0x20] sm:$0x1]
        %v1748 = vld [vmem:[%s1452 + $0x24] sm:$0xf]
        %v1749 = vld [vmem:[%s1452 + $0x28] sm:$0xf]
        %v1750 = vld [vmem:[%s1452 + $0x2c] sm:$0x1]
        %v1751 = vld [vmem:[%s1452 + $0x30] sm:$0xf]
        %v1752 = vld [vmem:[%s1452 + $0x34] sm:$0xf]
        %v1753 = vld [vmem:[%s1452 + $0x38] sm:$0x1]
        %v1754 = vld [vmem:[%s1452 + $0x3c] sm:$0xf]
        %v1755 = vld [vmem:[%s1452 + $0x40] sm:$0xf]
        %v1756 = vld [vmem:[%s1452 + $0x44] sm:$0x1]
        %v1757 = vld [vmem:[%s1452 + $0x48] sm:$0xf]
        %v1758 = vld [vmem:[%s1452 + $0x4c] sm:$0xf]
        %v1759 = vld [vmem:[%s1452 + $0x50] sm:$0x1]
        %v1760 = vld [vmem:[%s1452 + $0x54] sm:$0xf]
        %v1761 = vld [vmem:[%s1452 + $0x58] sm:$0xf]
        %v1762 = vld [vmem:[%s1452 + $0x5c] sm:$0x1]
        %v1763 = vld [vmem:[%s1452 + $0x60] sm:$0xf]
        %v1764 = vld [vmem:[%s1452 + $0x64] sm:$0xf]
        %v1765 = vld [vmem:[%s1452 + $0x68] sm:$0x1]
        %v1766 = vld [vmem:[%s1452 + $0x6c] sm:$0xf]
        %v1767 = vld [vmem:[%s1452 + $0x70] sm:$0xf]
        %v1768 = vld [vmem:[%s1452 + $0x74] sm:$0x1]
        %v1769 = vld [vmem:[%s1452 + $0x78] sm:$0xf]
        %v1770 = vld [vmem:[%s1452 + $0x7c] sm:$0xf]
        %v1771 = vld [vmem:[%s1452 + $0x80] sm:$0x1]
        %v1772 = vld [vmem:[%s1452 + $0x84] sm:$0xf]
        %v1773 = vld [vmem:[%s1452 + $0x88] sm:$0xf]
        %v1774 = vld [vmem:[%s1452 + $0x8c] sm:$0x1]
        %v1775 = vld [vmem:[%s1452 + $0x90] sm:$0xf]
        %v1776 = vld [vmem:[%s1452 + $0x94] sm:$0xf]
        %v1777 = vld [vmem:[%s1452 + $0x98] sm:$0x1]
        %v1778 = vld [vmem:[%s1452 + $0x9c] sm:$0xf]
        %v1779 = vld [vmem:[%s1452 + $0xa0] sm:$0xf]
        %v1780 = vld [vmem:[%s1452 + $0xa4] sm:$0x1]
        %v1781 = vld [vmem:[%s1452 + $0xa8] sm:$0xf]
        %v1782 = vld [vmem:[%s1452 + $0xac] sm:$0xf]
        %v1783 = vld [vmem:[%s1452 + $0xb0] sm:$0x1]
        %v1784 = vld [vmem:[%s1452 + $0xb4] sm:$0xf]
        %v1785 = vld [vmem:[%s1452 + $0xb8] sm:$0xf]
        %v1786 = vld [vmem:[%s1452 + $0xbc] sm:$0x1]
        %v1788 = vshrl.u32 %v1739, 16
        %v1790 = vrot.slane %v1788, 4
        %v1791 = vshll.u32 %v1739, 16
        %v1793 = vrot.slane %v1791, 5
        %v1794 = vor.u32 %v1790, %v1793
        %v1795 = vrot.slane %v1794, 4
        %v1797 = vshll.u32 %v1740, 16
        %v1799 = vrot.slane %v1797, 5
        %v1800 = vsel %vm267, %v1795, %v1799
        %v1801 = vshrl.u32 %v1740, 16
        %v1803 = vrot.slane %v1801, 4
        %v1804 = vor.u32 %v1803, %v1799
        %v1805 = vrot.slane %v1804, 4
        %v1807 = vshll.u32 %v1741, 16
        %v1809 = vrot.slane %v1807, 5
        %v1810 = vsel %vm267, %v1805, %v1809
        %v1812 = vshrl.u32 %v1742, 16
        %v1814 = vrot.slane %v1812, 4
        %v1815 = vshll.u32 %v1742, 16
        %v1817 = vrot.slane %v1815, 5
        %v1818 = vor.u32 %v1814, %v1817
        %v1819 = vrot.slane %v1818, 4
        %v1821 = vshll.u32 %v1743, 16
        %v1823 = vrot.slane %v1821, 5
        %v1824 = vsel %vm267, %v1819, %v1823
        %v1825 = vshrl.u32 %v1743, 16
        %v1827 = vrot.slane %v1825, 4
        %v1828 = vor.u32 %v1827, %v1823
        %v1829 = vrot.slane %v1828, 4
        %v1831 = vshll.u32 %v1744, 16
        %v1833 = vrot.slane %v1831, 5
        %v1834 = vsel %vm267, %v1829, %v1833
        %v1836 = vshrl.u32 %v1745, 16
        %v1838 = vrot.slane %v1836, 4
        %v1839 = vshll.u32 %v1745, 16
        %v1841 = vrot.slane %v1839, 5
        %v1842 = vor.u32 %v1838, %v1841
        %v1843 = vrot.slane %v1842, 4
        %v1845 = vshll.u32 %v1746, 16
        %v1847 = vrot.slane %v1845, 5
        %v1848 = vsel %vm267, %v1843, %v1847
        %v1849 = vshrl.u32 %v1746, 16
        %v1851 = vrot.slane %v1849, 4
        %v1852 = vor.u32 %v1851, %v1847
        %v1853 = vrot.slane %v1852, 4
        %v1855 = vshll.u32 %v1747, 16
        %v1857 = vrot.slane %v1855, 5
        %v1858 = vsel %vm267, %v1853, %v1857
        %v1860 = vshrl.u32 %v1748, 16
        %v1862 = vrot.slane %v1860, 4
        %v1863 = vshll.u32 %v1748, 16
        %v1865 = vrot.slane %v1863, 5
        %v1866 = vor.u32 %v1862, %v1865
        %v1867 = vrot.slane %v1866, 4
        %v1869 = vshll.u32 %v1749, 16
        %v1871 = vrot.slane %v1869, 5
        %v1872 = vsel %vm267, %v1867, %v1871
        %v1873 = vshrl.u32 %v1749, 16
        %v1875 = vrot.slane %v1873, 4
        %v1876 = vor.u32 %v1875, %v1871
        %v1877 = vrot.slane %v1876, 4
        %v1879 = vshll.u32 %v1750, 16
        %v1881 = vrot.slane %v1879, 5
        %v1882 = vsel %vm267, %v1877, %v1881
        %v1884 = vshrl.u32 %v1751, 16
        %v1886 = vrot.slane %v1884, 4
        %v1887 = vshll.u32 %v1751, 16
        %v1889 = vrot.slane %v1887, 5
        %v1890 = vor.u32 %v1886, %v1889
        %v1891 = vrot.slane %v1890, 4
        %v1893 = vshll.u32 %v1752, 16
        %v1895 = vrot.slane %v1893, 5
        %v1896 = vsel %vm267, %v1891, %v1895
        %v1897 = vshrl.u32 %v1752, 16
        %v1899 = vrot.slane %v1897, 4
        %v1900 = vor.u32 %v1899, %v1895
        %v1901 = vrot.slane %v1900, 4
        %v1903 = vshll.u32 %v1753, 16
        %v1905 = vrot.slane %v1903, 5
        %v1906 = vsel %vm267, %v1901, %v1905
        %v1908 = vshrl.u32 %v1754, 16
        %v1910 = vrot.slane %v1908, 4
        %v1911 = vshll.u32 %v1754, 16
        %v1913 = vrot.slane %v1911, 5
        %v1914 = vor.u32 %v1910, %v1913
        %v1915 = vrot.slane %v1914, 4
        %v1917 = vshll.u32 %v1755, 16
        %v1919 = vrot.slane %v1917, 5
        %v1920 = vsel %vm267, %v1915, %v1919
        %v1921 = vshrl.u32 %v1755, 16
        %v1923 = vrot.slane %v1921, 4
        %v1924 = vor.u32 %v1923, %v1919
        %v1925 = vrot.slane %v1924, 4
        %v1927 = vshll.u32 %v1756, 16
        %v1929 = vrot.slane %v1927, 5
        %v1930 = vsel %vm267, %v1925, %v1929
        %v1932 = vshrl.u32 %v1757, 16
        %v1934 = vrot.slane %v1932, 4
        %v1935 = vshll.u32 %v1757, 16
        %v1937 = vrot.slane %v1935, 5
        %v1938 = vor.u32 %v1934, %v1937
        %v1939 = vrot.slane %v1938, 4
        %v1941 = vshll.u32 %v1758, 16
        %v1943 = vrot.slane %v1941, 5
        %v1944 = vsel %vm267, %v1939, %v1943
        %v1945 = vshrl.u32 %v1758, 16
        %v1947 = vrot.slane %v1945, 4
        %v1948 = vor.u32 %v1947, %v1943
        %v1949 = vrot.slane %v1948, 4
        %v1951 = vshll.u32 %v1759, 16
        %v1953 = vrot.slane %v1951, 5
        %v1954 = vsel %vm267, %v1949, %v1953
        %v1956 = vshrl.u32 %v1760, 16
        %v1958 = vrot.slane %v1956, 4
        %v1959 = vshll.u32 %v1760, 16
        %v1961 = vrot.slane %v1959, 5
        %v1962 = vor.u32 %v1958, %v1961
        %v1963 = vrot.slane %v1962, 4
        %v1965 = vshll.u32 %v1761, 16
        %v1967 = vrot.slane %v1965, 5
        %v1968 = vsel %vm267, %v1963, %v1967
        %v1969 = vshrl.u32 %v1761, 16
        %v1971 = vrot.slane %v1969, 4
        %v1972 = vor.u32 %v1971, %v1967
        %v1973 = vrot.slane %v1972, 4
        %v1975 = vshll.u32 %v1762, 16
        %v1977 = vrot.slane %v1975, 5
        %v1978 = vsel %vm267, %v1973, %v1977
        %v1980 = vshrl.u32 %v1763, 16
        %v1982 = vrot.slane %v1980, 4
        %v1983 = vshll.u32 %v1763, 16
        %v1985 = vrot.slane %v1983, 5
        %v1986 = vor.u32 %v1982, %v1985
        %v1987 = vrot.slane %v1986, 4
        %v1989 = vshll.u32 %v1764, 16
        %v1991 = vrot.slane %v1989, 5
        %v1992 = vsel %vm267, %v1987, %v1991
        %v1993 = vshrl.u32 %v1764, 16
        %v1995 = vrot.slane %v1993, 4
        %v1996 = vor.u32 %v1995, %v1991
        %v1997 = vrot.slane %v1996, 4
        %v1999 = vshll.u32 %v1765, 16
        %v2001 = vrot.slane %v1999, 5
        %v2002 = vsel %vm267, %v1997, %v2001
        %v2004 = vshrl.u32 %v1766, 16
        %v2006 = vrot.slane %v2004, 4
        %v2007 = vshll.u32 %v1766, 16
        %v2009 = vrot.slane %v2007, 5
        %v2010 = vor.u32 %v2006, %v2009
        %v2011 = vrot.slane %v2010, 4
        %v2013 = vshll.u32 %v1767, 16
        %v2015 = vrot.slane %v2013, 5
        %v2016 = vsel %vm267, %v2011, %v2015
        %v2017 = vshrl.u32 %v1767, 16
        %v2019 = vrot.slane %v2017, 4
        %v2020 = vor.u32 %v2019, %v2015
        %v2021 = vrot.slane %v2020, 4
        %v2023 = vshll.u32 %v1768, 16
        %v2025 = vrot.slane %v2023, 5
        %v2026 = vsel %vm267, %v2021, %v2025
        %v2028 = vshrl.u32 %v1769, 16
        %v2030 = vrot.slane %v2028, 4
        %v2031 = vshll.u32 %v1769, 16
        %v2033 = vrot.slane %v2031, 5
        %v2034 = vor.u32 %v2030, %v2033
        %v2035 = vrot.slane %v2034, 4
        %v2037 = vshll.u32 %v1770, 16
        %v2039 = vrot.slane %v2037, 5
        %v2040 = vsel %vm267, %v2035, %v2039
        %v2041 = vshrl.u32 %v1770, 16
        %v2043 = vrot.slane %v2041, 4
        %v2044 = vor.u32 %v2043, %v2039
        %v2045 = vrot.slane %v2044, 4
        %v2047 = vshll.u32 %v1771, 16
        %v2049 = vrot.slane %v2047, 5
        %v2050 = vsel %vm267, %v2045, %v2049
        %v2052 = vshrl.u32 %v1772, 16
        %v2054 = vrot.slane %v2052, 4
        %v2055 = vshll.u32 %v1772, 16
        %v2057 = vrot.slane %v2055, 5
        %v2058 = vor.u32 %v2054, %v2057
        %v2059 = vrot.slane %v2058, 4
        %v2061 = vshll.u32 %v1773, 16
        %v2063 = vrot.slane %v2061, 5
        %v2064 = vsel %vm267, %v2059, %v2063
        %v2065 = vshrl.u32 %v1773, 16
        %v2067 = vrot.slane %v2065, 4
        %v2068 = vor.u32 %v2067, %v2063
        %v2069 = vrot.slane %v2068, 4
        %v2071 = vshll.u32 %v1774, 16
        %v2073 = vrot.slane %v2071, 5
        %v2074 = vsel %vm267, %v2069, %v2073
        %v2076 = vshrl.u32 %v1775, 16
        %v2078 = vrot.slane %v2076, 4
        %v2079 = vshll.u32 %v1775, 16
        %v2081 = vrot.slane %v2079, 5
        %v2082 = vor.u32 %v2078, %v2081
        %v2083 = vrot.slane %v2082, 4
        %v2085 = vshll.u32 %v1776, 16
        %v2087 = vrot.slane %v2085, 5
        %v2088 = vsel %vm267, %v2083, %v2087
        %v2089 = vshrl.u32 %v1776, 16
        %v2091 = vrot.slane %v2089, 4
        %v2092 = vor.u32 %v2091, %v2087
        %v2093 = vrot.slane %v2092, 4
        %v2095 = vshll.u32 %v1777, 16
        %v2097 = vrot.slane %v2095, 5
        %v2098 = vsel %vm267, %v2093, %v2097
        %v2100 = vshrl.u32 %v1778, 16
        %v2102 = vrot.slane %v2100, 4
        %v2103 = vshll.u32 %v1778, 16
        %v2105 = vrot.slane %v2103, 5
        %v2106 = vor.u32 %v2102, %v2105
        %v2107 = vrot.slane %v2106, 4
        %v2109 = vshll.u32 %v1779, 16
        %v2111 = vrot.slane %v2109, 5
        %v2112 = vsel %vm267, %v2107, %v2111
        %v2113 = vshrl.u32 %v1779, 16
        %v2115 = vrot.slane %v2113, 4
        %v2116 = vor.u32 %v2115, %v2111
        %v2117 = vrot.slane %v2116, 4
        %v2119 = vshll.u32 %v1780, 16
        %v2121 = vrot.slane %v2119, 5
        %v2122 = vsel %vm267, %v2117, %v2121
        %v2124 = vshrl.u32 %v1781, 16
        %v2126 = vrot.slane %v2124, 4
        %v2127 = vshll.u32 %v1781, 16
        %v2129 = vrot.slane %v2127, 5
        %v2130 = vor.u32 %v2126, %v2129
        %v2131 = vrot.slane %v2130, 4
        %v2133 = vshll.u32 %v1782, 16
        %v2135 = vrot.slane %v2133, 5
        %v2136 = vsel %vm267, %v2131, %v2135
        %v2137 = vshrl.u32 %v1782, 16
        %v2139 = vrot.slane %v2137, 4
        %v2140 = vor.u32 %v2139, %v2135
        %v2141 = vrot.slane %v2140, 4
        %v2143 = vshll.u32 %v1783, 16
        %v2145 = vrot.slane %v2143, 5
        %v2146 = vsel %vm267, %v2141, %v2145
        %v2148 = vshrl.u32 %v1784, 16
        %v2150 = vrot.slane %v2148, 4
        %v2151 = vshll.u32 %v1784, 16
        %v2153 = vrot.slane %v2151, 5
        %v2154 = vor.u32 %v2150, %v2153
        %v2155 = vrot.slane %v2154, 4
        %v2157 = vshll.u32 %v1785, 16
        %v2159 = vrot.slane %v2157, 5
        %v2160 = vsel %vm267, %v2155, %v2159
        %v2161 = vshrl.u32 %v1785, 16
        %v2163 = vrot.slane %v2161, 4
        %v2164 = vor.u32 %v2163, %v2159
        %v2165 = vrot.slane %v2164, 4
        %v2167 = vshll.u32 %v1786, 16
        %v2169 = vrot.slane %v2167, 5
        %v2170 = vsel %vm267, %v2165, %v2169
        %s2171 = scalar_lea.vmem %s1, 8
        %v2172 = vld [vmem:[%s2171] sm:$0x3]
        %v2173 = vunpack.c.l.b16 %v1800
        %v2174 = vunpack.c.l.b16 %v1810
        %v2175 = vunpack.c.l.b16 %v1824
        %v2176 = vunpack.c.l.b16 %v1834
        %v2177 = vunpack.c.l.b16 %v1848
        %v2178 = vunpack.c.l.b16 %v1858
        %v2179 = vunpack.c.l.b16 %v1872
        %v2180 = vunpack.c.l.b16 %v1882
        %v2181 = vunpack.c.l.b16 %v1896
        %v2182 = vunpack.c.l.b16 %v1906
        %v2183 = vunpack.c.l.b16 %v1920
        %v2184 = vunpack.c.l.b16 %v1930
        %v2185 = vunpack.c.l.b16 %v1944
        %v2186 = vunpack.c.l.b16 %v1954
        %v2187 = vunpack.c.l.b16 %v1968
        %v2188 = vunpack.c.l.b16 %v1978
        %v2189 = vunpack.c.l.b16 %v1992
        %v2190 = vunpack.c.l.b16 %v2002
        %v2191 = vunpack.c.l.b16 %v2016
        %v2192 = vunpack.c.l.b16 %v2026
        %v2193 = vunpack.c.l.b16 %v2040
        %v2194 = vunpack.c.l.b16 %v2050
        %v2195 = vunpack.c.l.b16 %v2064
        %v2196 = vunpack.c.l.b16 %v2074
        %v2197 = vunpack.c.l.b16 %v2088
        %v2198 = vunpack.c.l.b16 %v2098
        %v2199 = vunpack.c.l.b16 %v2112
        %v2200 = vunpack.c.l.b16 %v2122
        %v2201 = vunpack.c.l.b16 %v2136
        %v2202 = vunpack.c.l.b16 %v2146
        %v2203 = vunpack.c.l.b16 %v2160
        %v2204 = vunpack.c.l.b16 %v2170
        %v2205 = vpack.c.b16 %v2174, %v2173
        %v2206 = vpack.c.b16 %v2176, %v2175
        %v2207 = vpack.c.b16 %v2178, %v2177
        %v2208 = vpack.c.b16 %v2180, %v2179
        %v2209 = vpack.c.b16 %v2182, %v2181
        %v2210 = vpack.c.b16 %v2184, %v2183
        %v2211 = vpack.c.b16 %v2186, %v2185
        %v2212 = vpack.c.b16 %v2188, %v2187
        %v2213 = vpack.c.b16 %v2190, %v2189
        %v2214 = vpack.c.b16 %v2192, %v2191
        %v2215 = vpack.c.b16 %v2194, %v2193
        %v2216 = vpack.c.b16 %v2196, %v2195
        %v2217 = vpack.c.b16 %v2198, %v2197
        %v2218 = vpack.c.b16 %v2200, %v2199
        %v2219 = vpack.c.b16 %v2202, %v2201
        %v2220 = vpack.c.b16 %v2204, %v2203
        %v2222 = vsel %vm702, %v2205, 0
        %v2225 = vsel %vm702, %v2206, 0
        %v2228 = vsel %vm702, %v2207, 0
        %v2231 = vsel %vm702, %v2208, 0
        %v2234 = vsel %vm702, %v2209, 0
        %v2237 = vsel %vm702, %v2210, 0
        %v2240 = vsel %vm702, %v2211, 0
        %v2243 = vsel %vm702, %v2212, 0
        %v2246 = vsel %vm702, %v2213, 0
        %v2249 = vsel %vm702, %v2214, 0
        %v2252 = vsel %vm702, %v2215, 0
        %v2255 = vsel %vm702, %v2216, 0
        %v2258 = vsel %vm702, %v2217, 0
        %v2261 = vsel %vm702, %v2218, 0
        %v2264 = vsel %vm702, %v2219, 0
        %v2267 = vsel %vm702, %v2220, 0
        %v2270 = vsel %vm751, %v2172, 0
        %2272 = vmatpush.bf16.msra.mxu0 0
        %2273 = vmatpush.bf16.msra.mxu0 0
        %2274 = vmatpush.bf16.msra.mxu0 0
        %2275 = vmatpush.bf16.msra.mxu0 0
        %2276 = vmatpush.bf16.msra.mxu0 0
        %2277 = vmatpush.bf16.msra.mxu0 0
        %2278 = vmatpush.bf16.msra.mxu0 0
        %2279 = vmatpush.bf16.msra.mxu0 %v2270
        %2280 = vmatmul.bf16.gmra.mxu0 %v2222
        %v2281 = vpop.f32.mrf.mxu0
        %v2282 = vadd.f32 0.0, %v2281
        %v2283 = vpop.f32.mrf.mxu0
        %v2284 = vadd.f32 0.0, %v2283
        %2285 = vmatmul.bf16.gmra.mxu0 %v2225
        %v2286 = vpop.f32.mrf.mxu0
        %v2287 = vadd.f32 0.0, %v2286
        %v2288 = vpop.f32.mrf.mxu0
        %v2289 = vadd.f32 0.0, %v2288
        %2290 = vmatmul.bf16.gmra.mxu0 %v2228
        %v2291 = vpop.f32.mrf.mxu0
        %v2292 = vadd.f32 0.0, %v2291
        %v2293 = vpop.f32.mrf.mxu0
        %v2294 = vadd.f32 0.0, %v2293
        %2295 = vmatmul.bf16.gmra.mxu0 %v2231
        %v2296 = vpop.f32.mrf.mxu0
        %v2297 = vadd.f32 0.0, %v2296
        %v2298 = vpop.f32.mrf.mxu0
        %v2299 = vadd.f32 0.0, %v2298
        %2300 = vmatmul.bf16.gmra.mxu0 %v2234
        %v2301 = vpop.f32.mrf.mxu0
        %v2302 = vadd.f32 0.0, %v2301
        %v2303 = vpop.f32.mrf.mxu0
        %v2304 = vadd.f32 0.0, %v2303
        %2305 = vmatmul.bf16.gmra.mxu0 %v2237
        %v2306 = vpop.f32.mrf.mxu0
        %v2307 = vadd.f32 0.0, %v2306
        %v2308 = vpop.f32.mrf.mxu0
        %v2309 = vadd.f32 0.0, %v2308
        %2310 = vmatmul.bf16.gmra.mxu0 %v2240
        %v2311 = vpop.f32.mrf.mxu0
        %v2312 = vadd.f32 0.0, %v2311
        %v2313 = vpop.f32.mrf.mxu0
        %v2314 = vadd.f32 0.0, %v2313
        %2315 = vmatmul.bf16.gmra.mxu0 %v2243
        %v2316 = vpop.f32.mrf.mxu0
        %v2317 = vadd.f32 0.0, %v2316
        %v2318 = vpop.f32.mrf.mxu0
        %v2319 = vadd.f32 0.0, %v2318
        %2320 = vmatmul.bf16.gmra.mxu0 %v2246
        %v2321 = vpop.f32.mrf.mxu0
        %v2322 = vadd.f32 0.0, %v2321
        %v2323 = vpop.f32.mrf.mxu0
        %v2324 = vadd.f32 0.0, %v2323
        %2325 = vmatmul.bf16.gmra.mxu0 %v2249
        %v2326 = vpop.f32.mrf.mxu0
        %v2327 = vadd.f32 0.0, %v2326
        %v2328 = vpop.f32.mrf.mxu0
        %v2329 = vadd.f32 0.0, %v2328
        %2330 = vmatmul.bf16.gmra.mxu0 %v2252
        %v2331 = vpop.f32.mrf.mxu0
        %v2332 = vadd.f32 0.0, %v2331
        %v2333 = vpop.f32.mrf.mxu0
        %v2334 = vadd.f32 0.0, %v2333
        %2335 = vmatmul.bf16.gmra.mxu0 %v2255
        %v2336 = vpop.f32.mrf.mxu0
        %v2337 = vadd.f32 0.0, %v2336
        %v2338 = vpop.f32.mrf.mxu0
        %v2339 = vadd.f32 0.0, %v2338
        %2340 = vmatmul.bf16.gmra.mxu0 %v2258
        %v2341 = vpop.f32.mrf.mxu0
        %v2342 = vadd.f32 0.0, %v2341
        %v2343 = vpop.f32.mrf.mxu0
        %v2344 = vadd.f32 0.0, %v2343
        %2345 = vmatmul.bf16.gmra.mxu0 %v2261
        %v2346 = vpop.f32.mrf.mxu0
        %v2347 = vadd.f32 0.0, %v2346
        %v2348 = vpop.f32.mrf.mxu0
        %v2349 = vadd.f32 0.0, %v2348
        %2350 = vmatmul.bf16.gmra.mxu0 %v2264
        %v2351 = vpop.f32.mrf.mxu0
        %v2352 = vadd.f32 0.0, %v2351
        %v2353 = vpop.f32.mrf.mxu0
        %v2354 = vadd.f32 0.0, %v2353
        %2355 = vmatmul.bf16.gmra.mxu0 %v2267
        %v2356 = vpop.f32.mrf.mxu0
        %v2357 = vadd.f32 0.0, %v2356
        %v2358 = vpop.f32.mrf.mxu0
        %v2359 = vadd.f32 0.0, %v2358
        %2360 = vdwg.mxu0
        %v2361 = vadd.f32 %v1707, %v2282
        %v2362 = vadd.f32 %v1708, %v2284
        %v2363 = vadd.f32 %v1709, %v2287
        %v2364 = vadd.f32 %v1710, %v2289
        %v2365 = vadd.f32 %v1711, %v2292
        %v2366 = vadd.f32 %v1712, %v2294
        %v2367 = vadd.f32 %v1713, %v2297
        %v2368 = vadd.f32 %v1714, %v2299
        %v2369 = vadd.f32 %v1715, %v2302
        %v2370 = vadd.f32 %v1716, %v2304
        %v2371 = vadd.f32 %v1717, %v2307
        %v2372 = vadd.f32 %v1718, %v2309
        %v2373 = vadd.f32 %v1719, %v2312
        %v2374 = vadd.f32 %v1720, %v2314
        %v2375 = vadd.f32 %v1721, %v2317
        %v2376 = vadd.f32 %v1722, %v2319
        %v2377 = vadd.f32 %v1723, %v2322
        %v2378 = vadd.f32 %v1724, %v2324
        %v2379 = vadd.f32 %v1725, %v2327
        %v2380 = vadd.f32 %v1726, %v2329
        %v2381 = vadd.f32 %v1727, %v2332
        %v2382 = vadd.f32 %v1728, %v2334
        %v2383 = vadd.f32 %v1729, %v2337
        %v2384 = vadd.f32 %v1730, %v2339
        %v2385 = vadd.f32 %v1731, %v2342
        %v2386 = vadd.f32 %v1732, %v2344
        %v2387 = vadd.f32 %v1733, %v2347
        %v2388 = vadd.f32 %v1734, %v2349
        %v2389 = vadd.f32 %v1735, %v2352
        %v2390 = vadd.f32 %v1736, %v2354
        %v2391 = vadd.f32 %v1737, %v2357
        %v2392 = vadd.f32 %v1738, %v2359
        %v2393 = vld [vmem:[%s1452] sm:$0xe]
        %v2394 = vld [vmem:[%s1452 + $0xc] sm:$0xe]
        %v2395 = vld [vmem:[%s1452 + $0x18] sm:$0xe]
        %v2396 = vld [vmem:[%s1452 + $0x24] sm:$0xe]
        %v2397 = vld [vmem:[%s1452 + $0x30] sm:$0xe]
        %v2398 = vld [vmem:[%s1452 + $0x3c] sm:$0xe]
        %v2399 = vld [vmem:[%s1452 + $0x48] sm:$0xe]
        %v2400 = vld [vmem:[%s1452 + $0x54] sm:$0xe]
        %v2401 = vld [vmem:[%s1452 + $0x60] sm:$0xe]
        %v2402 = vld [vmem:[%s1452 + $0x6c] sm:$0xe]
        %v2403 = vld [vmem:[%s1452 + $0x78] sm:$0xe]
        %v2404 = vld [vmem:[%s1452 + $0x84] sm:$0xe]
        %v2405 = vld [vmem:[%s1452 + $0x90] sm:$0xe]
        %v2406 = vld [vmem:[%s1452 + $0x9c] sm:$0xe]
        %v2407 = vld [vmem:[%s1452 + $0xa8] sm:$0xe]
        %v2408 = vld [vmem:[%s1452 + $0xb4] sm:$0xe]
        %v2457 = vrot.slane %v2393, 5
        %v2458 = vrot.slane %v2457, 4
        %v2459 = vrot.slane %v1740, 5
        %v2460 = vsel %vm1114, %v2458, %v2459
        %v2461 = vrot.slane %v2459, 4
        %v2462 = vrot.slane %v1741, 5
        %v2463 = vsel %vm1114, %v2461, %v2462
        %v2464 = vrot.slane %v2394, 5
        %v2465 = vrot.slane %v2464, 4
        %v2466 = vrot.slane %v1743, 5
        %v2467 = vsel %vm1114, %v2465, %v2466
        %v2468 = vrot.slane %v2466, 4
        %v2469 = vrot.slane %v1744, 5
        %v2470 = vsel %vm1114, %v2468, %v2469
        %v2471 = vrot.slane %v2395, 5
        %v2472 = vrot.slane %v2471, 4
        %v2473 = vrot.slane %v1746, 5
        %v2474 = vsel %vm1114, %v2472, %v2473
        %v2475 = vrot.slane %v2473, 4
        %v2476 = vrot.slane %v1747, 5
        %v2477 = vsel %vm1114, %v2475, %v2476
        %v2478 = vrot.slane %v2396, 5
        %v2479 = vrot.slane %v2478, 4
        %v2480 = vrot.slane %v1749, 5
        %v2481 = vsel %vm1114, %v2479, %v2480
        %v2482 = vrot.slane %v2480, 4
        %v2483 = vrot.slane %v1750, 5
        %v2484 = vsel %vm1114, %v2482, %v2483
        %v2485 = vrot.slane %v2397, 5
        %v2486 = vrot.slane %v2485, 4
        %v2487 = vrot.slane %v1752, 5
        %v2488 = vsel %vm1114, %v2486, %v2487
        %v2489 = vrot.slane %v2487, 4
        %v2490 = vrot.slane %v1753, 5
        %v2491 = vsel %vm1114, %v2489, %v2490
        %v2492 = vrot.slane %v2398, 5
        %v2493 = vrot.slane %v2492, 4
        %v2494 = vrot.slane %v1755, 5
        %v2495 = vsel %vm1114, %v2493, %v2494
        %v2496 = vrot.slane %v2494, 4
        %v2497 = vrot.slane %v1756, 5
        %v2498 = vsel %vm1114, %v2496, %v2497
        %v2499 = vrot.slane %v2399, 5
        %v2500 = vrot.slane %v2499, 4
        %v2501 = vrot.slane %v1758, 5
        %v2502 = vsel %vm1114, %v2500, %v2501
        %v2503 = vrot.slane %v2501, 4
        %v2504 = vrot.slane %v1759, 5
        %v2505 = vsel %vm1114, %v2503, %v2504
        %v2506 = vrot.slane %v2400, 5
        %v2507 = vrot.slane %v2506, 4
        %v2508 = vrot.slane %v1761, 5
        %v2509 = vsel %vm1114, %v2507, %v2508
        %v2510 = vrot.slane %v2508, 4
        %v2511 = vrot.slane %v1762, 5
        %v2512 = vsel %vm1114, %v2510, %v2511
        %v2513 = vrot.slane %v2401, 5
        %v2514 = vrot.slane %v2513, 4
        %v2515 = vrot.slane %v1764, 5
        %v2516 = vsel %vm1114, %v2514, %v2515
        %v2517 = vrot.slane %v2515, 4
        %v2518 = vrot.slane %v1765, 5
        %v2519 = vsel %vm1114, %v2517, %v2518
        %v2520 = vrot.slane %v2402, 5
        %v2521 = vrot.slane %v2520, 4
        %v2522 = vrot.slane %v1767, 5
        %v2523 = vsel %vm1114, %v2521, %v2522
        %v2524 = vrot.slane %v2522, 4
        %v2525 = vrot.slane %v1768, 5
        %v2526 = vsel %vm1114, %v2524, %v2525
        %v2527 = vrot.slane %v2403, 5
        %v2528 = vrot.slane %v2527, 4
        %v2529 = vrot.slane %v1770, 5
        %v2530 = vsel %vm1114, %v2528, %v2529
        %v2531 = vrot.slane %v2529, 4
        %v2532 = vrot.slane %v1771, 5
        %v2533 = vsel %vm1114, %v2531, %v2532
        %v2534 = vrot.slane %v2404, 5
        %v2535 = vrot.slane %v2534, 4
        %v2536 = vrot.slane %v1773, 5
        %v2537 = vsel %vm1114, %v2535, %v2536
        %v2538 = vrot.slane %v2536, 4
        %v2539 = vrot.slane %v1774, 5
        %v2540 = vsel %vm1114, %v2538, %v2539
        %v2541 = vrot.slane %v2405, 5
        %v2542 = vrot.slane %v2541, 4
        %v2543 = vrot.slane %v1776, 5
        %v2544 = vsel %vm1114, %v2542, %v2543
        %v2545 = vrot.slane %v2543, 4
        %v2546 = vrot.slane %v1777, 5
        %v2547 = vsel %vm1114, %v2545, %v2546
        %v2548 = vrot.slane %v2406, 5
        %v2549 = vrot.slane %v2548, 4
        %v2550 = vrot.slane %v1779, 5
        %v2551 = vsel %vm1114, %v2549, %v2550
        %v2552 = vrot.slane %v2550, 4
        %v2553 = vrot.slane %v1780, 5
        %v2554 = vsel %vm1114, %v2552, %v2553
        %v2555 = vrot.slane %v2407, 5
        %v2556 = vrot.slane %v2555, 4
        %v2557 = vrot.slane %v1782, 5
        %v2558 = vsel %vm1114, %v2556, %v2557
        %v2559 = vrot.slane %v2557, 4
        %v2560 = vrot.slane %v1783, 5
        %v2561 = vsel %vm1114, %v2559, %v2560
        %v2562 = vrot.slane %v2408, 5
        %v2563 = vrot.slane %v2562, 4
        %v2564 = vrot.slane %v1785, 5
        %v2565 = vsel %vm1114, %v2563, %v2564
        %v2566 = vrot.slane %v2564, 4
        %v2567 = vrot.slane %v1786, 5
        %v2568 = vsel %vm1114, %v2566, %v2567
        %s2569 = scalar_lea.vmem %s1, 10
        %v2570 = vld [vmem:[%s2569] sm:$0x3]
        %v2571 = vunpack.c.l.b16 %v2460
        %v2572 = vunpack.c.l.b16 %v2463
        %v2573 = vunpack.c.l.b16 %v2467
        %v2574 = vunpack.c.l.b16 %v2470
        %v2575 = vunpack.c.l.b16 %v2474
        %v2576 = vunpack.c.l.b16 %v2477
        %v2577 = vunpack.c.l.b16 %v2481
        %v2578 = vunpack.c.l.b16 %v2484
        %v2579 = vunpack.c.l.b16 %v2488
        %v2580 = vunpack.c.l.b16 %v2491
        %v2581 = vunpack.c.l.b16 %v2495
        %v2582 = vunpack.c.l.b16 %v2498
        %v2583 = vunpack.c.l.b16 %v2502
        %v2584 = vunpack.c.l.b16 %v2505
        %v2585 = vunpack.c.l.b16 %v2509
        %v2586 = vunpack.c.l.b16 %v2512
        %v2587 = vunpack.c.l.b16 %v2516
        %v2588 = vunpack.c.l.b16 %v2519
        %v2589 = vunpack.c.l.b16 %v2523
        %v2590 = vunpack.c.l.b16 %v2526
        %v2591 = vunpack.c.l.b16 %v2530
        %v2592 = vunpack.c.l.b16 %v2533
        %v2593 = vunpack.c.l.b16 %v2537
        %v2594 = vunpack.c.l.b16 %v2540
        %v2595 = vunpack.c.l.b16 %v2544
        %v2596 = vunpack.c.l.b16 %v2547
        %v2597 = vunpack.c.l.b16 %v2551
        %v2598 = vunpack.c.l.b16 %v2554
        %v2599 = vunpack.c.l.b16 %v2558
        %v2600 = vunpack.c.l.b16 %v2561
        %v2601 = vunpack.c.l.b16 %v2565
        %v2602 = vunpack.c.l.b16 %v2568
        %v2603 = vpack.c.b16 %v2572, %v2571
        %v2604 = vpack.c.b16 %v2574, %v2573
        %v2605 = vpack.c.b16 %v2576, %v2575
        %v2606 = vpack.c.b16 %v2578, %v2577
        %v2607 = vpack.c.b16 %v2580, %v2579
        %v2608 = vpack.c.b16 %v2582, %v2581
        %v2609 = vpack.c.b16 %v2584, %v2583
        %v2610 = vpack.c.b16 %v2586, %v2585
        %v2611 = vpack.c.b16 %v2588, %v2587
        %v2612 = vpack.c.b16 %v2590, %v2589
        %v2613 = vpack.c.b16 %v2592, %v2591
        %v2614 = vpack.c.b16 %v2594, %v2593
        %v2615 = vpack.c.b16 %v2596, %v2595
        %v2616 = vpack.c.b16 %v2598, %v2597
        %v2617 = vpack.c.b16 %v2600, %v2599
        %v2618 = vpack.c.b16 %v2602, %v2601
        %v2620 = vsel %vm702, %v2603, 0
        %v2623 = vsel %vm702, %v2604, 0
        %v2626 = vsel %vm702, %v2605, 0
        %v2629 = vsel %vm702, %v2606, 0
        %v2632 = vsel %vm702, %v2607, 0
        %v2635 = vsel %vm702, %v2608, 0
        %v2638 = vsel %vm702, %v2609, 0
        %v2641 = vsel %vm702, %v2610, 0
        %v2644 = vsel %vm702, %v2611, 0
        %v2647 = vsel %vm702, %v2612, 0
        %v2650 = vsel %vm702, %v2613, 0
        %v2653 = vsel %vm702, %v2614, 0
        %v2656 = vsel %vm702, %v2615, 0
        %v2659 = vsel %vm702, %v2616, 0
        %v2662 = vsel %vm702, %v2617, 0
        %v2665 = vsel %vm702, %v2618, 0
        %v2668 = vsel %vm751, %v2570, 0
        %2670 = vmatpush.bf16.msra.mxu0 0
        %2671 = vmatpush.bf16.msra.mxu0 0
        %2672 = vmatpush.bf16.msra.mxu0 0
        %2673 = vmatpush.bf16.msra.mxu0 0
        %2674 = vmatpush.bf16.msra.mxu0 0
        %2675 = vmatpush.bf16.msra.mxu0 0
        %2676 = vmatpush.bf16.msra.mxu0 0
        %2677 = vmatpush.bf16.msra.mxu0 %v2668
        %2678 = vmatmul.bf16.gmra.mxu0 %v2620
        %v2679 = vpop.f32.mrf.mxu0
        %v2680 = vadd.f32 0.0, %v2679
        %v2681 = vpop.f32.mrf.mxu0
        %v2682 = vadd.f32 0.0, %v2681
        %2683 = vmatmul.bf16.gmra.mxu0 %v2623
        %v2684 = vpop.f32.mrf.mxu0
        %v2685 = vadd.f32 0.0, %v2684
        %v2686 = vpop.f32.mrf.mxu0
        %v2687 = vadd.f32 0.0, %v2686
        %2688 = vmatmul.bf16.gmra.mxu0 %v2626
        %v2689 = vpop.f32.mrf.mxu0
        %v2690 = vadd.f32 0.0, %v2689
        %v2691 = vpop.f32.mrf.mxu0
        %v2692 = vadd.f32 0.0, %v2691
        %2693 = vmatmul.bf16.gmra.mxu0 %v2629
        %v2694 = vpop.f32.mrf.mxu0
        %v2695 = vadd.f32 0.0, %v2694
        %v2696 = vpop.f32.mrf.mxu0
        %v2697 = vadd.f32 0.0, %v2696
        %2698 = vmatmul.bf16.gmra.mxu0 %v2632
        %v2699 = vpop.f32.mrf.mxu0
        %v2700 = vadd.f32 0.0, %v2699
        %v2701 = vpop.f32.mrf.mxu0
        %v2702 = vadd.f32 0.0, %v2701
        %2703 = vmatmul.bf16.gmra.mxu0 %v2635
        %v2704 = vpop.f32.mrf.mxu0
        %v2705 = vadd.f32 0.0, %v2704
        %v2706 = vpop.f32.mrf.mxu0
        %v2707 = vadd.f32 0.0, %v2706
        %2708 = vmatmul.bf16.gmra.mxu0 %v2638
        %v2709 = vpop.f32.mrf.mxu0
        %v2710 = vadd.f32 0.0, %v2709
        %v2711 = vpop.f32.mrf.mxu0
        %v2712 = vadd.f32 0.0, %v2711
        %2713 = vmatmul.bf16.gmra.mxu0 %v2641
        %v2714 = vpop.f32.mrf.mxu0
        %v2715 = vadd.f32 0.0, %v2714
        %v2716 = vpop.f32.mrf.mxu0
        %v2717 = vadd.f32 0.0, %v2716
        %2718 = vmatmul.bf16.gmra.mxu0 %v2644
        %v2719 = vpop.f32.mrf.mxu0
        %v2720 = vadd.f32 0.0, %v2719
        %v2721 = vpop.f32.mrf.mxu0
        %v2722 = vadd.f32 0.0, %v2721
        %2723 = vmatmul.bf16.gmra.mxu0 %v2647
        %v2724 = vpop.f32.mrf.mxu0
        %v2725 = vadd.f32 0.0, %v2724
        %v2726 = vpop.f32.mrf.mxu0
        %v2727 = vadd.f32 0.0, %v2726
        %2728 = vmatmul.bf16.gmra.mxu0 %v2650
        %v2729 = vpop.f32.mrf.mxu0
        %v2730 = vadd.f32 0.0, %v2729
        %v2731 = vpop.f32.mrf.mxu0
        %v2732 = vadd.f32 0.0, %v2731
        %2733 = vmatmul.bf16.gmra.mxu0 %v2653
        %v2734 = vpop.f32.mrf.mxu0
        %v2735 = vadd.f32 0.0, %v2734
        %v2736 = vpop.f32.mrf.mxu0
        %v2737 = vadd.f32 0.0, %v2736
        %2738 = vmatmul.bf16.gmra.mxu0 %v2656
        %v2739 = vpop.f32.mrf.mxu0
        %v2740 = vadd.f32 0.0, %v2739
        %v2741 = vpop.f32.mrf.mxu0
        %v2742 = vadd.f32 0.0, %v2741
        %2743 = vmatmul.bf16.gmra.mxu0 %v2659
        %v2744 = vpop.f32.mrf.mxu0
        %v2745 = vadd.f32 0.0, %v2744
        %v2746 = vpop.f32.mrf.mxu0
        %v2747 = vadd.f32 0.0, %v2746
        %2748 = vmatmul.bf16.gmra.mxu0 %v2662
        %v2749 = vpop.f32.mrf.mxu0
        %v2750 = vadd.f32 0.0, %v2749
        %v2751 = vpop.f32.mrf.mxu0
        %v2752 = vadd.f32 0.0, %v2751
        %2753 = vmatmul.bf16.gmra.mxu0 %v2665
        %v2754 = vpop.f32.mrf.mxu0
        %v2755 = vadd.f32 0.0, %v2754
        %v2756 = vpop.f32.mrf.mxu0
        %v2757 = vadd.f32 0.0, %v2756
        %2758 = vdwg.mxu0
        %v2759 = vadd.f32 %v2361, %v2680
        %v2760 = vadd.f32 %v2362, %v2682
        %v2761 = vadd.f32 %v2363, %v2685
        %v2762 = vadd.f32 %v2364, %v2687
        %v2763 = vadd.f32 %v2365, %v2690
        %v2764 = vadd.f32 %v2366, %v2692
        %v2765 = vadd.f32 %v2367, %v2695
        %v2766 = vadd.f32 %v2368, %v2697
        %v2767 = vadd.f32 %v2369, %v2700
        %v2768 = vadd.f32 %v2370, %v2702
        %v2769 = vadd.f32 %v2371, %v2705
        %v2770 = vadd.f32 %v2372, %v2707
        %v2771 = vadd.f32 %v2373, %v2710
        %v2772 = vadd.f32 %v2374, %v2712
        %v2773 = vadd.f32 %v2375, %v2715
        %v2774 = vadd.f32 %v2376, %v2717
        %v2775 = vadd.f32 %v2377, %v2720
        %v2776 = vadd.f32 %v2378, %v2722
        %v2777 = vadd.f32 %v2379, %v2725
        %v2778 = vadd.f32 %v2380, %v2727
        %v2779 = vadd.f32 %v2381, %v2730
        %v2780 = vadd.f32 %v2382, %v2732
        %v2781 = vadd.f32 %v2383, %v2735
        %v2782 = vadd.f32 %v2384, %v2737
        %v2783 = vadd.f32 %v2385, %v2740
        %v2784 = vadd.f32 %v2386, %v2742
        %v2785 = vadd.f32 %v2387, %v2745
        %v2786 = vadd.f32 %v2388, %v2747
        %v2787 = vadd.f32 %v2389, %v2750
        %v2788 = vadd.f32 %v2390, %v2752
        %v2789 = vadd.f32 %v2391, %v2755
        %v2790 = vadd.f32 %v2392, %v2757
        %s2791 = sadd.s32 %s212, 2
        %s2792 = smul.u32 %s2791, 3
        %s2793 = smul.addr %s2792, 4
        %s2794 = scalar_lea.vmem %s209, %s2793
        %v2795 = vld [vmem:[%s2794] sm:$0xf]
        %v2796 = vld [vmem:[%s2794 + $0x4] sm:$0xf]
        %v2797 = vld [vmem:[%s2794 + $0xc] sm:$0xf]
        %v2798 = vld [vmem:[%s2794 + $0x10] sm:$0xf]
        %v2799 = vld [vmem:[%s2794 + $0x18] sm:$0xf]
        %v2800 = vld [vmem:[%s2794 + $0x1c] sm:$0xf]
        %v2801 = vld [vmem:[%s2794 + $0x24] sm:$0xf]
        %v2802 = vld [vmem:[%s2794 + $0x28] sm:$0xf]
        %v2803 = vld [vmem:[%s2794 + $0x30] sm:$0xf]
        %v2804 = vld [vmem:[%s2794 + $0x34] sm:$0xf]
        %v2805 = vld [vmem:[%s2794 + $0x3c] sm:$0xf]
        %v2806 = vld [vmem:[%s2794 + $0x40] sm:$0xf]
        %v2807 = vld [vmem:[%s2794 + $0x48] sm:$0xf]
        %v2808 = vld [vmem:[%s2794 + $0x4c] sm:$0xf]
        %v2809 = vld [vmem:[%s2794 + $0x54] sm:$0xf]
        %v2810 = vld [vmem:[%s2794 + $0x58] sm:$0xf]
        %v2811 = vld [vmem:[%s2794 + $0x60] sm:$0xf]
        %v2812 = vld [vmem:[%s2794 + $0x64] sm:$0xf]
        %v2813 = vld [vmem:[%s2794 + $0x6c] sm:$0xf]
        %v2814 = vld [vmem:[%s2794 + $0x70] sm:$0xf]
        %v2815 = vld [vmem:[%s2794 + $0x78] sm:$0xf]
        %v2816 = vld [vmem:[%s2794 + $0x7c] sm:$0xf]
        %v2817 = vld [vmem:[%s2794 + $0x84] sm:$0xf]
        %v2818 = vld [vmem:[%s2794 + $0x88] sm:$0xf]
        %v2819 = vld [vmem:[%s2794 + $0x90] sm:$0xf]
        %v2820 = vld [vmem:[%s2794 + $0x94] sm:$0xf]
        %v2821 = vld [vmem:[%s2794 + $0x9c] sm:$0xf]
        %v2822 = vld [vmem:[%s2794 + $0xa0] sm:$0xf]
        %v2823 = vld [vmem:[%s2794 + $0xa8] sm:$0xf]
        %v2824 = vld [vmem:[%s2794 + $0xac] sm:$0xf]
        %v2825 = vld [vmem:[%s2794 + $0xb4] sm:$0xf]
        %v2826 = vld [vmem:[%s2794 + $0xb8] sm:$0xf]
        %s2827 = scalar_lea.vmem %s1, 12
        %v2828 = vld [vmem:[%s2827] sm:$0x3]
        %v2861 = vunpack.c.l.b16 %v2795
        %v2862 = vunpack.c.l.b16 %v2796
        %v2863 = vunpack.c.l.b16 %v2797
        %v2864 = vunpack.c.l.b16 %v2798
        %v2865 = vunpack.c.l.b16 %v2799
        %v2866 = vunpack.c.l.b16 %v2800
        %v2867 = vunpack.c.l.b16 %v2801
        %v2868 = vunpack.c.l.b16 %v2802
        %v2869 = vunpack.c.l.b16 %v2803
        %v2870 = vunpack.c.l.b16 %v2804
        %v2871 = vunpack.c.l.b16 %v2805
        %v2872 = vunpack.c.l.b16 %v2806
        %v2873 = vunpack.c.l.b16 %v2807
        %v2874 = vunpack.c.l.b16 %v2808
        %v2875 = vunpack.c.l.b16 %v2809
        %v2876 = vunpack.c.l.b16 %v2810
        %v2877 = vunpack.c.l.b16 %v2811
        %v2878 = vunpack.c.l.b16 %v2812
        %v2879 = vunpack.c.l.b16 %v2813
        %v2880 = vunpack.c.l.b16 %v2814
        %v2881 = vunpack.c.l.b16 %v2815
        %v2882 = vunpack.c.l.b16 %v2816
        %v2883 = vunpack.c.l.b16 %v2817
        %v2884 = vunpack.c.l.b16 %v2818
        %v2885 = vunpack.c.l.b16 %v2819
        %v2886 = vunpack.c.l.b16 %v2820
        %v2887 = vunpack.c.l.b16 %v2821
        %v2888 = vunpack.c.l.b16 %v2822
        %v2889 = vunpack.c.l.b16 %v2823
        %v2890 = vunpack.c.l.b16 %v2824
        %v2891 = vunpack.c.l.b16 %v2825
        %v2892 = vunpack.c.l.b16 %v2826
        %v2893 = vpack.c.b16 %v2862, %v2861
        %v2894 = vpack.c.b16 %v2864, %v2863
        %v2895 = vpack.c.b16 %v2866, %v2865
        %v2896 = vpack.c.b16 %v2868, %v2867
        %v2897 = vpack.c.b16 %v2870, %v2869
        %v2898 = vpack.c.b16 %v2872, %v2871
        %v2899 = vpack.c.b16 %v2874, %v2873
        %v2900 = vpack.c.b16 %v2876, %v2875
        %v2901 = vpack.c.b16 %v2878, %v2877
        %v2902 = vpack.c.b16 %v2880, %v2879
        %v2903 = vpack.c.b16 %v2882, %v2881
        %v2904 = vpack.c.b16 %v2884, %v2883
        %v2905 = vpack.c.b16 %v2886, %v2885
        %v2906 = vpack.c.b16 %v2888, %v2887
        %v2907 = vpack.c.b16 %v2890, %v2889
        %v2908 = vpack.c.b16 %v2892, %v2891
        %v2910 = vsel %vm702, %v2893, 0
        %v2913 = vsel %vm702, %v2894, 0
        %v2916 = vsel %vm702, %v2895, 0
        %v2919 = vsel %vm702, %v2896, 0
        %v2922 = vsel %vm702, %v2897, 0
        %v2925 = vsel %vm702, %v2898, 0
        %v2928 = vsel %vm702, %v2899, 0
        %v2931 = vsel %vm702, %v2900, 0
        %v2934 = vsel %vm702, %v2901, 0
        %v2937 = vsel %vm702, %v2902, 0
        %v2940 = vsel %vm702, %v2903, 0
        %v2943 = vsel %vm702, %v2904, 0
        %v2946 = vsel %vm702, %v2905, 0
        %v2949 = vsel %vm702, %v2906, 0
        %v2952 = vsel %vm702, %v2907, 0
        %v2955 = vsel %vm702, %v2908, 0
        %v2958 = vsel %vm751, %v2828, 0
        %2960 = vmatpush.bf16.msra.mxu0 0
        %2961 = vmatpush.bf16.msra.mxu0 0
        %2962 = vmatpush.bf16.msra.mxu0 0
        %2963 = vmatpush.bf16.msra.mxu0 0
        %2964 = vmatpush.bf16.msra.mxu0 0
        %2965 = vmatpush.bf16.msra.mxu0 0
        %2966 = vmatpush.bf16.msra.mxu0 0
        %2967 = vmatpush.bf16.msra.mxu0 %v2958
        %2968 = vmatmul.bf16.gmra.mxu0 %v2910
        %v2969 = vpop.f32.mrf.mxu0
        %v2970 = vadd.f32 0.0, %v2969
        %v2971 = vpop.f32.mrf.mxu0
        %v2972 = vadd.f32 0.0, %v2971
        %2973 = vmatmul.bf16.gmra.mxu0 %v2913
        %v2974 = vpop.f32.mrf.mxu0
        %v2975 = vadd.f32 0.0, %v2974
        %v2976 = vpop.f32.mrf.mxu0
        %v2977 = vadd.f32 0.0, %v2976
        %2978 = vmatmul.bf16.gmra.mxu0 %v2916
        %v2979 = vpop.f32.mrf.mxu0
        %v2980 = vadd.f32 0.0, %v2979
        %v2981 = vpop.f32.mrf.mxu0
        %v2982 = vadd.f32 0.0, %v2981
        %2983 = vmatmul.bf16.gmra.mxu0 %v2919
        %v2984 = vpop.f32.mrf.mxu0
        %v2985 = vadd.f32 0.0, %v2984
        %v2986 = vpop.f32.mrf.mxu0
        %v2987 = vadd.f32 0.0, %v2986
        %2988 = vmatmul.bf16.gmra.mxu0 %v2922
        %v2989 = vpop.f32.mrf.mxu0
        %v2990 = vadd.f32 0.0, %v2989
        %v2991 = vpop.f32.mrf.mxu0
        %v2992 = vadd.f32 0.0, %v2991
        %2993 = vmatmul.bf16.gmra.mxu0 %v2925
        %v2994 = vpop.f32.mrf.mxu0
        %v2995 = vadd.f32 0.0, %v2994
        %v2996 = vpop.f32.mrf.mxu0
        %v2997 = vadd.f32 0.0, %v2996
        %2998 = vmatmul.bf16.gmra.mxu0 %v2928
        %v2999 = vpop.f32.mrf.mxu0
        %v3000 = vadd.f32 0.0, %v2999
        %v3001 = vpop.f32.mrf.mxu0
        %v3002 = vadd.f32 0.0, %v3001
        %3003 = vmatmul.bf16.gmra.mxu0 %v2931
        %v3004 = vpop.f32.mrf.mxu0
        %v3005 = vadd.f32 0.0, %v3004
        %v3006 = vpop.f32.mrf.mxu0
        %v3007 = vadd.f32 0.0, %v3006
        %3008 = vmatmul.bf16.gmra.mxu0 %v2934
        %v3009 = vpop.f32.mrf.mxu0
        %v3010 = vadd.f32 0.0, %v3009
        %v3011 = vpop.f32.mrf.mxu0
        %v3012 = vadd.f32 0.0, %v3011
        %3013 = vmatmul.bf16.gmra.mxu0 %v2937
        %v3014 = vpop.f32.mrf.mxu0
        %v3015 = vadd.f32 0.0, %v3014
        %v3016 = vpop.f32.mrf.mxu0
        %v3017 = vadd.f32 0.0, %v3016
        %3018 = vmatmul.bf16.gmra.mxu0 %v2940
        %v3019 = vpop.f32.mrf.mxu0
        %v3020 = vadd.f32 0.0, %v3019
        %v3021 = vpop.f32.mrf.mxu0
        %v3022 = vadd.f32 0.0, %v3021
        %3023 = vmatmul.bf16.gmra.mxu0 %v2943
        %v3024 = vpop.f32.mrf.mxu0
        %v3025 = vadd.f32 0.0, %v3024
        %v3026 = vpop.f32.mrf.mxu0
        %v3027 = vadd.f32 0.0, %v3026
        %3028 = vmatmul.bf16.gmra.mxu0 %v2946
        %v3029 = vpop.f32.mrf.mxu0
        %v3030 = vadd.f32 0.0, %v3029
        %v3031 = vpop.f32.mrf.mxu0
        %v3032 = vadd.f32 0.0, %v3031
        %3033 = vmatmul.bf16.gmra.mxu0 %v2949
        %v3034 = vpop.f32.mrf.mxu0
        %v3035 = vadd.f32 0.0, %v3034
        %v3036 = vpop.f32.mrf.mxu0
        %v3037 = vadd.f32 0.0, %v3036
        %3038 = vmatmul.bf16.gmra.mxu0 %v2952
        %v3039 = vpop.f32.mrf.mxu0
        %v3040 = vadd.f32 0.0, %v3039
        %v3041 = vpop.f32.mrf.mxu0
        %v3042 = vadd.f32 0.0, %v3041
        %3043 = vmatmul.bf16.gmra.mxu0 %v2955
        %v3044 = vpop.f32.mrf.mxu0
        %v3045 = vadd.f32 0.0, %v3044
        %v3046 = vpop.f32.mrf.mxu0
        %v3047 = vadd.f32 0.0, %v3046
        %3048 = vdwg.mxu0
        %v3049 = vadd.f32 %v2759, %v2970
        %v3050 = vadd.f32 %v2760, %v2972
        %v3051 = vadd.f32 %v2761, %v2975
        %v3052 = vadd.f32 %v2762, %v2977
        %v3053 = vadd.f32 %v2763, %v2980
        %v3054 = vadd.f32 %v2764, %v2982
        %v3055 = vadd.f32 %v2765, %v2985
        %v3056 = vadd.f32 %v2766, %v2987
        %v3057 = vadd.f32 %v2767, %v2990
        %v3058 = vadd.f32 %v2768, %v2992
        %v3059 = vadd.f32 %v2769, %v2995
        %v3060 = vadd.f32 %v2770, %v2997
        %v3061 = vadd.f32 %v2771, %v3000
        %v3062 = vadd.f32 %v2772, %v3002
        %v3063 = vadd.f32 %v2773, %v3005
        %v3064 = vadd.f32 %v2774, %v3007
        %v3065 = vadd.f32 %v2775, %v3010
        %v3066 = vadd.f32 %v2776, %v3012
        %v3067 = vadd.f32 %v2777, %v3015
        %v3068 = vadd.f32 %v2778, %v3017
        %v3069 = vadd.f32 %v2779, %v3020
        %v3070 = vadd.f32 %v2780, %v3022
        %v3071 = vadd.f32 %v2781, %v3025
        %v3072 = vadd.f32 %v2782, %v3027
        %v3073 = vadd.f32 %v2783, %v3030
        %v3074 = vadd.f32 %v2784, %v3032
        %v3075 = vadd.f32 %v2785, %v3035
        %v3076 = vadd.f32 %v2786, %v3037
        %v3077 = vadd.f32 %v2787, %v3040
        %v3078 = vadd.f32 %v2788, %v3042
        %v3079 = vadd.f32 %v2789, %v3045
        %v3080 = vadd.f32 %v2790, %v3047
        %v3081 = vld [vmem:[%s2794] sm:$0xf]
        %v3082 = vld [vmem:[%s2794 + $0x4] sm:$0xf]
        %v3083 = vld [vmem:[%s2794 + $0x8] sm:$0x1]
        %v3084 = vld [vmem:[%s2794 + $0xc] sm:$0xf]
        %v3085 = vld [vmem:[%s2794 + $0x10] sm:$0xf]
        %v3086 = vld [vmem:[%s2794 + $0x14] sm:$0x1]
        %v3087 = vld [vmem:[%s2794 + $0x18] sm:$0xf]
        %v3088 = vld [vmem:[%s2794 + $0x1c] sm:$0xf]
        %v3089 = vld [vmem:[%s2794 + $0x20] sm:$0x1]
        %v3090 = vld [vmem:[%s2794 + $0x24] sm:$0xf]
        %v3091 = vld [vmem:[%s2794 + $0x28] sm:$0xf]
        %v3092 = vld [vmem:[%s2794 + $0x2c] sm:$0x1]
        %v3093 = vld [vmem:[%s2794 + $0x30] sm:$0xf]
        %v3094 = vld [vmem:[%s2794 + $0x34] sm:$0xf]
        %v3095 = vld [vmem:[%s2794 + $0x38] sm:$0x1]
        %v3096 = vld [vmem:[%s2794 + $0x3c] sm:$0xf]
        %v3097 = vld [vmem:[%s2794 + $0x40] sm:$0xf]
        %v3098 = vld [vmem:[%s2794 + $0x44] sm:$0x1]
        %v3099 = vld [vmem:[%s2794 + $0x48] sm:$0xf]
        %v3100 = vld [vmem:[%s2794 + $0x4c] sm:$0xf]
        %v3101 = vld [vmem:[%s2794 + $0x50] sm:$0x1]
        %v3102 = vld [vmem:[%s2794 + $0x54] sm:$0xf]
        %v3103 = vld [vmem:[%s2794 + $0x58] sm:$0xf]
        %v3104 = vld [vmem:[%s2794 + $0x5c] sm:$0x1]
        %v3105 = vld [vmem:[%s2794 + $0x60] sm:$0xf]
        %v3106 = vld [vmem:[%s2794 + $0x64] sm:$0xf]
        %v3107 = vld [vmem:[%s2794 + $0x68] sm:$0x1]
        %v3108 = vld [vmem:[%s2794 + $0x6c] sm:$0xf]
        %v3109 = vld [vmem:[%s2794 + $0x70] sm:$0xf]
        %v3110 = vld [vmem:[%s2794 + $0x74] sm:$0x1]
        %v3111 = vld [vmem:[%s2794 + $0x78] sm:$0xf]
        %v3112 = vld [vmem:[%s2794 + $0x7c] sm:$0xf]
        %v3113 = vld [vmem:[%s2794 + $0x80] sm:$0x1]
        %v3114 = vld [vmem:[%s2794 + $0x84] sm:$0xf]
        %v3115 = vld [vmem:[%s2794 + $0x88] sm:$0xf]
        %v3116 = vld [vmem:[%s2794 + $0x8c] sm:$0x1]
        %v3117 = vld [vmem:[%s2794 + $0x90] sm:$0xf]
        %v3118 = vld [vmem:[%s2794 + $0x94] sm:$0xf]
        %v3119 = vld [vmem:[%s2794 + $0x98] sm:$0x1]
        %v3120 = vld [vmem:[%s2794 + $0x9c] sm:$0xf]
        %v3121 = vld [vmem:[%s2794 + $0xa0] sm:$0xf]
        %v3122 = vld [vmem:[%s2794 + $0xa4] sm:$0x1]
        %v3123 = vld [vmem:[%s2794 + $0xa8] sm:$0xf]
        %v3124 = vld [vmem:[%s2794 + $0xac] sm:$0xf]
        %v3125 = vld [vmem:[%s2794 + $0xb0] sm:$0x1]
        %v3126 = vld [vmem:[%s2794 + $0xb4] sm:$0xf]
        %v3127 = vld [vmem:[%s2794 + $0xb8] sm:$0xf]
        %v3128 = vld [vmem:[%s2794 + $0xbc] sm:$0x1]
        %v3130 = vshrl.u32 %v3081, 16
        %v3132 = vrot.slane %v3130, 4
        %v3133 = vshll.u32 %v3081, 16
        %v3135 = vrot.slane %v3133, 5
        %v3136 = vor.u32 %v3132, %v3135
        %v3137 = vrot.slane %v3136, 4
        %v3139 = vshll.u32 %v3082, 16
        %v3141 = vrot.slane %v3139, 5
        %v3142 = vsel %vm267, %v3137, %v3141
        %v3143 = vshrl.u32 %v3082, 16
        %v3145 = vrot.slane %v3143, 4
        %v3146 = vor.u32 %v3145, %v3141
        %v3147 = vrot.slane %v3146, 4
        %v3149 = vshll.u32 %v3083, 16
        %v3151 = vrot.slane %v3149, 5
        %v3152 = vsel %vm267, %v3147, %v3151
        %v3154 = vshrl.u32 %v3084, 16
        %v3156 = vrot.slane %v3154, 4
        %v3157 = vshll.u32 %v3084, 16
        %v3159 = vrot.slane %v3157, 5
        %v3160 = vor.u32 %v3156, %v3159
        %v3161 = vrot.slane %v3160, 4
        %v3163 = vshll.u32 %v3085, 16
        %v3165 = vrot.slane %v3163, 5
        %v3166 = vsel %vm267, %v3161, %v3165
        %v3167 = vshrl.u32 %v3085, 16
        %v3169 = vrot.slane %v3167, 4
        %v3170 = vor.u32 %v3169, %v3165
        %v3171 = vrot.slane %v3170, 4
        %v3173 = vshll.u32 %v3086, 16
        %v3175 = vrot.slane %v3173, 5
        %v3176 = vsel %vm267, %v3171, %v3175
        %v3178 = vshrl.u32 %v3087, 16
        %v3180 = vrot.slane %v3178, 4
        %v3181 = vshll.u32 %v3087, 16
        %v3183 = vrot.slane %v3181, 5
        %v3184 = vor.u32 %v3180, %v3183
        %v3185 = vrot.slane %v3184, 4
        %v3187 = vshll.u32 %v3088, 16
        %v3189 = vrot.slane %v3187, 5
        %v3190 = vsel %vm267, %v3185, %v3189
        %v3191 = vshrl.u32 %v3088, 16
        %v3193 = vrot.slane %v3191, 4
        %v3194 = vor.u32 %v3193, %v3189
        %v3195 = vrot.slane %v3194, 4
        %v3197 = vshll.u32 %v3089, 16
        %v3199 = vrot.slane %v3197, 5
        %v3200 = vsel %vm267, %v3195, %v3199
        %v3202 = vshrl.u32 %v3090, 16
        %v3204 = vrot.slane %v3202, 4
        %v3205 = vshll.u32 %v3090, 16
        %v3207 = vrot.slane %v3205, 5
        %v3208 = vor.u32 %v3204, %v3207
        %v3209 = vrot.slane %v3208, 4
        %v3211 = vshll.u32 %v3091, 16
        %v3213 = vrot.slane %v3211, 5
        %v3214 = vsel %vm267, %v3209, %v3213
        %v3215 = vshrl.u32 %v3091, 16
        %v3217 = vrot.slane %v3215, 4
        %v3218 = vor.u32 %v3217, %v3213
        %v3219 = vrot.slane %v3218, 4
        %v3221 = vshll.u32 %v3092, 16
        %v3223 = vrot.slane %v3221, 5
        %v3224 = vsel %vm267, %v3219, %v3223
        %v3226 = vshrl.u32 %v3093, 16
        %v3228 = vrot.slane %v3226, 4
        %v3229 = vshll.u32 %v3093, 16
        %v3231 = vrot.slane %v3229, 5
        %v3232 = vor.u32 %v3228, %v3231
        %v3233 = vrot.slane %v3232, 4
        %v3235 = vshll.u32 %v3094, 16
        %v3237 = vrot.slane %v3235, 5
        %v3238 = vsel %vm267, %v3233, %v3237
        %v3239 = vshrl.u32 %v3094, 16
        %v3241 = vrot.slane %v3239, 4
        %v3242 = vor.u32 %v3241, %v3237
        %v3243 = vrot.slane %v3242, 4
        %v3245 = vshll.u32 %v3095, 16
        %v3247 = vrot.slane %v3245, 5
        %v3248 = vsel %vm267, %v3243, %v3247
        %v3250 = vshrl.u32 %v3096, 16
        %v3252 = vrot.slane %v3250, 4
        %v3253 = vshll.u32 %v3096, 16
        %v3255 = vrot.slane %v3253, 5
        %v3256 = vor.u32 %v3252, %v3255
        %v3257 = vrot.slane %v3256, 4
        %v3259 = vshll.u32 %v3097, 16
        %v3261 = vrot.slane %v3259, 5
        %v3262 = vsel %vm267, %v3257, %v3261
        %v3263 = vshrl.u32 %v3097, 16
        %v3265 = vrot.slane %v3263, 4
        %v3266 = vor.u32 %v3265, %v3261
        %v3267 = vrot.slane %v3266, 4
        %v3269 = vshll.u32 %v3098, 16
        %v3271 = vrot.slane %v3269, 5
        %v3272 = vsel %vm267, %v3267, %v3271
        %v3274 = vshrl.u32 %v3099, 16
        %v3276 = vrot.slane %v3274, 4
        %v3277 = vshll.u32 %v3099, 16
        %v3279 = vrot.slane %v3277, 5
        %v3280 = vor.u32 %v3276, %v3279
        %v3281 = vrot.slane %v3280, 4
        %v3283 = vshll.u32 %v3100, 16
        %v3285 = vrot.slane %v3283, 5
        %v3286 = vsel %vm267, %v3281, %v3285
        %v3287 = vshrl.u32 %v3100, 16
        %v3289 = vrot.slane %v3287, 4
        %v3290 = vor.u32 %v3289, %v3285
        %v3291 = vrot.slane %v3290, 4
        %v3293 = vshll.u32 %v3101, 16
        %v3295 = vrot.slane %v3293, 5
        %v3296 = vsel %vm267, %v3291, %v3295
        %v3298 = vshrl.u32 %v3102, 16
        %v3300 = vrot.slane %v3298, 4
        %v3301 = vshll.u32 %v3102, 16
        %v3303 = vrot.slane %v3301, 5
        %v3304 = vor.u32 %v3300, %v3303
        %v3305 = vrot.slane %v3304, 4
        %v3307 = vshll.u32 %v3103, 16
        %v3309 = vrot.slane %v3307, 5
        %v3310 = vsel %vm267, %v3305, %v3309
        %v3311 = vshrl.u32 %v3103, 16
        %v3313 = vrot.slane %v3311, 4
        %v3314 = vor.u32 %v3313, %v3309
        %v3315 = vrot.slane %v3314, 4
        %v3317 = vshll.u32 %v3104, 16
        %v3319 = vrot.slane %v3317, 5
        %v3320 = vsel %vm267, %v3315, %v3319
        %v3322 = vshrl.u32 %v3105, 16
        %v3324 = vrot.slane %v3322, 4
        %v3325 = vshll.u32 %v3105, 16
        %v3327 = vrot.slane %v3325, 5
        %v3328 = vor.u32 %v3324, %v3327
        %v3329 = vrot.slane %v3328, 4
        %v3331 = vshll.u32 %v3106, 16
        %v3333 = vrot.slane %v3331, 5
        %v3334 = vsel %vm267, %v3329, %v3333
        %v3335 = vshrl.u32 %v3106, 16
        %v3337 = vrot.slane %v3335, 4
        %v3338 = vor.u32 %v3337, %v3333
        %v3339 = vrot.slane %v3338, 4
        %v3341 = vshll.u32 %v3107, 16
        %v3343 = vrot.slane %v3341, 5
        %v3344 = vsel %vm267, %v3339, %v3343
        %v3346 = vshrl.u32 %v3108, 16
        %v3348 = vrot.slane %v3346, 4
        %v3349 = vshll.u32 %v3108, 16
        %v3351 = vrot.slane %v3349, 5
        %v3352 = vor.u32 %v3348, %v3351
        %v3353 = vrot.slane %v3352, 4
        %v3355 = vshll.u32 %v3109, 16
        %v3357 = vrot.slane %v3355, 5
        %v3358 = vsel %vm267, %v3353, %v3357
        %v3359 = vshrl.u32 %v3109, 16
        %v3361 = vrot.slane %v3359, 4
        %v3362 = vor.u32 %v3361, %v3357
        %v3363 = vrot.slane %v3362, 4
        %v3365 = vshll.u32 %v3110, 16
        %v3367 = vrot.slane %v3365, 5
        %v3368 = vsel %vm267, %v3363, %v3367
        %v3370 = vshrl.u32 %v3111, 16
        %v3372 = vrot.slane %v3370, 4
        %v3373 = vshll.u32 %v3111, 16
        %v3375 = vrot.slane %v3373, 5
        %v3376 = vor.u32 %v3372, %v3375
        %v3377 = vrot.slane %v3376, 4
        %v3379 = vshll.u32 %v3112, 16
        %v3381 = vrot.slane %v3379, 5
        %v3382 = vsel %vm267, %v3377, %v3381
        %v3383 = vshrl.u32 %v3112, 16
        %v3385 = vrot.slane %v3383, 4
        %v3386 = vor.u32 %v3385, %v3381
        %v3387 = vrot.slane %v3386, 4
        %v3389 = vshll.u32 %v3113, 16
        %v3391 = vrot.slane %v3389, 5
        %v3392 = vsel %vm267, %v3387, %v3391
        %v3394 = vshrl.u32 %v3114, 16
        %v3396 = vrot.slane %v3394, 4
        %v3397 = vshll.u32 %v3114, 16
        %v3399 = vrot.slane %v3397, 5
        %v3400 = vor.u32 %v3396, %v3399
        %v3401 = vrot.slane %v3400, 4
        %v3403 = vshll.u32 %v3115, 16
        %v3405 = vrot.slane %v3403, 5
        %v3406 = vsel %vm267, %v3401, %v3405
        %v3407 = vshrl.u32 %v3115, 16
        %v3409 = vrot.slane %v3407, 4
        %v3410 = vor.u32 %v3409, %v3405
        %v3411 = vrot.slane %v3410, 4
        %v3413 = vshll.u32 %v3116, 16
        %v3415 = vrot.slane %v3413, 5
        %v3416 = vsel %vm267, %v3411, %v3415
        %v3418 = vshrl.u32 %v3117, 16
        %v3420 = vrot.slane %v3418, 4
        %v3421 = vshll.u32 %v3117, 16
        %v3423 = vrot.slane %v3421, 5
        %v3424 = vor.u32 %v3420, %v3423
        %v3425 = vrot.slane %v3424, 4
        %v3427 = vshll.u32 %v3118, 16
        %v3429 = vrot.slane %v3427, 5
        %v3430 = vsel %vm267, %v3425, %v3429
        %v3431 = vshrl.u32 %v3118, 16
        %v3433 = vrot.slane %v3431, 4
        %v3434 = vor.u32 %v3433, %v3429
        %v3435 = vrot.slane %v3434, 4
        %v3437 = vshll.u32 %v3119, 16
        %v3439 = vrot.slane %v3437, 5
        %v3440 = vsel %vm267, %v3435, %v3439
        %v3442 = vshrl.u32 %v3120, 16
        %v3444 = vrot.slane %v3442, 4
        %v3445 = vshll.u32 %v3120, 16
        %v3447 = vrot.slane %v3445, 5
        %v3448 = vor.u32 %v3444, %v3447
        %v3449 = vrot.slane %v3448, 4
        %v3451 = vshll.u32 %v3121, 16
        %v3453 = vrot.slane %v3451, 5
        %v3454 = vsel %vm267, %v3449, %v3453
        %v3455 = vshrl.u32 %v3121, 16
        %v3457 = vrot.slane %v3455, 4
        %v3458 = vor.u32 %v3457, %v3453
        %v3459 = vrot.slane %v3458, 4
        %v3461 = vshll.u32 %v3122, 16
        %v3463 = vrot.slane %v3461, 5
        %v3464 = vsel %vm267, %v3459, %v3463
        %v3466 = vshrl.u32 %v3123, 16
        %v3468 = vrot.slane %v3466, 4
        %v3469 = vshll.u32 %v3123, 16
        %v3471 = vrot.slane %v3469, 5
        %v3472 = vor.u32 %v3468, %v3471
        %v3473 = vrot.slane %v3472, 4
        %v3475 = vshll.u32 %v3124, 16
        %v3477 = vrot.slane %v3475, 5
        %v3478 = vsel %vm267, %v3473, %v3477
        %v3479 = vshrl.u32 %v3124, 16
        %v3481 = vrot.slane %v3479, 4
        %v3482 = vor.u32 %v3481, %v3477
        %v3483 = vrot.slane %v3482, 4
        %v3485 = vshll.u32 %v3125, 16
        %v3487 = vrot.slane %v3485, 5
        %v3488 = vsel %vm267, %v3483, %v3487
        %v3490 = vshrl.u32 %v3126, 16
        %v3492 = vrot.slane %v3490, 4
        %v3493 = vshll.u32 %v3126, 16
        %v3495 = vrot.slane %v3493, 5
        %v3496 = vor.u32 %v3492, %v3495
        %v3497 = vrot.slane %v3496, 4
        %v3499 = vshll.u32 %v3127, 16
        %v3501 = vrot.slane %v3499, 5
        %v3502 = vsel %vm267, %v3497, %v3501
        %v3503 = vshrl.u32 %v3127, 16
        %v3505 = vrot.slane %v3503, 4
        %v3506 = vor.u32 %v3505, %v3501
        %v3507 = vrot.slane %v3506, 4
        %v3509 = vshll.u32 %v3128, 16
        %v3511 = vrot.slane %v3509, 5
        %v3512 = vsel %vm267, %v3507, %v3511
        %s3513 = scalar_lea.vmem %s1, 14
        %v3514 = vld [vmem:[%s3513] sm:$0x3]
        %v3515 = vunpack.c.l.b16 %v3142
        %v3516 = vunpack.c.l.b16 %v3152
        %v3517 = vunpack.c.l.b16 %v3166
        %v3518 = vunpack.c.l.b16 %v3176
        %v3519 = vunpack.c.l.b16 %v3190
        %v3520 = vunpack.c.l.b16 %v3200
        %v3521 = vunpack.c.l.b16 %v3214
        %v3522 = vunpack.c.l.b16 %v3224
        %v3523 = vunpack.c.l.b16 %v3238
        %v3524 = vunpack.c.l.b16 %v3248
        %v3525 = vunpack.c.l.b16 %v3262
        %v3526 = vunpack.c.l.b16 %v3272
        %v3527 = vunpack.c.l.b16 %v3286
        %v3528 = vunpack.c.l.b16 %v3296
        %v3529 = vunpack.c.l.b16 %v3310
        %v3530 = vunpack.c.l.b16 %v3320
        %v3531 = vunpack.c.l.b16 %v3334
        %v3532 = vunpack.c.l.b16 %v3344
        %v3533 = vunpack.c.l.b16 %v3358
        %v3534 = vunpack.c.l.b16 %v3368
        %v3535 = vunpack.c.l.b16 %v3382
        %v3536 = vunpack.c.l.b16 %v3392
        %v3537 = vunpack.c.l.b16 %v3406
        %v3538 = vunpack.c.l.b16 %v3416
        %v3539 = vunpack.c.l.b16 %v3430
        %v3540 = vunpack.c.l.b16 %v3440
        %v3541 = vunpack.c.l.b16 %v3454
        %v3542 = vunpack.c.l.b16 %v3464
        %v3543 = vunpack.c.l.b16 %v3478
        %v3544 = vunpack.c.l.b16 %v3488
        %v3545 = vunpack.c.l.b16 %v3502
        %v3546 = vunpack.c.l.b16 %v3512
        %v3547 = vpack.c.b16 %v3516, %v3515
        %v3548 = vpack.c.b16 %v3518, %v3517
        %v3549 = vpack.c.b16 %v3520, %v3519
        %v3550 = vpack.c.b16 %v3522, %v3521
        %v3551 = vpack.c.b16 %v3524, %v3523
        %v3552 = vpack.c.b16 %v3526, %v3525
        %v3553 = vpack.c.b16 %v3528, %v3527
        %v3554 = vpack.c.b16 %v3530, %v3529
        %v3555 = vpack.c.b16 %v3532, %v3531
        %v3556 = vpack.c.b16 %v3534, %v3533
        %v3557 = vpack.c.b16 %v3536, %v3535
        %v3558 = vpack.c.b16 %v3538, %v3537
        %v3559 = vpack.c.b16 %v3540, %v3539
        %v3560 = vpack.c.b16 %v3542, %v3541
        %v3561 = vpack.c.b16 %v3544, %v3543
        %v3562 = vpack.c.b16 %v3546, %v3545
        %v3564 = vsel %vm702, %v3547, 0
        %v3567 = vsel %vm702, %v3548, 0
        %v3570 = vsel %vm702, %v3549, 0
        %v3573 = vsel %vm702, %v3550, 0
        %v3576 = vsel %vm702, %v3551, 0
        %v3579 = vsel %vm702, %v3552, 0
        %v3582 = vsel %vm702, %v3553, 0
        %v3585 = vsel %vm702, %v3554, 0
        %v3588 = vsel %vm702, %v3555, 0
        %v3591 = vsel %vm702, %v3556, 0
        %v3594 = vsel %vm702, %v3557, 0
        %v3597 = vsel %vm702, %v3558, 0
        %v3600 = vsel %vm702, %v3559, 0
        %v3603 = vsel %vm702, %v3560, 0
        %v3606 = vsel %vm702, %v3561, 0
        %v3609 = vsel %vm702, %v3562, 0
        %v3612 = vsel %vm751, %v3514, 0
        %3614 = vmatpush.bf16.msra.mxu0 0
        %3615 = vmatpush.bf16.msra.mxu0 0
        %3616 = vmatpush.bf16.msra.mxu0 0
        %3617 = vmatpush.bf16.msra.mxu0 0
        %3618 = vmatpush.bf16.msra.mxu0 0
        %3619 = vmatpush.bf16.msra.mxu0 0
        %3620 = vmatpush.bf16.msra.mxu0 0
        %3621 = vmatpush.bf16.msra.mxu0 %v3612
        %3622 = vmatmul.bf16.gmra.mxu0 %v3564
        %v3623 = vpop.f32.mrf.mxu0
        %v3624 = vadd.f32 0.0, %v3623
        %v3625 = vpop.f32.mrf.mxu0
        %v3626 = vadd.f32 0.0, %v3625
        %3627 = vmatmul.bf16.gmra.mxu0 %v3567
        %v3628 = vpop.f32.mrf.mxu0
        %v3629 = vadd.f32 0.0, %v3628
        %v3630 = vpop.f32.mrf.mxu0
        %v3631 = vadd.f32 0.0, %v3630
        %3632 = vmatmul.bf16.gmra.mxu0 %v3570
        %v3633 = vpop.f32.mrf.mxu0
        %v3634 = vadd.f32 0.0, %v3633
        %v3635 = vpop.f32.mrf.mxu0
        %v3636 = vadd.f32 0.0, %v3635
        %3637 = vmatmul.bf16.gmra.mxu0 %v3573
        %v3638 = vpop.f32.mrf.mxu0
        %v3639 = vadd.f32 0.0, %v3638
        %v3640 = vpop.f32.mrf.mxu0
        %v3641 = vadd.f32 0.0, %v3640
        %3642 = vmatmul.bf16.gmra.mxu0 %v3576
        %v3643 = vpop.f32.mrf.mxu0
        %v3644 = vadd.f32 0.0, %v3643
        %v3645 = vpop.f32.mrf.mxu0
        %v3646 = vadd.f32 0.0, %v3645
        %3647 = vmatmul.bf16.gmra.mxu0 %v3579
        %v3648 = vpop.f32.mrf.mxu0
        %v3649 = vadd.f32 0.0, %v3648
        %v3650 = vpop.f32.mrf.mxu0
        %v3651 = vadd.f32 0.0, %v3650
        %3652 = vmatmul.bf16.gmra.mxu0 %v3582
        %v3653 = vpop.f32.mrf.mxu0
        %v3654 = vadd.f32 0.0, %v3653
        %v3655 = vpop.f32.mrf.mxu0
        %v3656 = vadd.f32 0.0, %v3655
        %3657 = vmatmul.bf16.gmra.mxu0 %v3585
        %v3658 = vpop.f32.mrf.mxu0
        %v3659 = vadd.f32 0.0, %v3658
        %v3660 = vpop.f32.mrf.mxu0
        %v3661 = vadd.f32 0.0, %v3660
        %3662 = vmatmul.bf16.gmra.mxu0 %v3588
        %v3663 = vpop.f32.mrf.mxu0
        %v3664 = vadd.f32 0.0, %v3663
        %v3665 = vpop.f32.mrf.mxu0
        %v3666 = vadd.f32 0.0, %v3665
        %3667 = vmatmul.bf16.gmra.mxu0 %v3591
        %v3668 = vpop.f32.mrf.mxu0
        %v3669 = vadd.f32 0.0, %v3668
        %v3670 = vpop.f32.mrf.mxu0
        %v3671 = vadd.f32 0.0, %v3670
        %3672 = vmatmul.bf16.gmra.mxu0 %v3594
        %v3673 = vpop.f32.mrf.mxu0
        %v3674 = vadd.f32 0.0, %v3673
        %v3675 = vpop.f32.mrf.mxu0
        %v3676 = vadd.f32 0.0, %v3675
        %3677 = vmatmul.bf16.gmra.mxu0 %v3597
        %v3678 = vpop.f32.mrf.mxu0
        %v3679 = vadd.f32 0.0, %v3678
        %v3680 = vpop.f32.mrf.mxu0
        %v3681 = vadd.f32 0.0, %v3680
        %3682 = vmatmul.bf16.gmra.mxu0 %v3600
        %v3683 = vpop.f32.mrf.mxu0
        %v3684 = vadd.f32 0.0, %v3683
        %v3685 = vpop.f32.mrf.mxu0
        %v3686 = vadd.f32 0.0, %v3685
        %3687 = vmatmul.bf16.gmra.mxu0 %v3603
        %v3688 = vpop.f32.mrf.mxu0
        %v3689 = vadd.f32 0.0, %v3688
        %v3690 = vpop.f32.mrf.mxu0
        %v3691 = vadd.f32 0.0, %v3690
        %3692 = vmatmul.bf16.gmra.mxu0 %v3606
        %v3693 = vpop.f32.mrf.mxu0
        %v3694 = vadd.f32 0.0, %v3693
        %v3695 = vpop.f32.mrf.mxu0
        %v3696 = vadd.f32 0.0, %v3695
        %3697 = vmatmul.bf16.gmra.mxu0 %v3609
        %v3698 = vpop.f32.mrf.mxu0
        %v3699 = vadd.f32 0.0, %v3698
        %v3700 = vpop.f32.mrf.mxu0
        %v3701 = vadd.f32 0.0, %v3700
        %3702 = vdwg.mxu0
        %v3703 = vadd.f32 %v3049, %v3624
        %v3704 = vadd.f32 %v3050, %v3626
        %v3705 = vadd.f32 %v3051, %v3629
        %v3706 = vadd.f32 %v3052, %v3631
        %v3707 = vadd.f32 %v3053, %v3634
        %v3708 = vadd.f32 %v3054, %v3636
        %v3709 = vadd.f32 %v3055, %v3639
        %v3710 = vadd.f32 %v3056, %v3641
        %v3711 = vadd.f32 %v3057, %v3644
        %v3712 = vadd.f32 %v3058, %v3646
        %v3713 = vadd.f32 %v3059, %v3649
        %v3714 = vadd.f32 %v3060, %v3651
        %v3715 = vadd.f32 %v3061, %v3654
        %v3716 = vadd.f32 %v3062, %v3656
        %v3717 = vadd.f32 %v3063, %v3659
        %v3718 = vadd.f32 %v3064, %v3661
        %v3719 = vadd.f32 %v3065, %v3664
        %v3720 = vadd.f32 %v3066, %v3666
        %v3721 = vadd.f32 %v3067, %v3669
        %v3722 = vadd.f32 %v3068, %v3671
        %v3723 = vadd.f32 %v3069, %v3674
        %v3724 = vadd.f32 %v3070, %v3676
        %v3725 = vadd.f32 %v3071, %v3679
        %v3726 = vadd.f32 %v3072, %v3681
        %v3727 = vadd.f32 %v3073, %v3684
        %v3728 = vadd.f32 %v3074, %v3686
        %v3729 = vadd.f32 %v3075, %v3689
        %v3730 = vadd.f32 %v3076, %v3691
        %v3731 = vadd.f32 %v3077, %v3694
        %v3732 = vadd.f32 %v3078, %v3696
        %v3733 = vadd.f32 %v3079, %v3699
        %v3734 = vadd.f32 %v3080, %v3701
        %v3735 = vld [vmem:[%s2794] sm:$0xe]
        %v3736 = vld [vmem:[%s2794 + $0xc] sm:$0xe]
        %v3737 = vld [vmem:[%s2794 + $0x18] sm:$0xe]
        %v3738 = vld [vmem:[%s2794 + $0x24] sm:$0xe]
        %v3739 = vld [vmem:[%s2794 + $0x30] sm:$0xe]
        %v3740 = vld [vmem:[%s2794 + $0x3c] sm:$0xe]
        %v3741 = vld [vmem:[%s2794 + $0x48] sm:$0xe]
        %v3742 = vld [vmem:[%s2794 + $0x54] sm:$0xe]
        %v3743 = vld [vmem:[%s2794 + $0x60] sm:$0xe]
        %v3744 = vld [vmem:[%s2794 + $0x6c] sm:$0xe]
        %v3745 = vld [vmem:[%s2794 + $0x78] sm:$0xe]
        %v3746 = vld [vmem:[%s2794 + $0x84] sm:$0xe]
        %v3747 = vld [vmem:[%s2794 + $0x90] sm:$0xe]
        %v3748 = vld [vmem:[%s2794 + $0x9c] sm:$0xe]
        %v3749 = vld [vmem:[%s2794 + $0xa8] sm:$0xe]
        %v3750 = vld [vmem:[%s2794 + $0xb4] sm:$0xe]
        %v3799 = vrot.slane %v3735, 5
        %v3800 = vrot.slane %v3799, 4
        %v3801 = vrot.slane %v3082, 5
        %v3802 = vsel %vm1114, %v3800, %v3801
        %v3803 = vrot.slane %v3801, 4
        %v3804 = vrot.slane %v3083, 5
        %v3805 = vsel %vm1114, %v3803, %v3804
        %v3806 = vrot.slane %v3736, 5
        %v3807 = vrot.slane %v3806, 4
        %v3808 = vrot.slane %v3085, 5
        %v3809 = vsel %vm1114, %v3807, %v3808
        %v3810 = vrot.slane %v3808, 4
        %v3811 = vrot.slane %v3086, 5
        %v3812 = vsel %vm1114, %v3810, %v3811
        %v3813 = vrot.slane %v3737, 5
        %v3814 = vrot.slane %v3813, 4
        %v3815 = vrot.slane %v3088, 5
        %v3816 = vsel %vm1114, %v3814, %v3815
        %v3817 = vrot.slane %v3815, 4
        %v3818 = vrot.slane %v3089, 5
        %v3819 = vsel %vm1114, %v3817, %v3818
        %v3820 = vrot.slane %v3738, 5
        %v3821 = vrot.slane %v3820, 4
        %v3822 = vrot.slane %v3091, 5
        %v3823 = vsel %vm1114, %v3821, %v3822
        %v3824 = vrot.slane %v3822, 4
        %v3825 = vrot.slane %v3092, 5
        %v3826 = vsel %vm1114, %v3824, %v3825
        %v3827 = vrot.slane %v3739, 5
        %v3828 = vrot.slane %v3827, 4
        %v3829 = vrot.slane %v3094, 5
        %v3830 = vsel %vm1114, %v3828, %v3829
        %v3831 = vrot.slane %v3829, 4
        %v3832 = vrot.slane %v3095, 5
        %v3833 = vsel %vm1114, %v3831, %v3832
        %v3834 = vrot.slane %v3740, 5
        %v3835 = vrot.slane %v3834, 4
        %v3836 = vrot.slane %v3097, 5
        %v3837 = vsel %vm1114, %v3835, %v3836
        %v3838 = vrot.slane %v3836, 4
        %v3839 = vrot.slane %v3098, 5
        %v3840 = vsel %vm1114, %v3838, %v3839
        %v3841 = vrot.slane %v3741, 5
        %v3842 = vrot.slane %v3841, 4
        %v3843 = vrot.slane %v3100, 5
        %v3844 = vsel %vm1114, %v3842, %v3843
        %v3845 = vrot.slane %v3843, 4
        %v3846 = vrot.slane %v3101, 5
        %v3847 = vsel %vm1114, %v3845, %v3846
        %v3848 = vrot.slane %v3742, 5
        %v3849 = vrot.slane %v3848, 4
        %v3850 = vrot.slane %v3103, 5
        %v3851 = vsel %vm1114, %v3849, %v3850
        %v3852 = vrot.slane %v3850, 4
        %v3853 = vrot.slane %v3104, 5
        %v3854 = vsel %vm1114, %v3852, %v3853
        %v3855 = vrot.slane %v3743, 5
        %v3856 = vrot.slane %v3855, 4
        %v3857 = vrot.slane %v3106, 5
        %v3858 = vsel %vm1114, %v3856, %v3857
        %v3859 = vrot.slane %v3857, 4
        %v3860 = vrot.slane %v3107, 5
        %v3861 = vsel %vm1114, %v3859, %v3860
        %v3862 = vrot.slane %v3744, 5
        %v3863 = vrot.slane %v3862, 4
        %v3864 = vrot.slane %v3109, 5
        %v3865 = vsel %vm1114, %v3863, %v3864
        %v3866 = vrot.slane %v3864, 4
        %v3867 = vrot.slane %v3110, 5
        %v3868 = vsel %vm1114, %v3866, %v3867
        %v3869 = vrot.slane %v3745, 5
        %v3870 = vrot.slane %v3869, 4
        %v3871 = vrot.slane %v3112, 5
        %v3872 = vsel %vm1114, %v3870, %v3871
        %v3873 = vrot.slane %v3871, 4
        %v3874 = vrot.slane %v3113, 5
        %v3875 = vsel %vm1114, %v3873, %v3874
        %v3876 = vrot.slane %v3746, 5
        %v3877 = vrot.slane %v3876, 4
        %v3878 = vrot.slane %v3115, 5
        %v3879 = vsel %vm1114, %v3877, %v3878
        %v3880 = vrot.slane %v3878, 4
        %v3881 = vrot.slane %v3116, 5
        %v3882 = vsel %vm1114, %v3880, %v3881
        %v3883 = vrot.slane %v3747, 5
        %v3884 = vrot.slane %v3883, 4
        %v3885 = vrot.slane %v3118, 5
        %v3886 = vsel %vm1114, %v3884, %v3885
        %v3887 = vrot.slane %v3885, 4
        %v3888 = vrot.slane %v3119, 5
        %v3889 = vsel %vm1114, %v3887, %v3888
        %v3890 = vrot.slane %v3748, 5
        %v3891 = vrot.slane %v3890, 4
        %v3892 = vrot.slane %v3121, 5
        %v3893 = vsel %vm1114, %v3891, %v3892
        %v3894 = vrot.slane %v3892, 4
        %v3895 = vrot.slane %v3122, 5
        %v3896 = vsel %vm1114, %v3894, %v3895
        %v3897 = vrot.slane %v3749, 5
        %v3898 = vrot.slane %v3897, 4
        %v3899 = vrot.slane %v3124, 5
        %v3900 = vsel %vm1114, %v3898, %v3899
        %v3901 = vrot.slane %v3899, 4
        %v3902 = vrot.slane %v3125, 5
        %v3903 = vsel %vm1114, %v3901, %v3902
        %v3904 = vrot.slane %v3750, 5
        %v3905 = vrot.slane %v3904, 4
        %v3906 = vrot.slane %v3127, 5
        %v3907 = vsel %vm1114, %v3905, %v3906
        %v3908 = vrot.slane %v3906, 4
        %v3909 = vrot.slane %v3128, 5
        %v3910 = vsel %vm1114, %v3908, %v3909
        %s3911 = scalar_lea.vmem %s1, 16
        %v3912 = vld [vmem:[%s3911] sm:$0x3]
        %v3913 = vunpack.c.l.b16 %v3802
        %v3914 = vunpack.c.l.b16 %v3805
        %v3915 = vunpack.c.l.b16 %v3809
        %v3916 = vunpack.c.l.b16 %v3812
        %v3917 = vunpack.c.l.b16 %v3816
        %v3918 = vunpack.c.l.b16 %v3819
        %v3919 = vunpack.c.l.b16 %v3823
        %v3920 = vunpack.c.l.b16 %v3826
        %v3921 = vunpack.c.l.b16 %v3830
        %v3922 = vunpack.c.l.b16 %v3833
        %v3923 = vunpack.c.l.b16 %v3837
        %v3924 = vunpack.c.l.b16 %v3840
        %v3925 = vunpack.c.l.b16 %v3844
        %v3926 = vunpack.c.l.b16 %v3847
        %v3927 = vunpack.c.l.b16 %v3851
        %v3928 = vunpack.c.l.b16 %v3854
        %v3929 = vunpack.c.l.b16 %v3858
        %v3930 = vunpack.c.l.b16 %v3861
        %v3931 = vunpack.c.l.b16 %v3865
        %v3932 = vunpack.c.l.b16 %v3868
        %v3933 = vunpack.c.l.b16 %v3872
        %v3934 = vunpack.c.l.b16 %v3875
        %v3935 = vunpack.c.l.b16 %v3879
        %v3936 = vunpack.c.l.b16 %v3882
        %v3937 = vunpack.c.l.b16 %v3886
        %v3938 = vunpack.c.l.b16 %v3889
        %v3939 = vunpack.c.l.b16 %v3893
        %v3940 = vunpack.c.l.b16 %v3896
        %v3941 = vunpack.c.l.b16 %v3900
        %v3942 = vunpack.c.l.b16 %v3903
        %v3943 = vunpack.c.l.b16 %v3907
        %v3944 = vunpack.c.l.b16 %v3910
        %v3945 = vpack.c.b16 %v3914, %v3913
        %v3946 = vpack.c.b16 %v3916, %v3915
        %v3947 = vpack.c.b16 %v3918, %v3917
        %v3948 = vpack.c.b16 %v3920, %v3919
        %v3949 = vpack.c.b16 %v3922, %v3921
        %v3950 = vpack.c.b16 %v3924, %v3923
        %v3951 = vpack.c.b16 %v3926, %v3925
        %v3952 = vpack.c.b16 %v3928, %v3927
        %v3953 = vpack.c.b16 %v3930, %v3929
        %v3954 = vpack.c.b16 %v3932, %v3931
        %v3955 = vpack.c.b16 %v3934, %v3933
        %v3956 = vpack.c.b16 %v3936, %v3935
        %v3957 = vpack.c.b16 %v3938, %v3937
        %v3958 = vpack.c.b16 %v3940, %v3939
        %v3959 = vpack.c.b16 %v3942, %v3941
        %v3960 = vpack.c.b16 %v3944, %v3943
        %v3962 = vsel %vm702, %v3945, 0
        %v3965 = vsel %vm702, %v3946, 0
        %v3968 = vsel %vm702, %v3947, 0
        %v3971 = vsel %vm702, %v3948, 0
        %v3974 = vsel %vm702, %v3949, 0
        %v3977 = vsel %vm702, %v3950, 0
        %v3980 = vsel %vm702, %v3951, 0
        %v3983 = vsel %vm702, %v3952, 0
        %v3986 = vsel %vm702, %v3953, 0
        %v3989 = vsel %vm702, %v3954, 0
        %v3992 = vsel %vm702, %v3955, 0
        %v3995 = vsel %vm702, %v3956, 0
        %v3998 = vsel %vm702, %v3957, 0
        %v4001 = vsel %vm702, %v3958, 0
        %v4004 = vsel %vm702, %v3959, 0
        %v4007 = vsel %vm702, %v3960, 0
        %v4010 = vsel %vm751, %v3912, 0
        %4012 = vmatpush.bf16.msra.mxu0 0
        %4013 = vmatpush.bf16.msra.mxu0 0
        %4014 = vmatpush.bf16.msra.mxu0 0
        %4015 = vmatpush.bf16.msra.mxu0 0
        %4016 = vmatpush.bf16.msra.mxu0 0
        %4017 = vmatpush.bf16.msra.mxu0 0
        %4018 = vmatpush.bf16.msra.mxu0 0
        %4019 = vmatpush.bf16.msra.mxu0 %v4010
        %4020 = vmatmul.bf16.gmra.mxu0 %v3962
        %v4021 = vpop.f32.mrf.mxu0
        %v4022 = vadd.f32 0.0, %v4021
        %v4023 = vpop.f32.mrf.mxu0
        %v4024 = vadd.f32 0.0, %v4023
        %4025 = vmatmul.bf16.gmra.mxu0 %v3965
        %v4026 = vpop.f32.mrf.mxu0
        %v4027 = vadd.f32 0.0, %v4026
        %v4028 = vpop.f32.mrf.mxu0
        %v4029 = vadd.f32 0.0, %v4028
        %4030 = vmatmul.bf16.gmra.mxu0 %v3968
        %v4031 = vpop.f32.mrf.mxu0
        %v4032 = vadd.f32 0.0, %v4031
        %v4033 = vpop.f32.mrf.mxu0
        %v4034 = vadd.f32 0.0, %v4033
        %4035 = vmatmul.bf16.gmra.mxu0 %v3971
        %v4036 = vpop.f32.mrf.mxu0
        %v4037 = vadd.f32 0.0, %v4036
        %v4038 = vpop.f32.mrf.mxu0
        %v4039 = vadd.f32 0.0, %v4038
        %4040 = vmatmul.bf16.gmra.mxu0 %v3974
        %v4041 = vpop.f32.mrf.mxu0
        %v4042 = vadd.f32 0.0, %v4041
        %v4043 = vpop.f32.mrf.mxu0
        %v4044 = vadd.f32 0.0, %v4043
        %4045 = vmatmul.bf16.gmra.mxu0 %v3977
        %v4046 = vpop.f32.mrf.mxu0
        %v4047 = vadd.f32 0.0, %v4046
        %v4048 = vpop.f32.mrf.mxu0
        %v4049 = vadd.f32 0.0, %v4048
        %4050 = vmatmul.bf16.gmra.mxu0 %v3980
        %v4051 = vpop.f32.mrf.mxu0
        %v4052 = vadd.f32 0.0, %v4051
        %v4053 = vpop.f32.mrf.mxu0
        %v4054 = vadd.f32 0.0, %v4053
        %4055 = vmatmul.bf16.gmra.mxu0 %v3983
        %v4056 = vpop.f32.mrf.mxu0
        %v4057 = vadd.f32 0.0, %v4056
        %v4058 = vpop.f32.mrf.mxu0
        %v4059 = vadd.f32 0.0, %v4058
        %4060 = vmatmul.bf16.gmra.mxu0 %v3986
        %v4061 = vpop.f32.mrf.mxu0
        %v4062 = vadd.f32 0.0, %v4061
        %v4063 = vpop.f32.mrf.mxu0
        %v4064 = vadd.f32 0.0, %v4063
        %4065 = vmatmul.bf16.gmra.mxu0 %v3989
        %v4066 = vpop.f32.mrf.mxu0
        %v4067 = vadd.f32 0.0, %v4066
        %v4068 = vpop.f32.mrf.mxu0
        %v4069 = vadd.f32 0.0, %v4068
        %4070 = vmatmul.bf16.gmra.mxu0 %v3992
        %v4071 = vpop.f32.mrf.mxu0
        %v4072 = vadd.f32 0.0, %v4071
        %v4073 = vpop.f32.mrf.mxu0
        %v4074 = vadd.f32 0.0, %v4073
        %4075 = vmatmul.bf16.gmra.mxu0 %v3995
        %v4076 = vpop.f32.mrf.mxu0
        %v4077 = vadd.f32 0.0, %v4076
        %v4078 = vpop.f32.mrf.mxu0
        %v4079 = vadd.f32 0.0, %v4078
        %4080 = vmatmul.bf16.gmra.mxu0 %v3998
        %v4081 = vpop.f32.mrf.mxu0
        %v4082 = vadd.f32 0.0, %v4081
        %v4083 = vpop.f32.mrf.mxu0
        %v4084 = vadd.f32 0.0, %v4083
        %4085 = vmatmul.bf16.gmra.mxu0 %v4001
        %v4086 = vpop.f32.mrf.mxu0
        %v4087 = vadd.f32 0.0, %v4086
        %v4088 = vpop.f32.mrf.mxu0
        %v4089 = vadd.f32 0.0, %v4088
        %4090 = vmatmul.bf16.gmra.mxu0 %v4004
        %v4091 = vpop.f32.mrf.mxu0
        %v4092 = vadd.f32 0.0, %v4091
        %v4093 = vpop.f32.mrf.mxu0
        %v4094 = vadd.f32 0.0, %v4093
        %4095 = vmatmul.bf16.gmra.mxu0 %v4007
        %v4096 = vpop.f32.mrf.mxu0
        %v4097 = vadd.f32 0.0, %v4096
        %v4098 = vpop.f32.mrf.mxu0
        %v4099 = vadd.f32 0.0, %v4098
        %4100 = vdwg.mxu0
        %v4101 = vadd.f32 %v3703, %v4022
        %v4102 = vadd.f32 %v3704, %v4024
        %v4103 = vadd.f32 %v3705, %v4027
        %v4104 = vadd.f32 %v3706, %v4029
        %v4105 = vadd.f32 %v3707, %v4032
        %v4106 = vadd.f32 %v3708, %v4034
        %v4107 = vadd.f32 %v3709, %v4037
        %v4108 = vadd.f32 %v3710, %v4039
        %v4109 = vadd.f32 %v3711, %v4042
        %v4110 = vadd.f32 %v3712, %v4044
        %v4111 = vadd.f32 %v3713, %v4047
        %v4112 = vadd.f32 %v3714, %v4049
        %v4113 = vadd.f32 %v3715, %v4052
        %v4114 = vadd.f32 %v3716, %v4054
        %v4115 = vadd.f32 %v3717, %v4057
        %v4116 = vadd.f32 %v3718, %v4059
        %v4117 = vadd.f32 %v3719, %v4062
        %v4118 = vadd.f32 %v3720, %v4064
        %v4119 = vadd.f32 %v3721, %v4067
        %v4120 = vadd.f32 %v3722, %v4069
        %v4121 = vadd.f32 %v3723, %v4072
        %v4122 = vadd.f32 %v3724, %v4074
        %v4123 = vadd.f32 %v3725, %v4077
        %v4124 = vadd.f32 %v3726, %v4079
        %v4125 = vadd.f32 %v3727, %v4082
        %v4126 = vadd.f32 %v3728, %v4084
        %v4127 = vadd.f32 %v3729, %v4087
        %v4128 = vadd.f32 %v3730, %v4089
        %v4129 = vadd.f32 %v3731, %v4092
        %v4130 = vadd.f32 %v3732, %v4094
        %v4131 = vadd.f32 %v3733, %v4097
        %v4132 = vadd.f32 %v3734, %v4099
        %v4133 = vld [vmem:[%s2] sm:$0x1]
        %v4135 = vperm.slane %v4133, 0
        %v4137 = vmul.f32 %v4101, %v4135
        %v4138 = vmul.f32 %v4102, %v4135
        %v4139 = vmul.f32 %v4103, %v4135
        %v4140 = vmul.f32 %v4104, %v4135
        %v4141 = vmul.f32 %v4105, %v4135
        %v4142 = vmul.f32 %v4106, %v4135
        %v4143 = vmul.f32 %v4107, %v4135
        %v4144 = vmul.f32 %v4108, %v4135
        %v4145 = vmul.f32 %v4109, %v4135
        %v4146 = vmul.f32 %v4110, %v4135
        %v4147 = vmul.f32 %v4111, %v4135
        %v4148 = vmul.f32 %v4112, %v4135
        %v4149 = vmul.f32 %v4113, %v4135
        %v4150 = vmul.f32 %v4114, %v4135
        %v4151 = vmul.f32 %v4115, %v4135
        %v4152 = vmul.f32 %v4116, %v4135
        %v4153 = vmul.f32 %v4117, %v4135
        %v4154 = vmul.f32 %v4118, %v4135
        %v4155 = vmul.f32 %v4119, %v4135
        %v4156 = vmul.f32 %v4120, %v4135
        %v4157 = vmul.f32 %v4121, %v4135
        %v4158 = vmul.f32 %v4122, %v4135
        %v4159 = vmul.f32 %v4123, %v4135
        %v4160 = vmul.f32 %v4124, %v4135
        %v4161 = vmul.f32 %v4125, %v4135
        %v4162 = vmul.f32 %v4126, %v4135
        %v4163 = vmul.f32 %v4127, %v4135
        %v4164 = vmul.f32 %v4128, %v4135
        %v4165 = vmul.f32 %v4129, %v4135
        %v4166 = vmul.f32 %v4130, %v4135
        %v4167 = vmul.f32 %v4131, %v4135
        %v4168 = vmul.f32 %v4132, %v4135
        %v4169 = vld [vmem:[%s3] sm:$0x1]
        %v4171 = vperm.slane %v4169, 0
        %v4173 = vadd.f32 %v4137, %v4171
        %v4174 = vadd.f32 %v4138, %v4171
        %v4175 = vadd.f32 %v4139, %v4171
        %v4176 = vadd.f32 %v4140, %v4171
        %v4177 = vadd.f32 %v4141, %v4171
        %v4178 = vadd.f32 %v4142, %v4171
        %v4179 = vadd.f32 %v4143, %v4171
        %v4180 = vadd.f32 %v4144, %v4171
        %v4181 = vadd.f32 %v4145, %v4171
        %v4182 = vadd.f32 %v4146, %v4171
        %v4183 = vadd.f32 %v4147, %v4171
        %v4184 = vadd.f32 %v4148, %v4171
        %v4185 = vadd.f32 %v4149, %v4171
        %v4186 = vadd.f32 %v4150, %v4171
        %v4187 = vadd.f32 %v4151, %v4171
        %v4188 = vadd.f32 %v4152, %v4171
        %v4189 = vadd.f32 %v4153, %v4171
        %v4190 = vadd.f32 %v4154, %v4171
        %v4191 = vadd.f32 %v4155, %v4171
        %v4192 = vadd.f32 %v4156, %v4171
        %v4193 = vadd.f32 %v4157, %v4171
        %v4194 = vadd.f32 %v4158, %v4171
        %v4195 = vadd.f32 %v4159, %v4171
        %v4196 = vadd.f32 %v4160, %v4171
        %v4197 = vadd.f32 %v4161, %v4171
        %v4198 = vadd.f32 %v4162, %v4171
        %v4199 = vadd.f32 %v4163, %v4171
        %v4200 = vadd.f32 %v4164, %v4171
        %v4201 = vadd.f32 %v4165, %v4171
        %v4202 = vadd.f32 %v4166, %v4171
        %v4203 = vadd.f32 %v4167, %v4171
        %v4204 = vadd.f32 %v4168, %v4171
        %v4205 = vxor.u32 %v4173, 2147483648
        %v4206 = vxor.u32 %v4174, 2147483648
        %v4207 = vxor.u32 %v4175, 2147483648
        %v4208 = vxor.u32 %v4176, 2147483648
        %v4209 = vxor.u32 %v4177, 2147483648
        %v4210 = vxor.u32 %v4178, 2147483648
        %v4211 = vxor.u32 %v4179, 2147483648
        %v4212 = vxor.u32 %v4180, 2147483648
        %v4213 = vxor.u32 %v4181, 2147483648
        %v4214 = vxor.u32 %v4182, 2147483648
        %v4215 = vxor.u32 %v4183, 2147483648
        %v4216 = vxor.u32 %v4184, 2147483648
        %v4217 = vxor.u32 %v4185, 2147483648
        %v4218 = vxor.u32 %v4186, 2147483648
        %v4219 = vxor.u32 %v4187, 2147483648
        %v4220 = vxor.u32 %v4188, 2147483648
        %v4221 = vxor.u32 %v4189, 2147483648
        %v4222 = vxor.u32 %v4190, 2147483648
        %v4223 = vxor.u32 %v4191, 2147483648
        %v4224 = vxor.u32 %v4192, 2147483648
        %v4225 = vxor.u32 %v4193, 2147483648
        %v4226 = vxor.u32 %v4194, 2147483648
        %v4227 = vxor.u32 %v4195, 2147483648
        %v4228 = vxor.u32 %v4196, 2147483648
        %v4229 = vxor.u32 %v4197, 2147483648
        %v4230 = vxor.u32 %v4198, 2147483648
        %v4231 = vxor.u32 %v4199, 2147483648
        %v4232 = vxor.u32 %v4200, 2147483648
        %v4233 = vxor.u32 %v4201, 2147483648
        %v4234 = vxor.u32 %v4202, 2147483648
        %v4235 = vxor.u32 %v4203, 2147483648
        %v4236 = vxor.u32 %v4204, 2147483648
        %v4237 = vmul.f32 %v4205, 1.442695
        %v4238 = vpow.pop %v4237
        %v4239 = vmul.f32 %v4206, 1.442695
        %v4240 = vpow.pop %v4239
        %v4241 = vmul.f32 %v4207, 1.442695
        %v4242 = vpow.pop %v4241
        %v4243 = vmul.f32 %v4208, 1.442695
        %v4244 = vpow.pop %v4243
        %v4245 = vmul.f32 %v4209, 1.442695
        %v4246 = vpow.pop %v4245
        %v4247 = vmul.f32 %v4210, 1.442695
        %v4248 = vpow.pop %v4247
        %v4249 = vmul.f32 %v4211, 1.442695
        %v4250 = vpow.pop %v4249
        %v4251 = vmul.f32 %v4212, 1.442695
        %v4252 = vpow.pop %v4251
        %v4253 = vmul.f32 %v4213, 1.442695
        %v4254 = vpow.pop %v4253
        %v4255 = vmul.f32 %v4214, 1.442695
        %v4256 = vpow.pop %v4255
        %v4257 = vmul.f32 %v4215, 1.442695
        %v4258 = vpow.pop %v4257
        %v4259 = vmul.f32 %v4216, 1.442695
        %v4260 = vpow.pop %v4259
        %v4261 = vmul.f32 %v4217, 1.442695
        %v4262 = vpow.pop %v4261
        %v4263 = vmul.f32 %v4218, 1.442695
        %v4264 = vpow.pop %v4263
        %v4265 = vmul.f32 %v4219, 1.442695
        %v4266 = vpow.pop %v4265
        %v4267 = vmul.f32 %v4220, 1.442695
        %v4268 = vpow.pop %v4267
        %v4269 = vmul.f32 %v4221, 1.442695
        %v4270 = vpow.pop %v4269
        %v4271 = vmul.f32 %v4222, 1.442695
        %v4272 = vpow.pop %v4271
        %v4273 = vmul.f32 %v4223, 1.442695
        %v4274 = vpow.pop %v4273
        %v4275 = vmul.f32 %v4224, 1.442695
        %v4276 = vpow.pop %v4275
        %v4277 = vmul.f32 %v4225, 1.442695
        %v4278 = vpow.pop %v4277
        %v4279 = vmul.f32 %v4226, 1.442695
        %v4280 = vpow.pop %v4279
        %v4281 = vmul.f32 %v4227, 1.442695
        %v4282 = vpow.pop %v4281
        %v4283 = vmul.f32 %v4228, 1.442695
        %v4284 = vpow.pop %v4283
        %v4285 = vmul.f32 %v4229, 1.442695
        %v4286 = vpow.pop %v4285
        %v4287 = vmul.f32 %v4230, 1.442695
        %v4288 = vpow.pop %v4287
        %v4289 = vmul.f32 %v4231, 1.442695
        %v4290 = vpow.pop %v4289
        %v4291 = vmul.f32 %v4232, 1.442695
        %v4292 = vpow.pop %v4291
        %v4293 = vmul.f32 %v4233, 1.442695
        %v4294 = vpow.pop %v4293
        %v4295 = vmul.f32 %v4234, 1.442695
        %v4296 = vpow.pop %v4295
        %v4297 = vmul.f32 %v4235, 1.442695
        %v4298 = vpow.pop %v4297
        %v4299 = vmul.f32 %v4236, 1.442695
        %v4300 = vpow.pop %v4299
        %v4301 = vadd.f32 %v4238, 1.0
        %v4302 = vadd.f32 %v4240, 1.0
        %v4303 = vadd.f32 %v4242, 1.0
        %v4304 = vadd.f32 %v4244, 1.0
        %v4305 = vadd.f32 %v4246, 1.0
        %v4306 = vadd.f32 %v4248, 1.0
        %v4307 = vadd.f32 %v4250, 1.0
        %v4308 = vadd.f32 %v4252, 1.0
        %v4309 = vadd.f32 %v4254, 1.0
        %v4310 = vadd.f32 %v4256, 1.0
        %v4311 = vadd.f32 %v4258, 1.0
        %v4312 = vadd.f32 %v4260, 1.0
        %v4313 = vadd.f32 %v4262, 1.0
        %v4314 = vadd.f32 %v4264, 1.0
        %v4315 = vadd.f32 %v4266, 1.0
        %v4316 = vadd.f32 %v4268, 1.0
        %v4317 = vadd.f32 %v4270, 1.0
        %v4318 = vadd.f32 %v4272, 1.0
        %v4319 = vadd.f32 %v4274, 1.0
        %v4320 = vadd.f32 %v4276, 1.0
        %v4321 = vadd.f32 %v4278, 1.0
        %v4322 = vadd.f32 %v4280, 1.0
        %v4323 = vadd.f32 %v4282, 1.0
        %v4324 = vadd.f32 %v4284, 1.0
        %v4325 = vadd.f32 %v4286, 1.0
        %v4326 = vadd.f32 %v4288, 1.0
        %v4327 = vadd.f32 %v4290, 1.0
        %v4328 = vadd.f32 %v4292, 1.0
        %v4329 = vadd.f32 %v4294, 1.0
        %v4330 = vadd.f32 %v4296, 1.0
        %v4331 = vadd.f32 %v4298, 1.0
        %v4332 = vadd.f32 %v4300, 1.0
        %v4333 = vrcp.pop %v4301
        %v4334 = vmul.f32 %v4301, %v4333
        %v4335 = vsub.f32 1.0, %v4334
        %v4336 = vmul.f32 %v4333, %v4335
        %v4337 = vadd.f32 %v4333, %v4336
        %vm4338 = vweird.f32 %v4301
        %vm4339 = vweird.f32 %v4333
        %vm4340 = vmor %vm4338, %vm4339
        %v4341 = vsel %vm4340, %v4333, %v4337
        %v4342 = vand.u32 2147483647, %v4301
        %vm4343 = vcmp.eq.f32.partialorder %v4342, 8.507059e+37
        %v4344 = vand.u32 %v4301, 2147483648
        %v4345 = vor.u32 1.1754944e-38, %v4344
        %v4346 = vsel %vm4343, %v4345, %v4341
        %v4347 = vmul.f32 1.0, %v4346
        %v4348 = vrcp.pop %v4302
        %v4349 = vmul.f32 %v4302, %v4348
        %v4350 = vsub.f32 1.0, %v4349
        %v4351 = vmul.f32 %v4348, %v4350
        %v4352 = vadd.f32 %v4348, %v4351
        %vm4353 = vweird.f32 %v4302
        %vm4354 = vweird.f32 %v4348
        %vm4355 = vmor %vm4353, %vm4354
        %v4356 = vsel %vm4355, %v4348, %v4352
        %v4357 = vand.u32 2147483647, %v4302
        %vm4358 = vcmp.eq.f32.partialorder %v4357, 8.507059e+37
        %v4359 = vand.u32 %v4302, 2147483648
        %v4360 = vor.u32 1.1754944e-38, %v4359
        %v4361 = vsel %vm4358, %v4360, %v4356
        %v4362 = vmul.f32 1.0, %v4361
        %v4363 = vrcp.pop %v4303
        %v4364 = vmul.f32 %v4303, %v4363
        %v4365 = vsub.f32 1.0, %v4364
        %v4366 = vmul.f32 %v4363, %v4365
        %v4367 = vadd.f32 %v4363, %v4366
        %vm4368 = vweird.f32 %v4303
        %vm4369 = vweird.f32 %v4363
        %vm4370 = vmor %vm4368, %vm4369
        %v4371 = vsel %vm4370, %v4363, %v4367
        %v4372 = vand.u32 2147483647, %v4303
        %vm4373 = vcmp.eq.f32.partialorder %v4372, 8.507059e+37
        %v4374 = vand.u32 %v4303, 2147483648
        %v4375 = vor.u32 1.1754944e-38, %v4374
        %v4376 = vsel %vm4373, %v4375, %v4371
        %v4377 = vmul.f32 1.0, %v4376
        %v4378 = vrcp.pop %v4304
        %v4379 = vmul.f32 %v4304, %v4378
        %v4380 = vsub.f32 1.0, %v4379
        %v4381 = vmul.f32 %v4378, %v4380
        %v4382 = vadd.f32 %v4378, %v4381
        %vm4383 = vweird.f32 %v4304
        %vm4384 = vweird.f32 %v4378
        %vm4385 = vmor %vm4383, %vm4384
        %v4386 = vsel %vm4385, %v4378, %v4382
        %v4387 = vand.u32 2147483647, %v4304
        %vm4388 = vcmp.eq.f32.partialorder %v4387, 8.507059e+37
        %v4389 = vand.u32 %v4304, 2147483648
        %v4390 = vor.u32 1.1754944e-38, %v4389
        %v4391 = vsel %vm4388, %v4390, %v4386
        %v4392 = vmul.f32 1.0, %v4391
        %v4393 = vrcp.pop %v4305
        %v4394 = vmul.f32 %v4305, %v4393
        %v4395 = vsub.f32 1.0, %v4394
        %v4396 = vmul.f32 %v4393, %v4395
        %v4397 = vadd.f32 %v4393, %v4396
        %vm4398 = vweird.f32 %v4305
        %vm4399 = vweird.f32 %v4393
        %vm4400 = vmor %vm4398, %vm4399
        %v4401 = vsel %vm4400, %v4393, %v4397
        %v4402 = vand.u32 2147483647, %v4305
        %vm4403 = vcmp.eq.f32.partialorder %v4402, 8.507059e+37
        %v4404 = vand.u32 %v4305, 2147483648
        %v4405 = vor.u32 1.1754944e-38, %v4404
        %v4406 = vsel %vm4403, %v4405, %v4401
        %v4407 = vmul.f32 1.0, %v4406
        %v4408 = vrcp.pop %v4306
        %v4409 = vmul.f32 %v4306, %v4408
        %v4410 = vsub.f32 1.0, %v4409
        %v4411 = vmul.f32 %v4408, %v4410
        %v4412 = vadd.f32 %v4408, %v4411
        %vm4413 = vweird.f32 %v4306
        %vm4414 = vweird.f32 %v4408
        %vm4415 = vmor %vm4413, %vm4414
        %v4416 = vsel %vm4415, %v4408, %v4412
        %v4417 = vand.u32 2147483647, %v4306
        %vm4418 = vcmp.eq.f32.partialorder %v4417, 8.507059e+37
        %v4419 = vand.u32 %v4306, 2147483648
        %v4420 = vor.u32 1.1754944e-38, %v4419
        %v4421 = vsel %vm4418, %v4420, %v4416
        %v4422 = vmul.f32 1.0, %v4421
        %v4423 = vrcp.pop %v4307
        %v4424 = vmul.f32 %v4307, %v4423
        %v4425 = vsub.f32 1.0, %v4424
        %v4426 = vmul.f32 %v4423, %v4425
        %v4427 = vadd.f32 %v4423, %v4426
        %vm4428 = vweird.f32 %v4307
        %vm4429 = vweird.f32 %v4423
        %vm4430 = vmor %vm4428, %vm4429
        %v4431 = vsel %vm4430, %v4423, %v4427
        %v4432 = vand.u32 2147483647, %v4307
        %vm4433 = vcmp.eq.f32.partialorder %v4432, 8.507059e+37
        %v4434 = vand.u32 %v4307, 2147483648
        %v4435 = vor.u32 1.1754944e-38, %v4434
        %v4436 = vsel %vm4433, %v4435, %v4431
        %v4437 = vmul.f32 1.0, %v4436
        %v4438 = vrcp.pop %v4308
        %v4439 = vmul.f32 %v4308, %v4438
        %v4440 = vsub.f32 1.0, %v4439
        %v4441 = vmul.f32 %v4438, %v4440
        %v4442 = vadd.f32 %v4438, %v4441
        %vm4443 = vweird.f32 %v4308
        %vm4444 = vweird.f32 %v4438
        %vm4445 = vmor %vm4443, %vm4444
        %v4446 = vsel %vm4445, %v4438, %v4442
        %v4447 = vand.u32 2147483647, %v4308
        %vm4448 = vcmp.eq.f32.partialorder %v4447, 8.507059e+37
        %v4449 = vand.u32 %v4308, 2147483648
        %v4450 = vor.u32 1.1754944e-38, %v4449
        %v4451 = vsel %vm4448, %v4450, %v4446
        %v4452 = vmul.f32 1.0, %v4451
        %v4453 = vrcp.pop %v4309
        %v4454 = vmul.f32 %v4309, %v4453
        %v4455 = vsub.f32 1.0, %v4454
        %v4456 = vmul.f32 %v4453, %v4455
        %v4457 = vadd.f32 %v4453, %v4456
        %vm4458 = vweird.f32 %v4309
        %vm4459 = vweird.f32 %v4453
        %vm4460 = vmor %vm4458, %vm4459
        %v4461 = vsel %vm4460, %v4453, %v4457
        %v4462 = vand.u32 2147483647, %v4309
        %vm4463 = vcmp.eq.f32.partialorder %v4462, 8.507059e+37
        %v4464 = vand.u32 %v4309, 2147483648
        %v4465 = vor.u32 1.1754944e-38, %v4464
        %v4466 = vsel %vm4463, %v4465, %v4461
        %v4467 = vmul.f32 1.0, %v4466
        %v4468 = vrcp.pop %v4310
        %v4469 = vmul.f32 %v4310, %v4468
        %v4470 = vsub.f32 1.0, %v4469
        %v4471 = vmul.f32 %v4468, %v4470
        %v4472 = vadd.f32 %v4468, %v4471
        %vm4473 = vweird.f32 %v4310
        %vm4474 = vweird.f32 %v4468
        %vm4475 = vmor %vm4473, %vm4474
        %v4476 = vsel %vm4475, %v4468, %v4472
        %v4477 = vand.u32 2147483647, %v4310
        %vm4478 = vcmp.eq.f32.partialorder %v4477, 8.507059e+37
        %v4479 = vand.u32 %v4310, 2147483648
        %v4480 = vor.u32 1.1754944e-38, %v4479
        %v4481 = vsel %vm4478, %v4480, %v4476
        %v4482 = vmul.f32 1.0, %v4481
        %v4483 = vrcp.pop %v4311
        %v4484 = vmul.f32 %v4311, %v4483
        %v4485 = vsub.f32 1.0, %v4484
        %v4486 = vmul.f32 %v4483, %v4485
        %v4487 = vadd.f32 %v4483, %v4486
        %vm4488 = vweird.f32 %v4311
        %vm4489 = vweird.f32 %v4483
        %vm4490 = vmor %vm4488, %vm4489
        %v4491 = vsel %vm4490, %v4483, %v4487
        %v4492 = vand.u32 2147483647, %v4311
        %vm4493 = vcmp.eq.f32.partialorder %v4492, 8.507059e+37
        %v4494 = vand.u32 %v4311, 2147483648
        %v4495 = vor.u32 1.1754944e-38, %v4494
        %v4496 = vsel %vm4493, %v4495, %v4491
        %v4497 = vmul.f32 1.0, %v4496
        %v4498 = vrcp.pop %v4312
        %v4499 = vmul.f32 %v4312, %v4498
        %v4500 = vsub.f32 1.0, %v4499
        %v4501 = vmul.f32 %v4498, %v4500
        %v4502 = vadd.f32 %v4498, %v4501
        %vm4503 = vweird.f32 %v4312
        %vm4504 = vweird.f32 %v4498
        %vm4505 = vmor %vm4503, %vm4504
        %v4506 = vsel %vm4505, %v4498, %v4502
        %v4507 = vand.u32 2147483647, %v4312
        %vm4508 = vcmp.eq.f32.partialorder %v4507, 8.507059e+37
        %v4509 = vand.u32 %v4312, 2147483648
        %v4510 = vor.u32 1.1754944e-38, %v4509
        %v4511 = vsel %vm4508, %v4510, %v4506
        %v4512 = vmul.f32 1.0, %v4511
        %v4513 = vrcp.pop %v4313
        %v4514 = vmul.f32 %v4313, %v4513
        %v4515 = vsub.f32 1.0, %v4514
        %v4516 = vmul.f32 %v4513, %v4515
        %v4517 = vadd.f32 %v4513, %v4516
        %vm4518 = vweird.f32 %v4313
        %vm4519 = vweird.f32 %v4513
        %vm4520 = vmor %vm4518, %vm4519
        %v4521 = vsel %vm4520, %v4513, %v4517
        %v4522 = vand.u32 2147483647, %v4313
        %vm4523 = vcmp.eq.f32.partialorder %v4522, 8.507059e+37
        %v4524 = vand.u32 %v4313, 2147483648
        %v4525 = vor.u32 1.1754944e-38, %v4524
        %v4526 = vsel %vm4523, %v4525, %v4521
        %v4527 = vmul.f32 1.0, %v4526
        %v4528 = vrcp.pop %v4314
        %v4529 = vmul.f32 %v4314, %v4528
        %v4530 = vsub.f32 1.0, %v4529
        %v4531 = vmul.f32 %v4528, %v4530
        %v4532 = vadd.f32 %v4528, %v4531
        %vm4533 = vweird.f32 %v4314
        %vm4534 = vweird.f32 %v4528
        %vm4535 = vmor %vm4533, %vm4534
        %v4536 = vsel %vm4535, %v4528, %v4532
        %v4537 = vand.u32 2147483647, %v4314
        %vm4538 = vcmp.eq.f32.partialorder %v4537, 8.507059e+37
        %v4539 = vand.u32 %v4314, 2147483648
        %v4540 = vor.u32 1.1754944e-38, %v4539
        %v4541 = vsel %vm4538, %v4540, %v4536
        %v4542 = vmul.f32 1.0, %v4541
        %v4543 = vrcp.pop %v4315
        %v4544 = vmul.f32 %v4315, %v4543
        %v4545 = vsub.f32 1.0, %v4544
        %v4546 = vmul.f32 %v4543, %v4545
        %v4547 = vadd.f32 %v4543, %v4546
        %vm4548 = vweird.f32 %v4315
        %vm4549 = vweird.f32 %v4543
        %vm4550 = vmor %vm4548, %vm4549
        %v4551 = vsel %vm4550, %v4543, %v4547
        %v4552 = vand.u32 2147483647, %v4315
        %vm4553 = vcmp.eq.f32.partialorder %v4552, 8.507059e+37
        %v4554 = vand.u32 %v4315, 2147483648
        %v4555 = vor.u32 1.1754944e-38, %v4554
        %v4556 = vsel %vm4553, %v4555, %v4551
        %v4557 = vmul.f32 1.0, %v4556
        %v4558 = vrcp.pop %v4316
        %v4559 = vmul.f32 %v4316, %v4558
        %v4560 = vsub.f32 1.0, %v4559
        %v4561 = vmul.f32 %v4558, %v4560
        %v4562 = vadd.f32 %v4558, %v4561
        %vm4563 = vweird.f32 %v4316
        %vm4564 = vweird.f32 %v4558
        %vm4565 = vmor %vm4563, %vm4564
        %v4566 = vsel %vm4565, %v4558, %v4562
        %v4567 = vand.u32 2147483647, %v4316
        %vm4568 = vcmp.eq.f32.partialorder %v4567, 8.507059e+37
        %v4569 = vand.u32 %v4316, 2147483648
        %v4570 = vor.u32 1.1754944e-38, %v4569
        %v4571 = vsel %vm4568, %v4570, %v4566
        %v4572 = vmul.f32 1.0, %v4571
        %v4573 = vrcp.pop %v4317
        %v4574 = vmul.f32 %v4317, %v4573
        %v4575 = vsub.f32 1.0, %v4574
        %v4576 = vmul.f32 %v4573, %v4575
        %v4577 = vadd.f32 %v4573, %v4576
        %vm4578 = vweird.f32 %v4317
        %vm4579 = vweird.f32 %v4573
        %vm4580 = vmor %vm4578, %vm4579
        %v4581 = vsel %vm4580, %v4573, %v4577
        %v4582 = vand.u32 2147483647, %v4317
        %vm4583 = vcmp.eq.f32.partialorder %v4582, 8.507059e+37
        %v4584 = vand.u32 %v4317, 2147483648
        %v4585 = vor.u32 1.1754944e-38, %v4584
        %v4586 = vsel %vm4583, %v4585, %v4581
        %v4587 = vmul.f32 1.0, %v4586
        %v4588 = vrcp.pop %v4318
        %v4589 = vmul.f32 %v4318, %v4588
        %v4590 = vsub.f32 1.0, %v4589
        %v4591 = vmul.f32 %v4588, %v4590
        %v4592 = vadd.f32 %v4588, %v4591
        %vm4593 = vweird.f32 %v4318
        %vm4594 = vweird.f32 %v4588
        %vm4595 = vmor %vm4593, %vm4594
        %v4596 = vsel %vm4595, %v4588, %v4592
        %v4597 = vand.u32 2147483647, %v4318
        %vm4598 = vcmp.eq.f32.partialorder %v4597, 8.507059e+37
        %v4599 = vand.u32 %v4318, 2147483648
        %v4600 = vor.u32 1.1754944e-38, %v4599
        %v4601 = vsel %vm4598, %v4600, %v4596
        %v4602 = vmul.f32 1.0, %v4601
        %v4603 = vrcp.pop %v4319
        %v4604 = vmul.f32 %v4319, %v4603
        %v4605 = vsub.f32 1.0, %v4604
        %v4606 = vmul.f32 %v4603, %v4605
        %v4607 = vadd.f32 %v4603, %v4606
        %vm4608 = vweird.f32 %v4319
        %vm4609 = vweird.f32 %v4603
        %vm4610 = vmor %vm4608, %vm4609
        %v4611 = vsel %vm4610, %v4603, %v4607
        %v4612 = vand.u32 2147483647, %v4319
        %vm4613 = vcmp.eq.f32.partialorder %v4612, 8.507059e+37
        %v4614 = vand.u32 %v4319, 2147483648
        %v4615 = vor.u32 1.1754944e-38, %v4614
        %v4616 = vsel %vm4613, %v4615, %v4611
        %v4617 = vmul.f32 1.0, %v4616
        %v4618 = vrcp.pop %v4320
        %v4619 = vmul.f32 %v4320, %v4618
        %v4620 = vsub.f32 1.0, %v4619
        %v4621 = vmul.f32 %v4618, %v4620
        %v4622 = vadd.f32 %v4618, %v4621
        %vm4623 = vweird.f32 %v4320
        %vm4624 = vweird.f32 %v4618
        %vm4625 = vmor %vm4623, %vm4624
        %v4626 = vsel %vm4625, %v4618, %v4622
        %v4627 = vand.u32 2147483647, %v4320
        %vm4628 = vcmp.eq.f32.partialorder %v4627, 8.507059e+37
        %v4629 = vand.u32 %v4320, 2147483648
        %v4630 = vor.u32 1.1754944e-38, %v4629
        %v4631 = vsel %vm4628, %v4630, %v4626
        %v4632 = vmul.f32 1.0, %v4631
        %v4633 = vrcp.pop %v4321
        %v4634 = vmul.f32 %v4321, %v4633
        %v4635 = vsub.f32 1.0, %v4634
        %v4636 = vmul.f32 %v4633, %v4635
        %v4637 = vadd.f32 %v4633, %v4636
        %vm4638 = vweird.f32 %v4321
        %vm4639 = vweird.f32 %v4633
        %vm4640 = vmor %vm4638, %vm4639
        %v4641 = vsel %vm4640, %v4633, %v4637
        %v4642 = vand.u32 2147483647, %v4321
        %vm4643 = vcmp.eq.f32.partialorder %v4642, 8.507059e+37
        %v4644 = vand.u32 %v4321, 2147483648
        %v4645 = vor.u32 1.1754944e-38, %v4644
        %v4646 = vsel %vm4643, %v4645, %v4641
        %v4647 = vmul.f32 1.0, %v4646
        %v4648 = vrcp.pop %v4322
        %v4649 = vmul.f32 %v4322, %v4648
        %v4650 = vsub.f32 1.0, %v4649
        %v4651 = vmul.f32 %v4648, %v4650
        %v4652 = vadd.f32 %v4648, %v4651
        %vm4653 = vweird.f32 %v4322
        %vm4654 = vweird.f32 %v4648
        %vm4655 = vmor %vm4653, %vm4654
        %v4656 = vsel %vm4655, %v4648, %v4652
        %v4657 = vand.u32 2147483647, %v4322
        %vm4658 = vcmp.eq.f32.partialorder %v4657, 8.507059e+37
        %v4659 = vand.u32 %v4322, 2147483648
        %v4660 = vor.u32 1.1754944e-38, %v4659
        %v4661 = vsel %vm4658, %v4660, %v4656
        %v4662 = vmul.f32 1.0, %v4661
        %v4663 = vrcp.pop %v4323
        %v4664 = vmul.f32 %v4323, %v4663
        %v4665 = vsub.f32 1.0, %v4664
        %v4666 = vmul.f32 %v4663, %v4665
        %v4667 = vadd.f32 %v4663, %v4666
        %vm4668 = vweird.f32 %v4323
        %vm4669 = vweird.f32 %v4663
        %vm4670 = vmor %vm4668, %vm4669
        %v4671 = vsel %vm4670, %v4663, %v4667
        %v4672 = vand.u32 2147483647, %v4323
        %vm4673 = vcmp.eq.f32.partialorder %v4672, 8.507059e+37
        %v4674 = vand.u32 %v4323, 2147483648
        %v4675 = vor.u32 1.1754944e-38, %v4674
        %v4676 = vsel %vm4673, %v4675, %v4671
        %v4677 = vmul.f32 1.0, %v4676
        %v4678 = vrcp.pop %v4324
        %v4679 = vmul.f32 %v4324, %v4678
        %v4680 = vsub.f32 1.0, %v4679
        %v4681 = vmul.f32 %v4678, %v4680
        %v4682 = vadd.f32 %v4678, %v4681
        %vm4683 = vweird.f32 %v4324
        %vm4684 = vweird.f32 %v4678
        %vm4685 = vmor %vm4683, %vm4684
        %v4686 = vsel %vm4685, %v4678, %v4682
        %v4687 = vand.u32 2147483647, %v4324
        %vm4688 = vcmp.eq.f32.partialorder %v4687, 8.507059e+37
        %v4689 = vand.u32 %v4324, 2147483648
        %v4690 = vor.u32 1.1754944e-38, %v4689
        %v4691 = vsel %vm4688, %v4690, %v4686
        %v4692 = vmul.f32 1.0, %v4691
        %v4693 = vrcp.pop %v4325
        %v4694 = vmul.f32 %v4325, %v4693
        %v4695 = vsub.f32 1.0, %v4694
        %v4696 = vmul.f32 %v4693, %v4695
        %v4697 = vadd.f32 %v4693, %v4696
        %vm4698 = vweird.f32 %v4325
        %vm4699 = vweird.f32 %v4693
        %vm4700 = vmor %vm4698, %vm4699
        %v4701 = vsel %vm4700, %v4693, %v4697
        %v4702 = vand.u32 2147483647, %v4325
        %vm4703 = vcmp.eq.f32.partialorder %v4702, 8.507059e+37
        %v4704 = vand.u32 %v4325, 2147483648
        %v4705 = vor.u32 1.1754944e-38, %v4704
        %v4706 = vsel %vm4703, %v4705, %v4701
        %v4707 = vmul.f32 1.0, %v4706
        %v4708 = vrcp.pop %v4326
        %v4709 = vmul.f32 %v4326, %v4708
        %v4710 = vsub.f32 1.0, %v4709
        %v4711 = vmul.f32 %v4708, %v4710
        %v4712 = vadd.f32 %v4708, %v4711
        %vm4713 = vweird.f32 %v4326
        %vm4714 = vweird.f32 %v4708
        %vm4715 = vmor %vm4713, %vm4714
        %v4716 = vsel %vm4715, %v4708, %v4712
        %v4717 = vand.u32 2147483647, %v4326
        %vm4718 = vcmp.eq.f32.partialorder %v4717, 8.507059e+37
        %v4719 = vand.u32 %v4326, 2147483648
        %v4720 = vor.u32 1.1754944e-38, %v4719
        %v4721 = vsel %vm4718, %v4720, %v4716
        %v4722 = vmul.f32 1.0, %v4721
        %v4723 = vrcp.pop %v4327
        %v4724 = vmul.f32 %v4327, %v4723
        %v4725 = vsub.f32 1.0, %v4724
        %v4726 = vmul.f32 %v4723, %v4725
        %v4727 = vadd.f32 %v4723, %v4726
        %vm4728 = vweird.f32 %v4327
        %vm4729 = vweird.f32 %v4723
        %vm4730 = vmor %vm4728, %vm4729
        %v4731 = vsel %vm4730, %v4723, %v4727
        %v4732 = vand.u32 2147483647, %v4327
        %vm4733 = vcmp.eq.f32.partialorder %v4732, 8.507059e+37
        %v4734 = vand.u32 %v4327, 2147483648
        %v4735 = vor.u32 1.1754944e-38, %v4734
        %v4736 = vsel %vm4733, %v4735, %v4731
        %v4737 = vmul.f32 1.0, %v4736
        %v4738 = vrcp.pop %v4328
        %v4739 = vmul.f32 %v4328, %v4738
        %v4740 = vsub.f32 1.0, %v4739
        %v4741 = vmul.f32 %v4738, %v4740
        %v4742 = vadd.f32 %v4738, %v4741
        %vm4743 = vweird.f32 %v4328
        %vm4744 = vweird.f32 %v4738
        %vm4745 = vmor %vm4743, %vm4744
        %v4746 = vsel %vm4745, %v4738, %v4742
        %v4747 = vand.u32 2147483647, %v4328
        %vm4748 = vcmp.eq.f32.partialorder %v4747, 8.507059e+37
        %v4749 = vand.u32 %v4328, 2147483648
        %v4750 = vor.u32 1.1754944e-38, %v4749
        %v4751 = vsel %vm4748, %v4750, %v4746
        %v4752 = vmul.f32 1.0, %v4751
        %v4753 = vrcp.pop %v4329
        %v4754 = vmul.f32 %v4329, %v4753
        %v4755 = vsub.f32 1.0, %v4754
        %v4756 = vmul.f32 %v4753, %v4755
        %v4757 = vadd.f32 %v4753, %v4756
        %vm4758 = vweird.f32 %v4329
        %vm4759 = vweird.f32 %v4753
        %vm4760 = vmor %vm4758, %vm4759
        %v4761 = vsel %vm4760, %v4753, %v4757
        %v4762 = vand.u32 2147483647, %v4329
        %vm4763 = vcmp.eq.f32.partialorder %v4762, 8.507059e+37
        %v4764 = vand.u32 %v4329, 2147483648
        %v4765 = vor.u32 1.1754944e-38, %v4764
        %v4766 = vsel %vm4763, %v4765, %v4761
        %v4767 = vmul.f32 1.0, %v4766
        %v4768 = vrcp.pop %v4330
        %v4769 = vmul.f32 %v4330, %v4768
        %v4770 = vsub.f32 1.0, %v4769
        %v4771 = vmul.f32 %v4768, %v4770
        %v4772 = vadd.f32 %v4768, %v4771
        %vm4773 = vweird.f32 %v4330
        %vm4774 = vweird.f32 %v4768
        %vm4775 = vmor %vm4773, %vm4774
        %v4776 = vsel %vm4775, %v4768, %v4772
        %v4777 = vand.u32 2147483647, %v4330
        %vm4778 = vcmp.eq.f32.partialorder %v4777, 8.507059e+37
        %v4779 = vand.u32 %v4330, 2147483648
        %v4780 = vor.u32 1.1754944e-38, %v4779
        %v4781 = vsel %vm4778, %v4780, %v4776
        %v4782 = vmul.f32 1.0, %v4781
        %v4783 = vrcp.pop %v4331
        %v4784 = vmul.f32 %v4331, %v4783
        %v4785 = vsub.f32 1.0, %v4784
        %v4786 = vmul.f32 %v4783, %v4785
        %v4787 = vadd.f32 %v4783, %v4786
        %vm4788 = vweird.f32 %v4331
        %vm4789 = vweird.f32 %v4783
        %vm4790 = vmor %vm4788, %vm4789
        %v4791 = vsel %vm4790, %v4783, %v4787
        %v4792 = vand.u32 2147483647, %v4331
        %vm4793 = vcmp.eq.f32.partialorder %v4792, 8.507059e+37
        %v4794 = vand.u32 %v4331, 2147483648
        %v4795 = vor.u32 1.1754944e-38, %v4794
        %v4796 = vsel %vm4793, %v4795, %v4791
        %v4797 = vmul.f32 1.0, %v4796
        %v4798 = vrcp.pop %v4332
        %v4799 = vmul.f32 %v4332, %v4798
        %v4800 = vsub.f32 1.0, %v4799
        %v4801 = vmul.f32 %v4798, %v4800
        %v4802 = vadd.f32 %v4798, %v4801
        %vm4803 = vweird.f32 %v4332
        %vm4804 = vweird.f32 %v4798
        %vm4805 = vmor %vm4803, %vm4804
        %v4806 = vsel %vm4805, %v4798, %v4802
        %v4807 = vand.u32 2147483647, %v4332
        %vm4808 = vcmp.eq.f32.partialorder %v4807, 8.507059e+37
        %v4809 = vand.u32 %v4332, 2147483648
        %v4810 = vor.u32 1.1754944e-38, %v4809
        %v4811 = vsel %vm4808, %v4810, %v4806
        %v4812 = vmul.f32 1.0, %v4811
        %v4813 = vmul.f32 %v4173, %v4347
        %v4814 = vmul.f32 %v4174, %v4362
        %v4815 = vmul.f32 %v4175, %v4377
        %v4816 = vmul.f32 %v4176, %v4392
        %v4817 = vmul.f32 %v4177, %v4407
        %v4818 = vmul.f32 %v4178, %v4422
        %v4819 = vmul.f32 %v4179, %v4437
        %v4820 = vmul.f32 %v4180, %v4452
        %v4821 = vmul.f32 %v4181, %v4467
        %v4822 = vmul.f32 %v4182, %v4482
        %v4823 = vmul.f32 %v4183, %v4497
        %v4824 = vmul.f32 %v4184, %v4512
        %v4825 = vmul.f32 %v4185, %v4527
        %v4826 = vmul.f32 %v4186, %v4542
        %v4827 = vmul.f32 %v4187, %v4557
        %v4828 = vmul.f32 %v4188, %v4572
        %v4829 = vmul.f32 %v4189, %v4587
        %v4830 = vmul.f32 %v4190, %v4602
        %v4831 = vmul.f32 %v4191, %v4617
        %v4832 = vmul.f32 %v4192, %v4632
        %v4833 = vmul.f32 %v4193, %v4647
        %v4834 = vmul.f32 %v4194, %v4662
        %v4835 = vmul.f32 %v4195, %v4677
        %v4836 = vmul.f32 %v4196, %v4692
        %v4837 = vmul.f32 %v4197, %v4707
        %v4838 = vmul.f32 %v4198, %v4722
        %v4839 = vmul.f32 %v4199, %v4737
        %v4840 = vmul.f32 %v4200, %v4752
        %v4841 = vmul.f32 %v4201, %v4767
        %v4842 = vmul.f32 %v4202, %v4782
        %v4843 = vmul.f32 %v4203, %v4797
        %v4844 = vmul.f32 %v4204, %v4812
        %v4845 = vpack.c.bf16 %v4813, %v4813
        %v4846 = vpack.c.bf16 %v4814, %v4814
        %v4847 = vpack.c.bf16 %v4815, %v4815
        %v4848 = vpack.c.bf16 %v4816, %v4816
        %v4849 = vpack.c.bf16 %v4817, %v4817
        %v4850 = vpack.c.bf16 %v4818, %v4818
        %v4851 = vpack.c.bf16 %v4819, %v4819
        %v4852 = vpack.c.bf16 %v4820, %v4820
        %v4853 = vpack.c.bf16 %v4821, %v4821
        %v4854 = vpack.c.bf16 %v4822, %v4822
        %v4855 = vpack.c.bf16 %v4823, %v4823
        %v4856 = vpack.c.bf16 %v4824, %v4824
        %v4857 = vpack.c.bf16 %v4825, %v4825
        %v4858 = vpack.c.bf16 %v4826, %v4826
        %v4859 = vpack.c.bf16 %v4827, %v4827
        %v4860 = vpack.c.bf16 %v4828, %v4828
        %v4861 = vpack.c.bf16 %v4829, %v4829
        %v4862 = vpack.c.bf16 %v4830, %v4830
        %v4863 = vpack.c.bf16 %v4831, %v4831
        %v4864 = vpack.c.bf16 %v4832, %v4832
        %v4865 = vpack.c.bf16 %v4833, %v4833
        %v4866 = vpack.c.bf16 %v4834, %v4834
        %v4867 = vpack.c.bf16 %v4835, %v4835
        %v4868 = vpack.c.bf16 %v4836, %v4836
        %v4869 = vpack.c.bf16 %v4837, %v4837
        %v4870 = vpack.c.bf16 %v4838, %v4838
        %v4871 = vpack.c.bf16 %v4839, %v4839
        %v4872 = vpack.c.bf16 %v4840, %v4840
        %v4873 = vpack.c.bf16 %v4841, %v4841
        %v4874 = vpack.c.bf16 %v4842, %v4842
        %v4875 = vpack.c.bf16 %v4843, %v4843
        %v4876 = vpack.c.bf16 %v4844, %v4844
        %4877 = vst [vmem:[%s204] sm:$0xf] %v4845
        %4878 = vst [vmem:[%s204 + $0x4] sm:$0xf] %v4846
        %4879 = vst [vmem:[%s204 + $0x8] sm:$0xf] %v4847
        %4880 = vst [vmem:[%s204 + $0xc] sm:$0xf] %v4848
        %4881 = vst [vmem:[%s204 + $0x10] sm:$0xf] %v4849
        %4882 = vst [vmem:[%s204 + $0x14] sm:$0xf] %v4850
        %4883 = vst [vmem:[%s204 + $0x18] sm:$0xf] %v4851
        %4884 = vst [vmem:[%s204 + $0x1c] sm:$0xf] %v4852
        %4885 = vst [vmem:[%s204 + $0x20] sm:$0xf] %v4853
        %4886 = vst [vmem:[%s204 + $0x24] sm:$0xf] %v4854
        %4887 = vst [vmem:[%s204 + $0x28] sm:$0xf] %v4855
        %4888 = vst [vmem:[%s204 + $0x2c] sm:$0xf] %v4856
        %4889 = vst [vmem:[%s204 + $0x30] sm:$0xf] %v4857
        %4890 = vst [vmem:[%s204 + $0x34] sm:$0xf] %v4858
        %4891 = vst [vmem:[%s204 + $0x38] sm:$0xf] %v4859
        %4892 = vst [vmem:[%s204 + $0x3c] sm:$0xf] %v4860
        %4893 = vst [vmem:[%s204 + $0x40] sm:$0xf] %v4861
        %4894 = vst [vmem:[%s204 + $0x44] sm:$0xf] %v4862
        %4895 = vst [vmem:[%s204 + $0x48] sm:$0xf] %v4863
        %4896 = vst [vmem:[%s204 + $0x4c] sm:$0xf] %v4864
        %4897 = vst [vmem:[%s204 + $0x50] sm:$0xf] %v4865
        %4898 = vst [vmem:[%s204 + $0x54] sm:$0xf] %v4866
        %4899 = vst [vmem:[%s204 + $0x58] sm:$0xf] %v4867
        %4900 = vst [vmem:[%s204 + $0x5c] sm:$0xf] %v4868
        %4901 = vst [vmem:[%s204 + $0x60] sm:$0xf] %v4869
        %4902 = vst [vmem:[%s204 + $0x64] sm:$0xf] %v4870
        %4903 = vst [vmem:[%s204 + $0x68] sm:$0xf] %v4871
        %4904 = vst [vmem:[%s204 + $0x6c] sm:$0xf] %v4872
        %4905 = vst [vmem:[%s204 + $0x70] sm:$0xf] %v4873
        %4906 = vst [vmem:[%s204 + $0x74] sm:$0xf] %v4874
        %4907 = vst [vmem:[%s204 + $0x78] sm:$0xf] %v4875
        %4908 = vst [vmem:[%s204 + $0x7c] sm:$0xf] %v4876
        %s4909 = sand.u32 %s129, 1
        %s4910 = scalar_lea.sflag [#allocation3], %s4909
        %s4911 = sand.u32 %s129, 1
        %s4912 = smul.addr %s4911, 128
        %s4913 = scalar_lea.vmem [#allocation2], %s4912
        // Predicated region
        $region37: #{tpu_custom_call.1} parent=35 // pred_check
          %p4914 = pneg %p139
        $region38: #{tpu_custom_call.1} parent=35 // pred_check_branch
          %4916 = sbr.rel (%p4914) target = $region40
        $region39: #{tpu_custom_call.1} parent=35 // pred_region
          %s4917 = smul.u32 16, %s23
          %4919 = vsyncadd %s4910, 0
          %s4920 = smul.addr %s4917, 2
          %s4921 = smul.addr %s22, 32
          %s4922 = sadd.s32 %s4920, %s4921
          %s4923 = smul.addr %s4922, 4
          %s4924 = scalar_lea.hbm %s4, %s4923
          %s4925 = sshll.u32 %s4913, 4
          %s4926 = int_to_ptr.vmem [resolvable:$true] %s4925
          %s4927 = sshll.u32 %s4924, 4
          %s4928 = int_to_ptr.hbm [resolvable:$true] %s4927
          %4933 = dma.vmem_to_hbm [thread:$0]  %s4926, 2048, %s4928, %s4910, 64, 64, 4
        $region40: #{tpu_custom_call.1} parent=35 // pred_fallthru
          _
      $region36: #{tpu_custom_call.1} parent=5 // pred_fallthru
        _
      %p4934 = scmp.le.s32.totalorder 2, %s13
      // Predicated region
      $region41: #{tpu_custom_call.1} parent=5 // pred_check
        %p4935 = pneg %p4934
      $region42: #{tpu_custom_call.1} parent=5 // pred_check_branch
        %4937 = sbr.rel (%p4935) target = $region44
      $region43: #{tpu_custom_call.1} parent=5 // pred_region
        %s4938 = ssub.s32 %s13, 2
        // Predicated region
        $region45: #{tpu_custom_call.1} parent=43 // pred_check
          %p4939 = pneg %p145
        $region46: #{tpu_custom_call.1} parent=43 // pred_check_branch
          %4941 = sbr.rel (%p4939) target = $region48
        $region47: #{tpu_custom_call.1} parent=43 // pred_region
          %s4942 = sand.u32 %s130, 1
          %s4943 = scalar_lea.sflag [#allocation3], %s4942
          %s4944 = sand.u32 %s130, 1
          %s4945 = smul.addr %s4944, 128
          %s4946 = scalar_lea.vmem [#allocation2], %s4945
          %4948 = dma.done %s4943, 2048
        $region48: #{tpu_custom_call.1} parent=43 // pred_fallthru
          _
      $region44: #{tpu_custom_call.1} parent=5 // pred_fallthru
        _
    $region6: #{tpu_custom_call.1} parent=1 // loop_footer
      %s17 = sadd.s32 1, %s13
    $region7: #{tpu_custom_call.1} parent=1 // loop_footer_branch
      %12 = sbr.rel target = $region3
    $region8: #{tpu_custom_call.1} parent=1 // loop_exit
      _
    %4949 = vsyncpa [#allocation3], 1
    %s4950 = scalar_lea.sflag [#allocation3], 1
    %4951 = vsyncpa %s4950, 1

</llo_original>
